<compile_context>
chip_gen: v7x
topology: tpu7x:2x2x1
jax: 0.10.0
libtpu: 0.0.40
codegen_flags: <defaults>
</compile_context>

<pallas_src>
import jax
import jax.numpy as jnp
import numpy as np
from jax import lax
from jax.experimental import pallas as pl
from jax.experimental.pallas import tpu as pltpu


def crf_block_kernel(em_ref, tag_ref, len_ref, exp_trt_ref, trt_ref, out_ref,
                     dp_ref, score_ref, ptag_ref):
    # Grid: (batch_blocks ["parallel"], time_blocks ["arbitrary"]).
    tb = pl.program_id(1)
    n_tb = pl.num_programs(1)
    N, TB = dp_ref.shape
    TT = em_ref.shape[0]

    # Resident (N, N) inputs, hoisted out of the time loop.
    exp_trT = exp_trt_ref[...]      # exp(transitions[prev, cur]) indexed [cur, prev]
    trT = trt_ref[...]              # transitions[prev, cur]       indexed [cur, prev]
    len_row = len_ref[...]          # (1, TB) int32 per-example sequence lengths
    iota_n = lax.broadcasted_iota(jnp.int32, (N, TB), 0)

    @pl.when(tb == 0)
    def _init():
        dp_ref[...] = jnp.zeros_like(dp_ref)
        score_ref[...] = jnp.zeros_like(score_ref)
        ptag_ref[...] = jnp.zeros_like(ptag_ref)

    t0 = tb * TT

    def step(i, carry):
        dp, score, ptag = carry              # (N,TB) f32, (1,TB) f32, (1,TB) i32
        t = t0 + i                           # global timestep
        e_t = em_ref[i]                      # (N, TB) emissions at t
        tag_t = tag_ref[i]                   # (1, TB) int32 tags at t
        valid = t < len_row                  # (1, TB) bool, mask derived from lengths

        # ---- partition recurrence (forward algorithm) in exp space on the MXU ----
        m = jnp.max(dp, axis=0, keepdims=True)                        # (1, TB)
        p = jnp.exp(dp - m)                                           # (N, TB)
        s = jnp.dot(exp_trT, p, precision=lax.Precision.HIGHEST,
                    preferred_element_type=jnp.float32)               # (N, TB)
        dp_t = e_t + m + jnp.log(s)
        dp = jnp.where(valid, dp_t, dp)

        # ---- gold-path score increment (reference starts at global t == 1) ----
        oh_t = (iota_n == tag_t).astype(jnp.float32)                  # (N, TB)
        oh_p = (iota_n == ptag).astype(jnp.float32)                   # (N, TB)
        # trans_sel[cur, b] = transitions[tag_prev[b], cur]
        trans_sel = jnp.dot(trT, oh_p, precision=lax.Precision.HIGHEST,
                            preferred_element_type=jnp.float32)       # (N, TB)
        incr = jnp.sum(oh_t * (e_t + trans_sel), axis=0, keepdims=True)
        score = score + jnp.where((t > 0) & valid, incr, 0.0)

        return dp, score, tag_t

    carry0 = (dp_ref[...], score_ref[...], ptag_ref[...])
    dp, score, ptag = lax.fori_loop(0, TT, step, carry0, unroll=True)
    dp_ref[...] = dp
    score_ref[...] = score
    ptag_ref[...] = ptag

    # ---- finalize: per-example (z - score), lane-dense single write per batch block ----
    @pl.when(tb == n_tb - 1)
    def _finalize():
        zmax = jnp.max(dp, axis=0, keepdims=True)                     # (1, TB)
        z = zmax + jnp.log(jnp.sum(jnp.exp(dp - zmax), axis=0, keepdims=True))
        out_ref[...] = z - score


def crf_forward(emissions, tags, mask, transitions, *, lane_tile=128, time_tile=16):
    """Equivalent of CRF.forward(emissions, tags, mask) -> scalar NLL.

    NOTE: mask is assumed to be a left-aligned padding mask (standard CRF usage);
    it is converted to per-example lengths so no per-timestep mask stream is needed.
    """
    B, T, N = emissions.shape
    TB = lane_tile
    B_pad = ((B + TB - 1) // TB) * TB
    nb = B_pad // TB
    TT = max(1, min(time_tile, T))
    T_pad = ((T + TT - 1) // TT) * TT
    n_tb = T_pad // TT

    # Layout plumbing (wrapper-side): batch onto the lane axis, pad batch & time.
    # TODO(synk): producing emissions in (T, N, B) upstream would remove this transpose.
    em = jnp.transpose(emissions.astype(jnp.float32), (1, 2, 0))        # (T, N, B)
    em = jnp.pad(em, ((0, T_pad - T), (0, 0), (0, B_pad - B)))
    tg = jnp.transpose(tags.astype(jnp.int32), (1, 0))[:, None, :]      # (T, 1, B)
    tg = jnp.pad(tg, ((0, T_pad - T), (0, 0), (0, B_pad - B)))
    lengths = jnp.sum(mask.astype(jnp.float32), axis=1).astype(jnp.int32)
    lengths = jnp.pad(lengths[None, :], ((0, 0), (0, B_pad - B)))       # (1, B_pad)
    trT = jnp.transpose(transitions.astype(jnp.float32), (1, 0))        # trT[cur, prev]
    exp_trT = jnp.exp(trT)

    partials = pl.pallas_call(
        crf_block_kernel,
        out_shape=jax.ShapeDtypeStruct((1, B_pad), jnp.float32),
        grid_spec=pltpu.PrefetchScalarGridSpec(
            num_scalar_prefetch=0,
            grid=(nb, n_tb),
            in_specs=[
                pl.BlockSpec((TT, N, TB), lambda b, t: (t, 0, b)),   # emissions block
                pl.BlockSpec((TT, 1, TB), lambda b, t: (t, 0, b)),   # tag ids block
                pl.BlockSpec((1, TB), lambda b, t: (0, b)),          # lengths (resident)
                pl.BlockSpec((N, N), lambda b, t: (0, 0)),           # exp(transitions^T)
                pl.BlockSpec((N, N), lambda b, t: (0, 0)),           # transitions^T
            ],
            out_specs=pl.BlockSpec((1, TB), lambda b, t: (0, b)),    # per-example z - score
            scratch_shapes=[
                pltpu.VMEM((N, TB), jnp.float32),   # dp (forward-algorithm state)
                pltpu.VMEM((1, TB), jnp.float32),   # gold-path score accumulator
                pltpu.VMEM((1, TB), jnp.int32),     # previous timestep's tag id
            ],
        ),
        compiler_params=pltpu.CompilerParams(
            dimension_semantics=("parallel", "arbitrary"),
        ),
    )(em, tg, lengths, exp_trT, trT)

    # Final mean over the real (unpadded) batch in the wrapper.
    return -jnp.mean(partials[0, :B])


def crf_forward_ref(emissions, tags, mask, transitions):
    """Pure-JAX reference mirroring the PyTorch module semantics."""
    B, T, N = emissions.shape
    dp = jnp.zeros((B, N), jnp.float32)
    for t in range(T):
        s = emissions[:, t, :][:, None, :] + transitions[None, :, :] + dp[:, :, None]
        dp_t = jax.scipy.special.logsumexp(s, axis=1)
        v = mask[:, t][:, None]
        dp = v * dp_t + (1.0 - v) * dp
    z = jax.scipy.special.logsumexp(dp, axis=1)
    score = jnp.zeros((B,), jnp.float32)
    for t in range(1, T):
        emit_t = emissions[jnp.arange(B), t, tags[:, t]]
        trans_t = transitions[tags[:, t - 1], tags[:, t]]
        score = score + (emit_t + trans_t) * mask[:, t]
    return -jnp.mean(z - score)


if __name__ == "__main__":
    B, T, N = 4, 10, 8  # batch, seq len, num_tags

    key = jax.random.PRNGKey(0)
    k_em, k_tr, k_tg = jax.random.split(key, 3)

    emissions = jax.random.normal(k_em, (B, T, N), dtype=jnp.float32)
    # nn.init.uniform_(self.transitions, -0.1, 0.1)
    transitions = jax.random.uniform(k_tr, (N, N), minval=-0.1, maxval=0.1,
                                     dtype=jnp.float32)
    tags = jax.random.randint(k_tg, (B, T), 0, N, dtype=jnp.int32)

    # Deterministic left-aligned padding mask (1.0 for valid timesteps).
    lengths = np.array([10, 7, 9, 5], dtype=np.int32)
    mask_np = (np.arange(T)[None, :] < lengths[:, None]).astype(np.float32)
    mask = jnp.asarray(mask_np)

    # time_tile=4 -> 3 time blocks (with time padding), exercising cross-block carry.
    nll = crf_forward(emissions, tags, mask, transitions, time_tile=4)
    jax.block_until_ready(nll)

    nll_ref = crf_forward_ref(emissions, tags, mask, transitions)
    np.testing.assert_allclose(np.asarray(nll), np.asarray(nll_ref),
                               rtol=1e-5, atol=1e-4)

    print("KERNEL_OK")
</pallas_src>

<mosaic_0001>
module attributes {stable_mosaic.version = 11 : i64} {
  func.func @crf_block_kernel(%arg0: i32, %arg1: i32, %arg2: memref<4x8x128xf32, #tpu.memory_space<vmem>>, %arg3: memref<4x1x128xi32, #tpu.memory_space<vmem>>, %arg4: memref<1x128xi32, #tpu.memory_space<vmem>>, %arg5: memref<8x8xf32, #tpu.memory_space<vmem>>, %arg6: memref<8x8xf32, #tpu.memory_space<vmem>>, %arg7: memref<1x128xf32, #tpu.memory_space<vmem>>, %arg8: memref<8x128xf32, #tpu.memory_space<vmem>>, %arg9: memref<1x128xf32, #tpu.memory_space<vmem>>, %arg10: memref<1x128xi32, #tpu.memory_space<vmem>>) attributes {dimension_semantics = [#tpu.dimension_semantics<parallel>, #tpu.dimension_semantics<arbitrary>], iteration_bounds = array<i64: 1, 3>, scalar_prefetch = 0 : i64, scratch_operands = 3 : i64, tpu.core_type = #tpu.core_type<tc>, window_params = [{transform_indices = @transform_0, window_bounds = array<i64: 4, 8, 128>}, {transform_indices = @transform_1, window_bounds = array<i64: 4, 1, 128>}, {transform_indices = @transform_2, window_bounds = array<i64: 1, 128>}, {pipeline_mode = #tpu.pipeline_mode<synchronous>, transform_indices = @transform_3, window_bounds = array<i64: 8, 8>}, {pipeline_mode = #tpu.pipeline_mode<synchronous>, transform_indices = @transform_4, window_bounds = array<i64: 8, 8>}, {transform_indices = @transform_5, window_bounds = array<i64: 1, 128>}]} {
    %c0 = arith.constant 0 : index
    %c0_0 = arith.constant 0 : index
    %0 = vector.load %arg5[%c0, %c0_0] : memref<8x8xf32, #tpu.memory_space<vmem>>, vector<8x8xf32>
    %c0_1 = arith.constant 0 : index
    %c0_2 = arith.constant 0 : index
    %1 = vector.load %arg6[%c0_1, %c0_2] : memref<8x8xf32, #tpu.memory_space<vmem>>, vector<8x8xf32>
    %c0_3 = arith.constant 0 : index
    %c0_4 = arith.constant 0 : index
    %2 = vector.load %arg4[%c0_3, %c0_4] : memref<1x128xi32, #tpu.memory_space<vmem>>, vector<1x128xi32>
    %3 = tpu.iota {dimensions = array<i32: 0>} : vector<8x128xi32>
    %c0_i32 = arith.constant 0 : i32
    %4 = arith.cmpi eq, %arg1, %c0_i32 : i32
    %5 = arith.extui %4 : i1 to i32
    %c0_i32_5 = arith.constant 0 : i32
    %6 = arith.cmpi ne, %5, %c0_i32_5 : i32
    scf.if %6 {
      %cst_61 = arith.constant 0.000000e+00 : f32
      %181 = vector.broadcast %cst_61 : f32 to vector<8x128xf32>
      %c0_62 = arith.constant 0 : index
      %c0_63 = arith.constant 0 : index
      %182 = vector.load %arg8[%c0_62, %c0_63] : memref<8x128xf32, #tpu.memory_space<vmem>>, vector<8x128xf32>
      tpu.vector_store %arg8[%c0_62, %c0_63], %181 {strides = array<i32>} : memref<8x128xf32, #tpu.memory_space<vmem>>, vector<8x128xf32>,
      %cst_64 = arith.constant 0.000000e+00 : f32
      %183 = vector.broadcast %cst_64 : f32 to vector<1x128xf32>
      %c0_65 = arith.constant 0 : index
      %c0_66 = arith.constant 0 : index
      %184 = vector.load %arg9[%c0_65, %c0_66] : memref<1x128xf32, #tpu.memory_space<vmem>>, vector<1x128xf32>
      tpu.vector_store %arg9[%c0_65, %c0_66], %183 {strides = array<i32>} : memref<1x128xf32, #tpu.memory_space<vmem>>, vector<1x128xf32>,
      %c0_i32_67 = arith.constant 0 : i32
      %185 = vector.broadcast %c0_i32_67 : i32 to vector<1x128xi32>
      %c0_68 = arith.constant 0 : index
      %c0_69 = arith.constant 0 : index
      %186 = vector.load %arg10[%c0_68, %c0_69] : memref<1x128xi32, #tpu.memory_space<vmem>>, vector<1x128xi32>
      tpu.vector_store %arg10[%c0_68, %c0_69], %185 {strides = array<i32>} : memref<1x128xi32, #tpu.memory_space<vmem>>, vector<1x128xi32>,
    } else {
    }
    %c4_i32 = arith.constant 4 : i32
    %7 = arith.muli %arg1, %c4_i32 : i32
    %c0_6 = arith.constant 0 : index
    %c0_7 = arith.constant 0 : index
    %8 = vector.load %arg8[%c0_6, %c0_7] : memref<8x128xf32, #tpu.memory_space<vmem>>, vector<8x128xf32>
    %c0_8 = arith.constant 0 : index
    %c0_9 = arith.constant 0 : index
    %9 = vector.load %arg9[%c0_8, %c0_9] : memref<1x128xf32, #tpu.memory_space<vmem>>, vector<1x128xf32>
    %c0_10 = arith.constant 0 : index
    %c0_11 = arith.constant 0 : index
    %10 = vector.load %arg10[%c0_10, %c0_11] : memref<1x128xi32, #tpu.memory_space<vmem>>, vector<1x128xi32>
    %c0_i32_12 = arith.constant 0 : i32
    %11 = arith.addi %7, %c0_i32_12 : i32
    %12 = arith.index_cast %c0_i32_12 : i32 to index
    %c0_13 = arith.constant 0 : index
    %c0_14 = arith.constant 0 : index
    %13 = vector.load %arg2[%12, %c0_13, %c0_14] : memref<4x8x128xf32, #tpu.memory_space<vmem>>, vector<1x8x128xf32>
    %14 = vector.shape_cast %13 : vector<1x8x128xf32> to vector<8x128xf32>
    %15 = arith.index_cast %c0_i32_12 : i32 to index
    %c0_15 = arith.constant 0 : index
    %c0_16 = arith.constant 0 : index
    %16 = vector.load %arg3[%15, %c0_15, %c0_16] : memref<4x1x128xi32, #tpu.memory_space<vmem>>, vector<1x1x128xi32>
    %17 = vector.shape_cast %16 : vector<1x1x128xi32> to vector<1x128xi32>
    %18 = vector.broadcast %11 : i32 to vector<1x128xi32>
    %19 = arith.cmpi slt, %18, %2 : vector<1x128xi32>
    %cst = arith.constant dense<0xFF800000> : vector<128xf32>
    %20 = vector.multi_reduction <maximumf>, %8, %cst [0] : vector<8x128xf32> to vector<128xf32>
    %21 = vector.shape_cast %20 : vector<128xf32> to vector<1x128xf32>
    %22 = vector.broadcast %21 : vector<1x128xf32> to vector<8x128xf32>
    %23 = arith.subf %8, %22 : vector<8x128xf32>
    %24 = math.exp %23 : vector<8x128xf32>
    %cst_17 = arith.constant dense<0.000000e+00> : vector<8x128xf32>
    %25 = tpu.matmul %0, %24, %cst_17 {dimension_numbers = #tpu.dot_dimension_numbers<[1], [0], [0], [1], [0, 0, 1, 1], [], []>, precision = #tpu.contract_precision<fp32>} : vector<8x8xf32>, vector<8x128xf32>, vector<8x128xf32> -> vector<8x128xf32>
    %26 = vector.broadcast %21 : vector<1x128xf32> to vector<8x128xf32>
    %27 = arith.addf %14, %26 : vector<8x128xf32>
    %28 = math.log %25 : vector<8x128xf32>
    %29 = arith.addf %27, %28 : vector<8x128xf32>
    %30 = vector.shape_cast %19 : vector<1x128xi1> to vector<1x128xi1>
    %31 = vector.broadcast %30 : vector<1x128xi1> to vector<8x128xi1>
    %32 = arith.select %31, %29, %8 : vector<8x128xi1>, vector<8x128xf32>
    %33 = vector.broadcast %17 : vector<1x128xi32> to vector<8x128xi32>
    %34 = arith.cmpi eq, %3, %33 : vector<8x128xi32>
    %35 = arith.extui %34 : vector<8x128xi1> to vector<8x128xi32>
    %36 = arith.sitofp %35 : vector<8x128xi32> to vector<8x128xf32>
    %37 = vector.broadcast %10 : vector<1x128xi32> to vector<8x128xi32>
    %38 = arith.cmpi eq, %3, %37 : vector<8x128xi32>
    %39 = arith.extui %38 : vector<8x128xi1> to vector<8x128xi32>
    %40 = arith.sitofp %39 : vector<8x128xi32> to vector<8x128xf32>
    %cst_18 = arith.constant dense<0.000000e+00> : vector<8x128xf32>
    %41 = tpu.matmul %1, %40, %cst_18 {dimension_numbers = #tpu.dot_dimension_numbers<[1], [0], [0], [1], [0, 0, 1, 1], [], []>, precision = #tpu.contract_precision<fp32>} : vector<8x8xf32>, vector<8x128xf32>, vector<8x128xf32> -> vector<8x128xf32>
    %42 = arith.addf %14, %41 : vector<8x128xf32>
    %43 = arith.mulf %36, %42 : vector<8x128xf32>
    %cst_19 = arith.constant dense<0.000000e+00> : vector<128xf32>
    %44 = vector.multi_reduction <add>, %43, %cst_19 [0] : vector<8x128xf32> to vector<128xf32>
    %45 = vector.shape_cast %44 : vector<128xf32> to vector<1x128xf32>
    %c0_i32_20 = arith.constant 0 : i32
    %46 = arith.cmpi sgt, %11, %c0_i32_20 : i32
    %47 = vector.broadcast %46 : i1 to vector<1x128xi1>
    %48 = arith.andi %47, %19 : vector<1x128xi1>
    %cst_21 = arith.constant 0.000000e+00 : f32
    %49 = vector.broadcast %cst_21 : f32 to vector<1x128xf32>
    %50 = arith.select %48, %45, %49 : vector<1x128xi1>, vector<1x128xf32>
    %51 = arith.addf %9, %50 : vector<1x128xf32>
    %c1_i32 = arith.constant 1 : i32
    %52 = arith.addi %7, %c1_i32 : i32
    %53 = arith.index_cast %c1_i32 : i32 to index
    %c0_22 = arith.constant 0 : index
    %c0_23 = arith.constant 0 : index
    %54 = vector.load %arg2[%53, %c0_22, %c0_23] : memref<4x8x128xf32, #tpu.memory_space<vmem>>, vector<1x8x128xf32>
    %55 = vector.shape_cast %54 : vector<1x8x128xf32> to vector<8x128xf32>
    %56 = arith.index_cast %c1_i32 : i32 to index
    %c0_24 = arith.constant 0 : index
    %c0_25 = arith.constant 0 : index
    %57 = vector.load %arg3[%56, %c0_24, %c0_25] : memref<4x1x128xi32, #tpu.memory_space<vmem>>, vector<1x1x128xi32>
    %58 = vector.shape_cast %57 : vector<1x1x128xi32> to vector<1x128xi32>
    %59 = vector.broadcast %52 : i32 to vector<1x128xi32>
    %60 = arith.cmpi slt, %59, %2 : vector<1x128xi32>
    %cst_26 = arith.constant dense<0xFF800000> : vector<128xf32>
    %61 = vector.multi_reduction <maximumf>, %32, %cst_26 [0] : vector<8x128xf32> to vector<128xf32>
    %62 = vector.shape_cast %61 : vector<128xf32> to vector<1x128xf32>
    %63 = vector.broadcast %62 : vector<1x128xf32> to vector<8x128xf32>
    %64 = arith.subf %32, %63 : vector<8x128xf32>
    %65 = math.exp %64 : vector<8x128xf32>
    %cst_27 = arith.constant dense<0.000000e+00> : vector<8x128xf32>
    %66 = tpu.matmul %0, %65, %cst_27 {dimension_numbers = #tpu.dot_dimension_numbers<[1], [0], [0], [1], [0, 0, 1, 1], [], []>, precision = #tpu.contract_precision<fp32>} : vector<8x8xf32>, vector<8x128xf32>, vector<8x128xf32> -> vector<8x128xf32>
    %67 = vector.broadcast %62 : vector<1x128xf32> to vector<8x128xf32>
    %68 = arith.addf %55, %67 : vector<8x128xf32>
    %69 = math.log %66 : vector<8x128xf32>
    %70 = arith.addf %68, %69 : vector<8x128xf32>
    %71 = vector.shape_cast %60 : vector<1x128xi1> to vector<1x128xi1>
    %72 = vector.broadcast %71 : vector<1x128xi1> to vector<8x128xi1>
    %73 = arith.select %72, %70, %32 : vector<8x128xi1>, vector<8x128xf32>
    %74 = vector.broadcast %58 : vector<1x128xi32> to vector<8x128xi32>
    %75 = arith.cmpi eq, %3, %74 : vector<8x128xi32>
    %76 = arith.extui %75 : vector<8x128xi1> to vector<8x128xi32>
    %77 = arith.sitofp %76 : vector<8x128xi32> to vector<8x128xf32>
    %78 = vector.broadcast %17 : vector<1x128xi32> to vector<8x128xi32>
    %79 = arith.cmpi eq, %3, %78 : vector<8x128xi32>
    %80 = arith.extui %79 : vector<8x128xi1> to vector<8x128xi32>
    %81 = arith.sitofp %80 : vector<8x128xi32> to vector<8x128xf32>
    %cst_28 = arith.constant dense<0.000000e+00> : vector<8x128xf32>
    %82 = tpu.matmul %1, %81, %cst_28 {dimension_numbers = #tpu.dot_dimension_numbers<[1], [0], [0], [1], [0, 0, 1, 1], [], []>, precision = #tpu.contract_precision<fp32>} : vector<8x8xf32>, vector<8x128xf32>, vector<8x128xf32> -> vector<8x128xf32>
    %83 = arith.addf %55, %82 : vector<8x128xf32>
    %84 = arith.mulf %77, %83 : vector<8x128xf32>
    %cst_29 = arith.constant dense<0.000000e+00> : vector<128xf32>
    %85 = vector.multi_reduction <add>, %84, %cst_29 [0] : vector<8x128xf32> to vector<128xf32>
    %86 = vector.shape_cast %85 : vector<128xf32> to vector<1x128xf32>
    %c0_i32_30 = arith.constant 0 : i32
    %87 = arith.cmpi sgt, %52, %c0_i32_30 : i32
    %88 = vector.broadcast %87 : i1 to vector<1x128xi1>
    %89 = arith.andi %88, %60 : vector<1x128xi1>
    %cst_31 = arith.constant 0.000000e+00 : f32
    %90 = vector.broadcast %cst_31 : f32 to vector<1x128xf32>
    %91 = arith.select %89, %86, %90 : vector<1x128xi1>, vector<1x128xf32>
    %92 = arith.addf %51, %91 : vector<1x128xf32>
    %c2_i32 = arith.constant 2 : i32
    %93 = arith.addi %7, %c2_i32 : i32
    %94 = arith.index_cast %c2_i32 : i32 to index
    %c0_32 = arith.constant 0 : index
    %c0_33 = arith.constant 0 : index
    %95 = vector.load %arg2[%94, %c0_32, %c0_33] : memref<4x8x128xf32, #tpu.memory_space<vmem>>, vector<1x8x128xf32>
    %96 = vector.shape_cast %95 : vector<1x8x128xf32> to vector<8x128xf32>
    %97 = arith.index_cast %c2_i32 : i32 to index
    %c0_34 = arith.constant 0 : index
    %c0_35 = arith.constant 0 : index
    %98 = vector.load %arg3[%97, %c0_34, %c0_35] : memref<4x1x128xi32, #tpu.memory_space<vmem>>, vector<1x1x128xi32>
    %99 = vector.shape_cast %98 : vector<1x1x128xi32> to vector<1x128xi32>
    %100 = vector.broadcast %93 : i32 to vector<1x128xi32>
    %101 = arith.cmpi slt, %100, %2 : vector<1x128xi32>
    %cst_36 = arith.constant dense<0xFF800000> : vector<128xf32>
    %102 = vector.multi_reduction <maximumf>, %73, %cst_36 [0] : vector<8x128xf32> to vector<128xf32>
    %103 = vector.shape_cast %102 : vector<128xf32> to vector<1x128xf32>
    %104 = vector.broadcast %103 : vector<1x128xf32> to vector<8x128xf32>
    %105 = arith.subf %73, %104 : vector<8x128xf32>
    %106 = math.exp %105 : vector<8x128xf32>
    %cst_37 = arith.constant dense<0.000000e+00> : vector<8x128xf32>
    %107 = tpu.matmul %0, %106, %cst_37 {dimension_numbers = #tpu.dot_dimension_numbers<[1], [0], [0], [1], [0, 0, 1, 1], [], []>, precision = #tpu.contract_precision<fp32>} : vector<8x8xf32>, vector<8x128xf32>, vector<8x128xf32> -> vector<8x128xf32>
    %108 = vector.broadcast %103 : vector<1x128xf32> to vector<8x128xf32>
    %109 = arith.addf %96, %108 : vector<8x128xf32>
    %110 = math.log %107 : vector<8x128xf32>
    %111 = arith.addf %109, %110 : vector<8x128xf32>
    %112 = vector.shape_cast %101 : vector<1x128xi1> to vector<1x128xi1>
    %113 = vector.broadcast %112 : vector<1x128xi1> to vector<8x128xi1>
    %114 = arith.select %113, %111, %73 : vector<8x128xi1>, vector<8x128xf32>
    %115 = vector.broadcast %99 : vector<1x128xi32> to vector<8x128xi32>
    %116 = arith.cmpi eq, %3, %115 : vector<8x128xi32>
    %117 = arith.extui %116 : vector<8x128xi1> to vector<8x128xi32>
    %118 = arith.sitofp %117 : vector<8x128xi32> to vector<8x128xf32>
    %119 = vector.broadcast %58 : vector<1x128xi32> to vector<8x128xi32>
    %120 = arith.cmpi eq, %3, %119 : vector<8x128xi32>
    %121 = arith.extui %120 : vector<8x128xi1> to vector<8x128xi32>
    %122 = arith.sitofp %121 : vector<8x128xi32> to vector<8x128xf32>
    %cst_38 = arith.constant dense<0.000000e+00> : vector<8x128xf32>
    %123 = tpu.matmul %1, %122, %cst_38 {dimension_numbers = #tpu.dot_dimension_numbers<[1], [0], [0], [1], [0, 0, 1, 1], [], []>, precision = #tpu.contract_precision<fp32>} : vector<8x8xf32>, vector<8x128xf32>, vector<8x128xf32> -> vector<8x128xf32>
    %124 = arith.addf %96, %123 : vector<8x128xf32>
    %125 = arith.mulf %118, %124 : vector<8x128xf32>
    %cst_39 = arith.constant dense<0.000000e+00> : vector<128xf32>
    %126 = vector.multi_reduction <add>, %125, %cst_39 [0] : vector<8x128xf32> to vector<128xf32>
    %127 = vector.shape_cast %126 : vector<128xf32> to vector<1x128xf32>
    %c0_i32_40 = arith.constant 0 : i32
    %128 = arith.cmpi sgt, %93, %c0_i32_40 : i32
    %129 = vector.broadcast %128 : i1 to vector<1x128xi1>
    %130 = arith.andi %129, %101 : vector<1x128xi1>
    %cst_41 = arith.constant 0.000000e+00 : f32
    %131 = vector.broadcast %cst_41 : f32 to vector<1x128xf32>
    %132 = arith.select %130, %127, %131 : vector<1x128xi1>, vector<1x128xf32>
    %133 = arith.addf %92, %132 : vector<1x128xf32>
    %c3_i32 = arith.constant 3 : i32
    %134 = arith.addi %7, %c3_i32 : i32
    %135 = arith.index_cast %c3_i32 : i32 to index
    %c0_42 = arith.constant 0 : index
    %c0_43 = arith.constant 0 : index
    %136 = vector.load %arg2[%135, %c0_42, %c0_43] : memref<4x8x128xf32, #tpu.memory_space<vmem>>, vector<1x8x128xf32>
    %137 = vector.shape_cast %136 : vector<1x8x128xf32> to vector<8x128xf32>
    %138 = arith.index_cast %c3_i32 : i32 to index
    %c0_44 = arith.constant 0 : index
    %c0_45 = arith.constant 0 : index
    %139 = vector.load %arg3[%138, %c0_44, %c0_45] : memref<4x1x128xi32, #tpu.memory_space<vmem>>, vector<1x1x128xi32>
    %140 = vector.shape_cast %139 : vector<1x1x128xi32> to vector<1x128xi32>
    %141 = vector.broadcast %134 : i32 to vector<1x128xi32>
    %142 = arith.cmpi slt, %141, %2 : vector<1x128xi32>
    %cst_46 = arith.constant dense<0xFF800000> : vector<128xf32>
    %143 = vector.multi_reduction <maximumf>, %114, %cst_46 [0] : vector<8x128xf32> to vector<128xf32>
    %144 = vector.shape_cast %143 : vector<128xf32> to vector<1x128xf32>
    %145 = vector.broadcast %144 : vector<1x128xf32> to vector<8x128xf32>
    %146 = arith.subf %114, %145 : vector<8x128xf32>
    %147 = math.exp %146 : vector<8x128xf32>
    %cst_47 = arith.constant dense<0.000000e+00> : vector<8x128xf32>
    %148 = tpu.matmul %0, %147, %cst_47 {dimension_numbers = #tpu.dot_dimension_numbers<[1], [0], [0], [1], [0, 0, 1, 1], [], []>, precision = #tpu.contract_precision<fp32>} : vector<8x8xf32>, vector<8x128xf32>, vector<8x128xf32> -> vector<8x128xf32>
    %149 = vector.broadcast %144 : vector<1x128xf32> to vector<8x128xf32>
    %150 = arith.addf %137, %149 : vector<8x128xf32>
    %151 = math.log %148 : vector<8x128xf32>
    %152 = arith.addf %150, %151 : vector<8x128xf32>
    %153 = vector.shape_cast %142 : vector<1x128xi1> to vector<1x128xi1>
    %154 = vector.broadcast %153 : vector<1x128xi1> to vector<8x128xi1>
    %155 = arith.select %154, %152, %114 : vector<8x128xi1>, vector<8x128xf32>
    %156 = vector.broadcast %140 : vector<1x128xi32> to vector<8x128xi32>
    %157 = arith.cmpi eq, %3, %156 : vector<8x128xi32>
    %158 = arith.extui %157 : vector<8x128xi1> to vector<8x128xi32>
    %159 = arith.sitofp %158 : vector<8x128xi32> to vector<8x128xf32>
    %160 = vector.broadcast %99 : vector<1x128xi32> to vector<8x128xi32>
    %161 = arith.cmpi eq, %3, %160 : vector<8x128xi32>
    %162 = arith.extui %161 : vector<8x128xi1> to vector<8x128xi32>
    %163 = arith.sitofp %162 : vector<8x128xi32> to vector<8x128xf32>
    %cst_48 = arith.constant dense<0.000000e+00> : vector<8x128xf32>
    %164 = tpu.matmul %1, %163, %cst_48 {dimension_numbers = #tpu.dot_dimension_numbers<[1], [0], [0], [1], [0, 0, 1, 1], [], []>, precision = #tpu.contract_precision<fp32>} : vector<8x8xf32>, vector<8x128xf32>, vector<8x128xf32> -> vector<8x128xf32>
    %165 = arith.addf %137, %164 : vector<8x128xf32>
    %166 = arith.mulf %159, %165 : vector<8x128xf32>
    %cst_49 = arith.constant dense<0.000000e+00> : vector<128xf32>
    %167 = vector.multi_reduction <add>, %166, %cst_49 [0] : vector<8x128xf32> to vector<128xf32>
    %168 = vector.shape_cast %167 : vector<128xf32> to vector<1x128xf32>
    %c0_i32_50 = arith.constant 0 : i32
    %169 = arith.cmpi sgt, %134, %c0_i32_50 : i32
    %170 = vector.broadcast %169 : i1 to vector<1x128xi1>
    %171 = arith.andi %170, %142 : vector<1x128xi1>
    %cst_51 = arith.constant 0.000000e+00 : f32
    %172 = vector.broadcast %cst_51 : f32 to vector<1x128xf32>
    %173 = arith.select %171, %168, %172 : vector<1x128xi1>, vector<1x128xf32>
    %174 = arith.addf %133, %173 : vector<1x128xf32>
    %c4_i32_52 = arith.constant 4 : i32
    %c0_53 = arith.constant 0 : index
    %c0_54 = arith.constant 0 : index
    %175 = vector.load %arg8[%c0_53, %c0_54] : memref<8x128xf32, #tpu.memory_space<vmem>>, vector<8x128xf32>
    tpu.vector_store %arg8[%c0_53, %c0_54], %155 {strides = array<i32>} : memref<8x128xf32, #tpu.memory_space<vmem>>, vector<8x128xf32>,
    %c0_55 = arith.constant 0 : index
    %c0_56 = arith.constant 0 : index
    %176 = vector.load %arg9[%c0_55, %c0_56] : memref<1x128xf32, #tpu.memory_space<vmem>>, vector<1x128xf32>
    tpu.vector_store %arg9[%c0_55, %c0_56], %174 {strides = array<i32>} : memref<1x128xf32, #tpu.memory_space<vmem>>, vector<1x128xf32>,
    %c0_57 = arith.constant 0 : index
    %c0_58 = arith.constant 0 : index
    %177 = vector.load %arg10[%c0_57, %c0_58] : memref<1x128xi32, #tpu.memory_space<vmem>>, vector<1x128xi32>
    tpu.vector_store %arg10[%c0_57, %c0_58], %140 {strides = array<i32>} : memref<1x128xi32, #tpu.memory_space<vmem>>, vector<1x128xi32>,
    %c2_i32_59 = arith.constant 2 : i32
    %178 = arith.cmpi eq, %arg1, %c2_i32_59 : i32
    %179 = arith.extui %178 : i1 to i32
    %c0_i32_60 = arith.constant 0 : i32
    %180 = arith.cmpi ne, %179, %c0_i32_60 : i32
    scf.if %180 {
      %cst_61 = arith.constant dense<0xFF800000> : vector<128xf32>
      %181 = vector.multi_reduction <maximumf>, %155, %cst_61 [0] : vector<8x128xf32> to vector<128xf32>
      %182 = vector.shape_cast %181 : vector<128xf32> to vector<1x128xf32>
      %183 = vector.broadcast %182 : vector<1x128xf32> to vector<8x128xf32>
      %184 = arith.subf %155, %183 : vector<8x128xf32>
      %185 = math.exp %184 : vector<8x128xf32>
      %cst_62 = arith.constant dense<0.000000e+00> : vector<128xf32>
      %186 = vector.multi_reduction <add>, %185, %cst_62 [0] : vector<8x128xf32> to vector<128xf32>
      %187 = vector.shape_cast %186 : vector<128xf32> to vector<1x128xf32>
      %188 = math.log %187 : vector<1x128xf32>
      %189 = arith.addf %182, %188 : vector<1x128xf32>
      %190 = arith.subf %189, %174 : vector<1x128xf32>
      %c0_63 = arith.constant 0 : index
      %c0_64 = arith.constant 0 : index
      %191 = vector.load %arg7[%c0_63, %c0_64] : memref<1x128xf32, #tpu.memory_space<vmem>>, vector<1x128xf32>
      tpu.vector_store %arg7[%c0_63, %c0_64], %190 {strides = array<i32>} : memref<1x128xf32, #tpu.memory_space<vmem>>, vector<1x128xf32>,
    } else {
    }
    return
  }
  func.func @transform_0(%arg0: i32, %arg1: i32) -> (i32, i32, i32) {
    %c0_i32 = arith.constant 0 : i32
    %c0_i32_0 = arith.constant 0 : i32
    return %arg1, %c0_i32, %arg0 : i32, i32, i32
  }
  func.func @transform_1(%arg0: i32, %arg1: i32) -> (i32, i32, i32) {
    %c0_i32 = arith.constant 0 : i32
    %c0_i32_0 = arith.constant 0 : i32
    return %arg1, %c0_i32, %arg0 : i32, i32, i32
  }
  func.func @transform_2(%arg0: i32, %arg1: i32) -> (i32, i32) {
    %c0_i32 = arith.constant 0 : i32
    %c0_i32_0 = arith.constant 0 : i32
    return %c0_i32, %arg0 : i32, i32
  }
  func.func @transform_3(%arg0: i32, %arg1: i32) -> (i32, i32) {
    %c0_i32 = arith.constant 0 : i32
    %c0_i32_0 = arith.constant 0 : i32
    %c0_i32_1 = arith.constant 0 : i32
    return %c0_i32, %c0_i32_0 : i32, i32
  }
  func.func @transform_4(%arg0: i32, %arg1: i32) -> (i32, i32) {
    %c0_i32 = arith.constant 0 : i32
    %c0_i32_0 = arith.constant 0 : i32
    %c0_i32_1 = arith.constant 0 : i32
    return %c0_i32, %c0_i32_0 : i32, i32
  }
  func.func @transform_5(%arg0: i32, %arg1: i32) -> (i32, i32) {
    %c0_i32 = arith.constant 0 : i32
    %c0_i32_0 = arith.constant 0 : i32
    return %c0_i32, %arg0 : i32, i32
  }
}

</mosaic_0001>

<llo_original>
// kernel: tpu_custom_call.1
$region0: #{tpu_custom_call.1}
  #allocation0 [shape = 'u32[]', space=smem, size = 0x4, offset = 0x4, fixed_abs, tag = 'smem constant byte address 0x4 - core index']
  #allocation1 [shape = 'u32[144,128]{1,0:T(1,128)}', space=vmem, size = 0x12000, scoped, tag = 'internal scratch']
  #allocation2 [shape = 'f32[8,128]{1,0:T(8,128)}', space=vmem, size = 0x1000, scoped, tag = 'scratch operand']
  #allocation3 [shape = 'f32[1,128]{1,0:T(1,128)}', space=vmem, size = 0x200, scoped, tag = 'scratch operand']
  #allocation4 [shape = 's32[1,128]{1,0:T(1,128)}', space=vmem, size = 0x200, scoped, tag = 'scratch operand']
  %s0 = inlined_call_operand.hbm [shape: f32[12,8,128], index: 0, kind: input, shape index: {}]
  %s1 = inlined_call_operand.hbm [shape: s32[12,1,128], index: 1, kind: input, shape index: {}]
  %s2 = inlined_call_operand.vmem [shape: s32[1,128], index: 2, kind: input, shape index: {}]
  %s3 = inlined_call_operand.vmem [shape: f32[8,8], index: 3, kind: input, shape index: {}]
  %s4 = inlined_call_operand.hbm [shape: f32[8,8], index: 4, kind: input, shape index: {}]
  %s5 = inlined_call_operand.hbm [shape: f32[1,128], index: 5, kind: output, shape index: {}]
  %s6 = sld [smem:[#allocation0]]
  $region73: #{tpu_custom_call.1} parent=0
    _
  %s8 = ssub.s32 1, %s6
  %s9 = scalar_select 0, %s8, %s6
  $region1: #{tpu_custom_call.1} parent=0
    #allocation5 [shape = 'u8[32768]{0}', space=vmem, size = 0x8000, scoped, tag = 'input window, operand 0']
    #allocation6 [shape = 's32[2]{0}', space=sflag, size = 0x8, scoped, tag = 'scoped memory for tpu_custom_call.1']
    #allocation7 [shape = 's32[2]{0}', space=sflag, size = 0x8, scoped, tag = 'scoped memory for tpu_custom_call.1']
    #allocation8 [shape = 'u8[4096]{0}', space=vmem, size = 0x1000, scoped, tag = 'input window, operand 1']
    #allocation9 [shape = 's32[2]{0}', space=sflag, size = 0x8, scoped, tag = 'scoped memory for tpu_custom_call.1']
    #allocation10 [shape = 'u8[4096]{0}', space=vmem, size = 0x1000, scoped, tag = 'input window, operand 4, single buffered']
    #allocation11 [shape = 'u8[512]{0}', space=vmem, size = 0x400, scoped, tag = 'output window, operand 0, single buffered']
    %10 = vsyncpa [#allocation6], 0
    %s11 = scalar_lea.sflag [#allocation6], 1
    %12 = vsyncpa %s11, 0
    %13 = vsyncpa [#allocation9], 0
    %s14 = scalar_lea.sflag [#allocation9], 1
    %15 = vsyncpa %s14, 0
    %16 = vsyncpa [#allocation7], 0
    loop: start=0, step=1, limit=5
    $region2: #{tpu_custom_call.1} parent=1 // loop_pre_header
      _
    $region3: #{tpu_custom_call.1} parent=1 // loop_header
      %s18 = sphi 0, %s22
      %p19 = scmp.ge.s32.totalorder %s18, 5
      %s25 = sphi 0, %s37
      %s26 = sphi 0, %s33
      %s27 = sphi 0, %s25
      %s28 = sphi 0, %s26
      %s29 = sphi 0, %s27
      %s30 = sphi 0, %s28
      %s42 = sphi 0, %s44
      %s45 = sphi 0, %s42
      %s46 = sphi 0, %s45
      %s62 = sphi 0, %s46
      %s70 = sphi 0, %s72
      %s73 = sphi 0, %s70
      %s74 = sphi 0, %s73
      %s90 = sphi 0, %s74
      %s96 = sphi 0, %s98
      %s99 = sphi 0, %s96
      %s100 = sphi 0, %s99
      %s116 = sphi 0, %s100
      %s120 = sphi 0, %s120
      %s122 = sphi 0, %s120
      %s123 = sphi 0, %s122
      %s137 = sphi 0, %s123
      %s141 = sphi 0, %s141
      %s143 = sphi 0, %s141
      %s144 = sphi 0, %s143
      %s158 = sphi 0, %s144
      %s164 = sphi 0, %s166
      %s167 = sphi 0, %s164
      %s168 = sphi 0, %s167
      %s184 = sphi 0, %s168
    $region4: #{tpu_custom_call.1} parent=1 // loop_header_branch
      %21 = sbr.rel (%p19) target = $region8
    $region5: #{tpu_custom_call.1} parent=1 // loop_body
      %s23 = ssub.s32 %s18, 1
      %s24 = ssub.s32 %s18, 2
      %s31 = sadd.s32 1, %s26
      %p32 = scmp.ge.s32.totalorder %s31, 3
      %s33 = scalar_select %p32, 0, %s31
      %s34 = sadd.s32 1, %s25
      %s35 = scalar_select %p32, %s34, %s25
      %p36 = scmp.ge.s32.totalorder %s35, 1
      %s37 = scalar_select %p36, 0, %s35
      %s38 = ssub.s32 %s26, %s33
      %s39 = ssub.s32 %s25, %s37
      %s40 = sor.u32 %s38, %s39
      %p41 = scmp.eq.s32.totalorder %s40, 0
      %s43 = sadd.s32 %s42, 1
      %s44 = scalar_select %p41, %s42, %s43
      %p47 = pneg %p41
      %p48 = scmp.eq.s32.totalorder %s18, 2
      %p49 = por %p47, %p48
      %p50 = scmp.ne.s32.totalorder %s42, %s45
      %p51 = scmp.eq.s32.totalorder %s18, 0
      %p52 = por %p50, %p51
      %p53 = scmp.ne.s32.totalorder %s42, %s45
      %p54 = scmp.eq.s32.totalorder %s23, 2
      %p55 = por %p53, %p54
      %p56 = scmp.ne.s32.totalorder %s45, %s46
      %p57 = scmp.eq.s32.totalorder %s23, 0
      %p58 = por %p56, %p57
      %p59 = scmp.ne.s32.totalorder %s45, %s46
      %p60 = scmp.eq.s32.totalorder %s24, 2
      %p61 = por %p59, %p60
      %p63 = scmp.ne.s32.totalorder %s46, %s62
      %p64 = scmp.eq.s32.totalorder %s24, 0
      %p65 = por %p63, %p64
      %s66 = ssub.s32 %s26, %s33
      %s67 = ssub.s32 %s25, %s37
      %s68 = sor.u32 %s66, %s67
      %p69 = scmp.eq.s32.totalorder %s68, 0
      %s71 = sadd.s32 %s70, 1
      %s72 = scalar_select %p69, %s70, %s71
      %p75 = pneg %p69
      %p76 = scmp.eq.s32.totalorder %s18, 2
      %p77 = por %p75, %p76
      %p78 = scmp.ne.s32.totalorder %s70, %s73
      %p79 = scmp.eq.s32.totalorder %s18, 0
      %p80 = por %p78, %p79
      %p81 = scmp.ne.s32.totalorder %s70, %s73
      %p82 = scmp.eq.s32.totalorder %s23, 2
      %p83 = por %p81, %p82
      %p84 = scmp.ne.s32.totalorder %s73, %s74
      %p85 = scmp.eq.s32.totalorder %s23, 0
      %p86 = por %p84, %p85
      %p87 = scmp.ne.s32.totalorder %s73, %s74
      %p88 = scmp.eq.s32.totalorder %s24, 2
      %p89 = por %p87, %p88
      %p91 = scmp.ne.s32.totalorder %s74, %s90
      %p92 = scmp.eq.s32.totalorder %s24, 0
      %p93 = por %p91, %p92
      %s94 = ssub.s32 %s25, %s37
      %p95 = scmp.eq.s32.totalorder %s94, 0
      %s97 = sadd.s32 %s96, 1
      %s98 = scalar_select %p95, %s96, %s97
      %p101 = pneg %p95
      %p102 = scmp.eq.s32.totalorder %s18, 2
      %p103 = por %p101, %p102
      %p104 = scmp.ne.s32.totalorder %s96, %s99
      %p105 = scmp.eq.s32.totalorder %s18, 0
      %p106 = por %p104, %p105
      %p107 = scmp.ne.s32.totalorder %s96, %s99
      %p108 = scmp.eq.s32.totalorder %s23, 2
      %p109 = por %p107, %p108
      %p110 = scmp.ne.s32.totalorder %s99, %s100
      %p111 = scmp.eq.s32.totalorder %s23, 0
      %p112 = por %p110, %p111
      %p113 = scmp.ne.s32.totalorder %s99, %s100
      %p114 = scmp.eq.s32.totalorder %s24, 2
      %p115 = por %p113, %p114
      %p117 = scmp.ne.s32.totalorder %s100, %s116
      %p118 = scmp.eq.s32.totalorder %s24, 0
      %p119 = por %p117, %p118
      %s121 = sadd.s32 %s120, 1
      %p124 = scmp.eq.s32.totalorder %s18, 2
      %p125 = scmp.ne.s32.totalorder %s120, %s122
      %p126 = scmp.eq.s32.totalorder %s18, 0
      %p127 = por %p125, %p126
      %p128 = scmp.ne.s32.totalorder %s120, %s122
      %p129 = scmp.eq.s32.totalorder %s23, 2
      %p130 = por %p128, %p129
      %p131 = scmp.ne.s32.totalorder %s122, %s123
      %p132 = scmp.eq.s32.totalorder %s23, 0
      %p133 = por %p131, %p132
      %p134 = scmp.ne.s32.totalorder %s122, %s123
      %p135 = scmp.eq.s32.totalorder %s24, 2
      %p136 = por %p134, %p135
      %p138 = scmp.ne.s32.totalorder %s123, %s137
      %p139 = scmp.eq.s32.totalorder %s24, 0
      %p140 = por %p138, %p139
      %s142 = sadd.s32 %s141, 1
      %p145 = scmp.eq.s32.totalorder %s18, 2
      %p146 = scmp.ne.s32.totalorder %s141, %s143
      %p147 = scmp.eq.s32.totalorder %s18, 0
      %p148 = por %p146, %p147
      %p149 = scmp.ne.s32.totalorder %s141, %s143
      %p150 = scmp.eq.s32.totalorder %s23, 2
      %p151 = por %p149, %p150
      %p152 = scmp.ne.s32.totalorder %s143, %s144
      %p153 = scmp.eq.s32.totalorder %s23, 0
      %p154 = por %p152, %p153
      %p155 = scmp.ne.s32.totalorder %s143, %s144
      %p156 = scmp.eq.s32.totalorder %s24, 2
      %p157 = por %p155, %p156
      %p159 = scmp.ne.s32.totalorder %s144, %s158
      %p160 = scmp.eq.s32.totalorder %s24, 0
      %p161 = por %p159, %p160
      %s162 = ssub.s32 %s25, %s37
      %p163 = scmp.eq.s32.totalorder %s162, 0
      %s165 = sadd.s32 %s164, 1
      %s166 = scalar_select %p163, %s164, %s165
      %p169 = pneg %p163
      %p170 = scmp.eq.s32.totalorder %s18, 2
      %p171 = por %p169, %p170
      %p172 = scmp.ne.s32.totalorder %s164, %s167
      %p173 = scmp.eq.s32.totalorder %s18, 0
      %p174 = por %p172, %p173
      %p175 = scmp.ne.s32.totalorder %s164, %s167
      %p176 = scmp.eq.s32.totalorder %s23, 2
      %p177 = por %p175, %p176
      %p178 = scmp.ne.s32.totalorder %s167, %s168
      %p179 = scmp.eq.s32.totalorder %s23, 0
      %p180 = por %p178, %p179
      %p181 = scmp.ne.s32.totalorder %s167, %s168
      %p182 = scmp.eq.s32.totalorder %s24, 2
      %p183 = por %p181, %p182
      %p185 = scmp.ne.s32.totalorder %s168, %s184
      %p186 = scmp.eq.s32.totalorder %s24, 0
      %p187 = por %p185, %p186
      %p188 = scmp.le.s32.totalorder 1, %s18
      %p189 = scmp.lt.s32.totalorder %s18, 4
      %p190 = pnand %p188, %p189
      %p191 = pneg %p190
      // Predicated region
      $region9: #{tpu_custom_call.1} parent=5 // pred_check
        _
      $region10: #{tpu_custom_call.1} parent=5 // pred_check_branch
        %193 = sbr.rel (%p190) target = $region12
      $region11: #{tpu_custom_call.1} parent=5 // pred_region
        %s194 = ssub.s32 %s18, 1
        // Predicated region
        $region13: #{tpu_custom_call.1} parent=11 // pred_check
          %p195 = pneg %p112
        $region14: #{tpu_custom_call.1} parent=11 // pred_check_branch
          %197 = sbr.rel (%p195) target = $region16
        $region15: #{tpu_custom_call.1} parent=11 // pred_region
          %p198 = scmp.lt.s32.totalorder %s27, 0
          %s199 = scalar_select %p198, %s27, 0
          %s200 = scalar_lea.vmem %s2, %s199
        $region16: #{tpu_custom_call.1} parent=11 // pred_fallthru
          _
        // Predicated region
        $region17: #{tpu_custom_call.1} parent=11 // pred_check
          %p201 = pneg %p133
        $region18: #{tpu_custom_call.1} parent=11 // pred_check_branch
          %203 = sbr.rel (%p201) target = $region20
        $region19: #{tpu_custom_call.1} parent=11 // pred_region
          _
        $region20: #{tpu_custom_call.1} parent=11 // pred_fallthru
          _
        // Predicated region
        $region21: #{tpu_custom_call.1} parent=11 // pred_check
          %p204 = pneg %p154
        $region22: #{tpu_custom_call.1} parent=11 // pred_check_branch
          %206 = sbr.rel (%p204) target = $region24
        $region23: #{tpu_custom_call.1} parent=11 // pred_region
          %s208 = ssub.s32 128, 128
          %209 = vsyncadd [#allocation9], %s208
          %s211 = sshll.u32 [#allocation10], 4
          %s212 = int_to_ptr.vmem [resolvable:$true] %s211
          %214 = dma.hbm_to_vmem [thread:$0]  %s4, 128, %s212, [#allocation9]
        $region24: #{tpu_custom_call.1} parent=11 // pred_fallthru
          _
      $region12: #{tpu_custom_call.1} parent=5 // pred_fallthru
        _
      %p215 = scmp.lt.s32.totalorder %s18, 3
      // Predicated region
      $region25: #{tpu_custom_call.1} parent=5 // pred_check
        %p216 = pneg %p215
      $region26: #{tpu_custom_call.1} parent=5 // pred_check_branch
        %218 = sbr.rel (%p216) target = $region28
      $region27: #{tpu_custom_call.1} parent=5 // pred_region
        // Predicated region
        $region29: #{tpu_custom_call.1} parent=27 // pred_check
          %p219 = pneg %p52
        $region30: #{tpu_custom_call.1} parent=27 // pred_check_branch
          %221 = sbr.rel (%p219) target = $region32
        $region31: #{tpu_custom_call.1} parent=27 // pred_region
          %s222 = sand.u32 %s42, 1
          %s223 = scalar_lea.sflag [#allocation6], %s222
          %s224 = sand.u32 %s42, 1
          %s225 = smul.addr %s224, 32
          %s226 = scalar_lea.vmem [#allocation5], %s225
          %s227 = smul.u32 4, %s26
          %s229 = ssub.s32 512, 512
          %230 = vsyncadd %s223, %s229
          %s231 = sadd.s32 %s25, %s227
          %s232 = smul.addr %s231, 128
          %s233 = scalar_lea.hbm %s0, %s232
          %s234 = sshll.u32 %s226, 4
          %s235 = int_to_ptr.vmem [resolvable:$true] %s234
          %240 = dma.hbm_to_vmem [thread:$0]  %s233, 512, %s235, %s223, 128, 128, 8
        $region32: #{tpu_custom_call.1} parent=27 // pred_fallthru
          _
        // Predicated region
        $region33: #{tpu_custom_call.1} parent=27 // pred_check
          %p241 = pneg %p80
        $region34: #{tpu_custom_call.1} parent=27 // pred_check_branch
          %243 = sbr.rel (%p241) target = $region36
        $region35: #{tpu_custom_call.1} parent=27 // pred_region
          %s244 = sand.u32 %s18, 1
          %s245 = scalar_lea.sflag [#allocation9], %s244
          %s246 = sand.u32 %s70, 1
          %s247 = smul.addr %s246, 4
          %s248 = scalar_lea.vmem [#allocation8], %s247
          %s249 = smul.u32 4, %s26
          %s251 = ssub.s32 64, 64
          %252 = vsyncadd %s245, %s251
          %s253 = sadd.s32 %s25, %s249
          %s254 = smul.addr %s253, 16
          %s255 = scalar_lea.hbm %s1, %s254
          %s256 = sshll.u32 %s248, 4
          %s257 = int_to_ptr.vmem [resolvable:$true] %s256
          %262 = dma.hbm_to_vmem [thread:$0]  %s255, 64, %s257, %s245, 16, 16, 1
        $region36: #{tpu_custom_call.1} parent=27 // pred_fallthru
          _
      $region28: #{tpu_custom_call.1} parent=5 // pred_fallthru
        _
      %p263 = scmp.le.s32.totalorder 1, %s18
      %p264 = scmp.lt.s32.totalorder %s18, 4
      %p265 = pnand %p263, %p264
      %p266 = pneg %p265
      // Predicated region
      $region37: #{tpu_custom_call.1} parent=5 // pred_check
        _
      $region38: #{tpu_custom_call.1} parent=5 // pred_check_branch
        %268 = sbr.rel (%p265) target = $region40
      $region39: #{tpu_custom_call.1} parent=5 // pred_region
        %s269 = ssub.s32 %s18, 1
        %s270 = sand.u32 %s45, 1
        %s271 = scalar_lea.sflag [#allocation6], %s270
        %s272 = sand.u32 %s45, 1
        %s273 = smul.addr %s272, 32
        %s274 = scalar_lea.vmem [#allocation5], %s273
        // Predicated region
        $region41: #{tpu_custom_call.1} parent=39 // pred_check
          %p275 = pneg %p58
        $region42: #{tpu_custom_call.1} parent=39 // pred_check_branch
          %277 = sbr.rel (%p275) target = $region44
        $region43: #{tpu_custom_call.1} parent=39 // pred_region
          %278 = dma.done %s271, 512
        $region44: #{tpu_custom_call.1} parent=39 // pred_fallthru
          _
        %s279 = sand.u32 %s23, 1
        %s280 = scalar_lea.sflag [#allocation9], %s279
        %s281 = sand.u32 %s73, 1
        %s282 = smul.addr %s281, 4
        %s283 = scalar_lea.vmem [#allocation8], %s282
        // Predicated region
        $region45: #{tpu_custom_call.1} parent=39 // pred_check
          %p284 = pneg %p86
        $region46: #{tpu_custom_call.1} parent=39 // pred_check_branch
          %286 = sbr.rel (%p284) target = $region48
        $region47: #{tpu_custom_call.1} parent=39 // pred_region
          %287 = dma.done %s280, 64
        $region48: #{tpu_custom_call.1} parent=39 // pred_fallthru
          _
        // Predicated region
        $region49: #{tpu_custom_call.1} parent=39 // pred_check
          %p288 = pneg %p154
        $region50: #{tpu_custom_call.1} parent=39 // pred_check_branch
          %290 = sbr.rel (%p288) target = $region52
        $region51: #{tpu_custom_call.1} parent=39 // pred_region
          %291 = dma.done [#allocation9], 128
        $region52: #{tpu_custom_call.1} parent=39 // pred_fallthru
          _
        %s292 = sand.u32 %s45, 1
        %s293 = scalar_lea.sflag [#allocation6], %s292
        %s294 = sand.u32 %s45, 1
        %s295 = smul.addr %s294, 32
        %s296 = scalar_lea.vmem [#allocation5], %s295
        %p297 = pneg %p58
        %p298 = pneg %p55
        %s299 = sand.u32 %s23, 1
        %s300 = scalar_lea.sflag [#allocation9], %s299
        %s301 = sand.u32 %s73, 1
        %s302 = smul.addr %s301, 4
        %s303 = scalar_lea.vmem [#allocation8], %s302
        %p304 = pneg %p86
        %p305 = pneg %p83
        %p306 = scmp.lt.s32.totalorder %s27, 0
        %s307 = scalar_select %p306, %s27, 0
        %s308 = scalar_lea.vmem %s2, %s307
        %p309 = pneg %p112
        %p310 = pneg %p109
        %p311 = pneg %p133
        %p312 = pneg %p130
        %p313 = pneg %p154
        %p314 = pneg %p151
        %p315 = pneg %p180
        %p316 = pneg %p177
        %s317 = smul.u32 4, %s28
        %s318 = smul.u32 4, %s28
        %p319 = scmp.lt.s32.totalorder %s27, 0
        %s320 = scalar_select %p319, %s27, 0
        %s321 = scalar_lea.vmem %s2, %s320
        %v322 = vld [vmem:[%s3] sm:$0xff]
        %v323 = vld [vmem:[#allocation10] sm:$0xff]
        %v324 = vld [vmem:[%s321] sm:$0x1]
        %v325 = vlaneseq
        %v326 = vshrl.u32 %v325, 7
        %p327 = scmp.eq.s32.totalorder %s28, 0
        // Predicated region
        $region53: #{tpu_custom_call.1} parent=39 // pred_check
          %p328 = pneg %p327
        $region54: #{tpu_custom_call.1} parent=39 // pred_check_branch
          %330 = sbr.rel (%p328) target = $region56
        $region55: #{tpu_custom_call.1} parent=39 // pred_region
          %331 = vst [vmem:[#allocation2] sm:$0xff] 0.0
          %332 = vst [vmem:[#allocation3] sm:$0x1] 0.0
          %333 = vst [vmem:[#allocation4] sm:$0x1] 0
        $region56: #{tpu_custom_call.1} parent=39 // pred_fallthru
          _
        %s334 = smul.u32 %s28, 4
        %v335 = vld [vmem:[#allocation2] sm:$0xff]
        %v336 = vld [vmem:[#allocation3] sm:$0x1]
        %v337 = vld [vmem:[#allocation4] sm:$0x1]
        %v338 = vld [vmem:[%s274] sm:$0xff]
        %v339 = vld [vmem:[%s283] sm:$0x1]
        %v340 = vstv %s334
        %vm341 = vcmp.lt.s32.totalorder %v340, %v324
        %v342 = vrot.slane %v335, 4
        %v343 = vmax.f32 %v335, %v342
        %v344 = vrot.slane %v343, 2
        %v345 = vmax.f32 %v343, %v344
        %v346 = vrot.slane %v345, 1
        %v347 = vmax.f32 %v345, %v346
        %v348 = vsub.f32 %v335, %v347
        %v349 = vmul.f32 %v348, 1.442695
        %v350 = vpow.pop %v349
        %vm351 = vcmask 64512
        %v353 = vsel %vm351, %v322, 0
        %355 = vmatprep.subr.mxu0 0.0
        %v356 = vand.u32 %v350, 4294901760
        %357 = vmatpush1.msra.mxu0 %v356
        %358 = vmatprep.subr.mxu0 0.0
        %359 = vmatpush1.msra.mxu0 0.0
        %360 = vmatprep.subr.mxu0 0.0
        %361 = vmatpush1.msra.mxu0 0.0
        %362 = vmatprep.subr.mxu0 0.0
        %363 = vmatpush1.msra.mxu0 0.0
        %364 = vmatprep.subr.mxu0 0.0
        %365 = vmatpush1.msra.mxu0 0.0
        %366 = vmatprep.subr.mxu0 0.0
        %367 = vmatpush1.msra.mxu0 0.0
        %368 = vmatprep.subr.mxu0 0.0
        %369 = vmatpush1.msra.mxu0 0.0
        %370 = vmatprep.subr.mxu0 0.0
        %371 = vmatpush1.msra.mxu0 0.0
        %372 = vmatprep.subr.mxu0 0.0
        %373 = vmatpush1.msra.mxu0 0.0
        %374 = vmatprep.subr.mxu0 0.0
        %375 = vmatpush1.msra.mxu0 0.0
        %376 = vmatprep.subr.mxu0 0.0
        %377 = vmatpush1.msra.mxu0 0.0
        %378 = vmatprep.subr.mxu0 0.0
        %379 = vmatpush1.msra.mxu0 0.0
        %380 = vmatprep.subr.mxu0 0.0
        %381 = vmatpush1.msra.mxu0 0.0
        %382 = vmatprep.subr.mxu0 0.0
        %383 = vmatpush1.msra.mxu0 0.0
        %384 = vmatprep.subr.mxu0 0.0
        %385 = vmatpush1.msra.mxu0 0.0
        %386 = vmatprep.subr.mxu0 0.0
        %387 = vmatpush1.msra.mxu0 0.0
        %388 = vmatprep.subr.mxu0 0.0
        %389 = vmatpush1.msra.mxu0 0.0
        %390 = vmatprep.subr.mxu0 0.0
        %391 = vmatpush1.msra.mxu0 0.0
        %392 = vmatprep.subr.mxu0 0.0
        %393 = vmatpush1.msra.mxu0 0.0
        %394 = vmatprep.subr.mxu0 0.0
        %395 = vmatpush1.msra.mxu0 0.0
        %396 = vmatprep.subr.mxu0 0.0
        %397 = vmatpush1.msra.mxu0 0.0
        %398 = vmatprep.subr.mxu0 0.0
        %399 = vmatpush1.msra.mxu0 0.0
        %400 = vmatprep.subr.mxu0 0.0
        %401 = vmatpush1.msra.mxu0 0.0
        %402 = vmatprep.subr.mxu0 0.0
        %403 = vmatpush1.msra.mxu0 0.0
        %404 = vmatprep.subr.mxu0 0.0
        %405 = vmatpush1.msra.mxu0 0.0
        %406 = vmatprep.subr.mxu0 0.0
        %407 = vmatpush1.msra.mxu0 0.0
        %408 = vmatprep.subr.mxu0 0.0
        %409 = vmatpush1.msra.mxu0 0.0
        %410 = vmatprep.subr.mxu0 0.0
        %411 = vmatpush1.msra.mxu0 0.0
        %412 = vmatprep.subr.mxu0 0.0
        %413 = vmatpush1.msra.mxu0 0.0
        %414 = vmatprep.subr.mxu0 0.0
        %415 = vmatpush1.msra.mxu0 0.0
        %416 = vmatprep.subr.mxu0 0.0
        %417 = vmatpush1.msra.mxu0 0.0
        %418 = vmatprep.subr.mxu0 0.0
        %419 = vmatpush1.msra.mxu0 0.0
        %420 = vmatprep.mubr.f32.mxu0 0.0
        %v421 = vand.u32 %v353, 4294901760
        %v422 = vsub.f32 %v353, %v421
        %v423 = vand.u32 %v422, 4294901760
        %v424 = vsub.f32 %v422, %v423
        %v425 = vand.u32 %v424, 4294901760
        %426 = vmatmul.mubr.f32.gmra.mrb[0].mxu0 %v425
        %v427 = vpop.f32.mrb[0].mxu0
        %v428 = vadd.f32 0.0, %v427
        %v429 = vpop.f32.mrb[0].mxu0
        %430 = vdwg.mxu0
        %431 = vmatprep.subr.mxu0 0.0
        %v432 = vand.u32 %v350, 4294901760
        %v433 = vsub.f32 %v350, %v432
        %v434 = vand.u32 %v433, 4294901760
        %v435 = vsub.f32 %v433, %v434
        %v436 = vand.u32 %v435, 4294901760
        %437 = vmatpush1.msra.mxu0 %v436
        %438 = vmatprep.subr.mxu0 0.0
        %439 = vmatpush1.msra.mxu0 0.0
        %440 = vmatprep.subr.mxu0 0.0
        %441 = vmatpush1.msra.mxu0 0.0
        %442 = vmatprep.subr.mxu0 0.0
        %443 = vmatpush1.msra.mxu0 0.0
        %444 = vmatprep.subr.mxu0 0.0
        %445 = vmatpush1.msra.mxu0 0.0
        %446 = vmatprep.subr.mxu0 0.0
        %447 = vmatpush1.msra.mxu0 0.0
        %448 = vmatprep.subr.mxu0 0.0
        %449 = vmatpush1.msra.mxu0 0.0
        %450 = vmatprep.subr.mxu0 0.0
        %451 = vmatpush1.msra.mxu0 0.0
        %452 = vmatprep.subr.mxu0 0.0
        %453 = vmatpush1.msra.mxu0 0.0
        %454 = vmatprep.subr.mxu0 0.0
        %455 = vmatpush1.msra.mxu0 0.0
        %456 = vmatprep.subr.mxu0 0.0
        %457 = vmatpush1.msra.mxu0 0.0
        %458 = vmatprep.subr.mxu0 0.0
        %459 = vmatpush1.msra.mxu0 0.0
        %460 = vmatprep.subr.mxu0 0.0
        %461 = vmatpush1.msra.mxu0 0.0
        %462 = vmatprep.subr.mxu0 0.0
        %463 = vmatpush1.msra.mxu0 0.0
        %464 = vmatprep.subr.mxu0 0.0
        %465 = vmatpush1.msra.mxu0 0.0
        %466 = vmatprep.subr.mxu0 0.0
        %467 = vmatpush1.msra.mxu0 0.0
        %468 = vmatprep.subr.mxu0 0.0
        %469 = vmatpush1.msra.mxu0 0.0
        %470 = vmatprep.subr.mxu0 0.0
        %471 = vmatpush1.msra.mxu0 0.0
        %472 = vmatprep.subr.mxu0 0.0
        %473 = vmatpush1.msra.mxu0 0.0
        %474 = vmatprep.subr.mxu0 0.0
        %475 = vmatpush1.msra.mxu0 0.0
        %476 = vmatprep.subr.mxu0 0.0
        %477 = vmatpush1.msra.mxu0 0.0
        %478 = vmatprep.subr.mxu0 0.0
        %479 = vmatpush1.msra.mxu0 0.0
        %480 = vmatprep.subr.mxu0 0.0
        %481 = vmatpush1.msra.mxu0 0.0
        %482 = vmatprep.subr.mxu0 0.0
        %483 = vmatpush1.msra.mxu0 0.0
        %484 = vmatprep.subr.mxu0 0.0
        %485 = vmatpush1.msra.mxu0 0.0
        %486 = vmatprep.subr.mxu0 0.0
        %487 = vmatpush1.msra.mxu0 0.0
        %488 = vmatprep.subr.mxu0 0.0
        %489 = vmatpush1.msra.mxu0 0.0
        %490 = vmatprep.subr.mxu0 0.0
        %491 = vmatpush1.msra.mxu0 0.0
        %492 = vmatprep.subr.mxu0 0.0
        %493 = vmatpush1.msra.mxu0 0.0
        %494 = vmatprep.subr.mxu0 0.0
        %495 = vmatpush1.msra.mxu0 0.0
        %496 = vmatprep.subr.mxu0 0.0
        %497 = vmatpush1.msra.mxu0 0.0
        %498 = vmatprep.subr.mxu0 0.0
        %499 = vmatpush1.msra.mxu0 0.0
        %500 = vmatprep.mubr.f32.mxu0 0.0
        %v501 = vand.u32 %v353, 4294901760
        %502 = vmatmul.mubr.f32.gmra.mrb[0].mxu0 %v501
        %v503 = vpop.f32.mrb[0].mxu0
        %v504 = vadd.f32 %v428, %v503
        %v505 = vpop.f32.mrb[0].mxu0
        %506 = vdwg.mxu0
        %507 = vmatprep.subr.mxu0 0.0
        %v508 = vand.u32 %v350, 4294901760
        %v509 = vsub.f32 %v350, %v508
        %510 = vmatpush1.msra.mxu0 %v509
        %511 = vmatprep.subr.mxu0 0.0
        %512 = vmatpush1.msra.mxu0 0.0
        %513 = vmatprep.subr.mxu0 0.0
        %514 = vmatpush1.msra.mxu0 0.0
        %515 = vmatprep.subr.mxu0 0.0
        %516 = vmatpush1.msra.mxu0 0.0
        %517 = vmatprep.subr.mxu0 0.0
        %518 = vmatpush1.msra.mxu0 0.0
        %519 = vmatprep.subr.mxu0 0.0
        %520 = vmatpush1.msra.mxu0 0.0
        %521 = vmatprep.subr.mxu0 0.0
        %522 = vmatpush1.msra.mxu0 0.0
        %523 = vmatprep.subr.mxu0 0.0
        %524 = vmatpush1.msra.mxu0 0.0
        %525 = vmatprep.subr.mxu0 0.0
        %526 = vmatpush1.msra.mxu0 0.0
        %527 = vmatprep.subr.mxu0 0.0
        %528 = vmatpush1.msra.mxu0 0.0
        %529 = vmatprep.subr.mxu0 0.0
        %530 = vmatpush1.msra.mxu0 0.0
        %531 = vmatprep.subr.mxu0 0.0
        %532 = vmatpush1.msra.mxu0 0.0
        %533 = vmatprep.subr.mxu0 0.0
        %534 = vmatpush1.msra.mxu0 0.0
        %535 = vmatprep.subr.mxu0 0.0
        %536 = vmatpush1.msra.mxu0 0.0
        %537 = vmatprep.subr.mxu0 0.0
        %538 = vmatpush1.msra.mxu0 0.0
        %539 = vmatprep.subr.mxu0 0.0
        %540 = vmatpush1.msra.mxu0 0.0
        %541 = vmatprep.subr.mxu0 0.0
        %542 = vmatpush1.msra.mxu0 0.0
        %543 = vmatprep.subr.mxu0 0.0
        %544 = vmatpush1.msra.mxu0 0.0
        %545 = vmatprep.subr.mxu0 0.0
        %546 = vmatpush1.msra.mxu0 0.0
        %547 = vmatprep.subr.mxu0 0.0
        %548 = vmatpush1.msra.mxu0 0.0
        %549 = vmatprep.subr.mxu0 0.0
        %550 = vmatpush1.msra.mxu0 0.0
        %551 = vmatprep.subr.mxu0 0.0
        %552 = vmatpush1.msra.mxu0 0.0
        %553 = vmatprep.subr.mxu0 0.0
        %554 = vmatpush1.msra.mxu0 0.0
        %555 = vmatprep.subr.mxu0 0.0
        %556 = vmatpush1.msra.mxu0 0.0
        %557 = vmatprep.subr.mxu0 0.0
        %558 = vmatpush1.msra.mxu0 0.0
        %559 = vmatprep.subr.mxu0 0.0
        %560 = vmatpush1.msra.mxu0 0.0
        %561 = vmatprep.subr.mxu0 0.0
        %562 = vmatpush1.msra.mxu0 0.0
        %563 = vmatprep.subr.mxu0 0.0
        %564 = vmatpush1.msra.mxu0 0.0
        %565 = vmatprep.subr.mxu0 0.0
        %566 = vmatpush1.msra.mxu0 0.0
        %567 = vmatprep.subr.mxu0 0.0
        %568 = vmatpush1.msra.mxu0 0.0
        %569 = vmatprep.subr.mxu0 0.0
        %570 = vmatpush1.msra.mxu0 0.0
        %571 = vmatprep.subr.mxu0 0.0
        %572 = vmatpush1.msra.mxu0 0.0
        %573 = vmatprep.mubr.f32.mxu0 0.0
        %v574 = vand.u32 %v353, 4294901760
        %v575 = vsub.f32 %v353, %v574
        %576 = vmatmul.mubr.f32.gmra.mrb[0].mxu0 %v575
        %v577 = vpop.f32.mrb[0].mxu0
        %v578 = vadd.f32 %v504, %v577
        %v579 = vpop.f32.mrb[0].mxu0
        %580 = vdwg.mxu0
        %581 = vmatprep.subr.mxu0 0.0
        %v582 = vand.u32 %v350, 4294901760
        %583 = vmatpush1.msra.mxu0 %v582
        %584 = vmatprep.subr.mxu0 0.0
        %585 = vmatpush1.msra.mxu0 0.0
        %586 = vmatprep.subr.mxu0 0.0
        %587 = vmatpush1.msra.mxu0 0.0
        %588 = vmatprep.subr.mxu0 0.0
        %589 = vmatpush1.msra.mxu0 0.0
        %590 = vmatprep.subr.mxu0 0.0
        %591 = vmatpush1.msra.mxu0 0.0
        %592 = vmatprep.subr.mxu0 0.0
        %593 = vmatpush1.msra.mxu0 0.0
        %594 = vmatprep.subr.mxu0 0.0
        %595 = vmatpush1.msra.mxu0 0.0
        %596 = vmatprep.subr.mxu0 0.0
        %597 = vmatpush1.msra.mxu0 0.0
        %598 = vmatprep.subr.mxu0 0.0
        %599 = vmatpush1.msra.mxu0 0.0
        %600 = vmatprep.subr.mxu0 0.0
        %601 = vmatpush1.msra.mxu0 0.0
        %602 = vmatprep.subr.mxu0 0.0
        %603 = vmatpush1.msra.mxu0 0.0
        %604 = vmatprep.subr.mxu0 0.0
        %605 = vmatpush1.msra.mxu0 0.0
        %606 = vmatprep.subr.mxu0 0.0
        %607 = vmatpush1.msra.mxu0 0.0
        %608 = vmatprep.subr.mxu0 0.0
        %609 = vmatpush1.msra.mxu0 0.0
        %610 = vmatprep.subr.mxu0 0.0
        %611 = vmatpush1.msra.mxu0 0.0
        %612 = vmatprep.subr.mxu0 0.0
        %613 = vmatpush1.msra.mxu0 0.0
        %614 = vmatprep.subr.mxu0 0.0
        %615 = vmatpush1.msra.mxu0 0.0
        %616 = vmatprep.subr.mxu0 0.0
        %617 = vmatpush1.msra.mxu0 0.0
        %618 = vmatprep.subr.mxu0 0.0
        %619 = vmatpush1.msra.mxu0 0.0
        %620 = vmatprep.subr.mxu0 0.0
        %621 = vmatpush1.msra.mxu0 0.0
        %622 = vmatprep.subr.mxu0 0.0
        %623 = vmatpush1.msra.mxu0 0.0
        %624 = vmatprep.subr.mxu0 0.0
        %625 = vmatpush1.msra.mxu0 0.0
        %626 = vmatprep.subr.mxu0 0.0
        %627 = vmatpush1.msra.mxu0 0.0
        %628 = vmatprep.subr.mxu0 0.0
        %629 = vmatpush1.msra.mxu0 0.0
        %630 = vmatprep.subr.mxu0 0.0
        %631 = vmatpush1.msra.mxu0 0.0
        %632 = vmatprep.subr.mxu0 0.0
        %633 = vmatpush1.msra.mxu0 0.0
        %634 = vmatprep.subr.mxu0 0.0
        %635 = vmatpush1.msra.mxu0 0.0
        %636 = vmatprep.subr.mxu0 0.0
        %637 = vmatpush1.msra.mxu0 0.0
        %638 = vmatprep.subr.mxu0 0.0
        %639 = vmatpush1.msra.mxu0 0.0
        %640 = vmatprep.subr.mxu0 0.0
        %641 = vmatpush1.msra.mxu0 0.0
        %642 = vmatprep.subr.mxu0 0.0
        %643 = vmatpush1.msra.mxu0 0.0
        %644 = vmatprep.subr.mxu0 0.0
        %645 = vmatpush1.msra.mxu0 0.0
        %646 = vmatprep.mubr.f32.mxu0 0.0
        %v647 = vand.u32 %v353, 4294901760
        %v648 = vsub.f32 %v353, %v647
        %v649 = vand.u32 %v648, 4294901760
        %650 = vmatmul.mubr.f32.gmra.mrb[0].mxu0 %v649
        %v651 = vpop.f32.mrb[0].mxu0
        %v652 = vadd.f32 %v578, %v651
        %v653 = vpop.f32.mrb[0].mxu0
        %654 = vdwg.mxu0
        %655 = vmatprep.subr.mxu0 0.0
        %v656 = vand.u32 %v350, 4294901760
        %v657 = vsub.f32 %v350, %v656
        %v658 = vand.u32 %v657, 4294901760
        %659 = vmatpush1.msra.mxu0 %v658
        %660 = vmatprep.subr.mxu0 0.0
        %661 = vmatpush1.msra.mxu0 0.0
        %662 = vmatprep.subr.mxu0 0.0
        %663 = vmatpush1.msra.mxu0 0.0
        %664 = vmatprep.subr.mxu0 0.0
        %665 = vmatpush1.msra.mxu0 0.0
        %666 = vmatprep.subr.mxu0 0.0
        %667 = vmatpush1.msra.mxu0 0.0
        %668 = vmatprep.subr.mxu0 0.0
        %669 = vmatpush1.msra.mxu0 0.0
        %670 = vmatprep.subr.mxu0 0.0
        %671 = vmatpush1.msra.mxu0 0.0
        %672 = vmatprep.subr.mxu0 0.0
        %673 = vmatpush1.msra.mxu0 0.0
        %674 = vmatprep.subr.mxu0 0.0
        %675 = vmatpush1.msra.mxu0 0.0
        %676 = vmatprep.subr.mxu0 0.0
        %677 = vmatpush1.msra.mxu0 0.0
        %678 = vmatprep.subr.mxu0 0.0
        %679 = vmatpush1.msra.mxu0 0.0
        %680 = vmatprep.subr.mxu0 0.0
        %681 = vmatpush1.msra.mxu0 0.0
        %682 = vmatprep.subr.mxu0 0.0
        %683 = vmatpush1.msra.mxu0 0.0
        %684 = vmatprep.subr.mxu0 0.0
        %685 = vmatpush1.msra.mxu0 0.0
        %686 = vmatprep.subr.mxu0 0.0
        %687 = vmatpush1.msra.mxu0 0.0
        %688 = vmatprep.subr.mxu0 0.0
        %689 = vmatpush1.msra.mxu0 0.0
        %690 = vmatprep.subr.mxu0 0.0
        %691 = vmatpush1.msra.mxu0 0.0
        %692 = vmatprep.subr.mxu0 0.0
        %693 = vmatpush1.msra.mxu0 0.0
        %694 = vmatprep.subr.mxu0 0.0
        %695 = vmatpush1.msra.mxu0 0.0
        %696 = vmatprep.subr.mxu0 0.0
        %697 = vmatpush1.msra.mxu0 0.0
        %698 = vmatprep.subr.mxu0 0.0
        %699 = vmatpush1.msra.mxu0 0.0
        %700 = vmatprep.subr.mxu0 0.0
        %701 = vmatpush1.msra.mxu0 0.0
        %702 = vmatprep.subr.mxu0 0.0
        %703 = vmatpush1.msra.mxu0 0.0
        %704 = vmatprep.subr.mxu0 0.0
        %705 = vmatpush1.msra.mxu0 0.0
        %706 = vmatprep.subr.mxu0 0.0
        %707 = vmatpush1.msra.mxu0 0.0
        %708 = vmatprep.subr.mxu0 0.0
        %709 = vmatpush1.msra.mxu0 0.0
        %710 = vmatprep.subr.mxu0 0.0
        %711 = vmatpush1.msra.mxu0 0.0
        %712 = vmatprep.subr.mxu0 0.0
        %713 = vmatpush1.msra.mxu0 0.0
        %714 = vmatprep.subr.mxu0 0.0
        %715 = vmatpush1.msra.mxu0 0.0
        %716 = vmatprep.subr.mxu0 0.0
        %717 = vmatpush1.msra.mxu0 0.0
        %718 = vmatprep.subr.mxu0 0.0
        %719 = vmatpush1.msra.mxu0 0.0
        %720 = vmatprep.subr.mxu0 0.0
        %721 = vmatpush1.msra.mxu0 0.0
        %722 = vmatprep.mubr.f32.mxu0 0.0
        %v723 = vand.u32 %v353, 4294901760
        %724 = vmatmul.mubr.f32.gmra.mrb[0].mxu0 %v723
        %v725 = vpop.f32.mrb[0].mxu0
        %v726 = vadd.f32 %v652, %v725
        %v727 = vpop.f32.mrb[0].mxu0
        %728 = vdwg.mxu0
        %729 = vmatprep.subr.mxu0 0.0
        %v730 = vand.u32 %v350, 4294901760
        %731 = vmatpush1.msra.mxu0 %v730
        %732 = vmatprep.subr.mxu0 0.0
        %733 = vmatpush1.msra.mxu0 0.0
        %734 = vmatprep.subr.mxu0 0.0
        %735 = vmatpush1.msra.mxu0 0.0
        %736 = vmatprep.subr.mxu0 0.0
        %737 = vmatpush1.msra.mxu0 0.0
        %738 = vmatprep.subr.mxu0 0.0
        %739 = vmatpush1.msra.mxu0 0.0
        %740 = vmatprep.subr.mxu0 0.0
        %741 = vmatpush1.msra.mxu0 0.0
        %742 = vmatprep.subr.mxu0 0.0
        %743 = vmatpush1.msra.mxu0 0.0
        %744 = vmatprep.subr.mxu0 0.0
        %745 = vmatpush1.msra.mxu0 0.0
        %746 = vmatprep.subr.mxu0 0.0
        %747 = vmatpush1.msra.mxu0 0.0
        %748 = vmatprep.subr.mxu0 0.0
        %749 = vmatpush1.msra.mxu0 0.0
        %750 = vmatprep.subr.mxu0 0.0
        %751 = vmatpush1.msra.mxu0 0.0
        %752 = vmatprep.subr.mxu0 0.0
        %753 = vmatpush1.msra.mxu0 0.0
        %754 = vmatprep.subr.mxu0 0.0
        %755 = vmatpush1.msra.mxu0 0.0
        %756 = vmatprep.subr.mxu0 0.0
        %757 = vmatpush1.msra.mxu0 0.0
        %758 = vmatprep.subr.mxu0 0.0
        %759 = vmatpush1.msra.mxu0 0.0
        %760 = vmatprep.subr.mxu0 0.0
        %761 = vmatpush1.msra.mxu0 0.0
        %762 = vmatprep.subr.mxu0 0.0
        %763 = vmatpush1.msra.mxu0 0.0
        %764 = vmatprep.subr.mxu0 0.0
        %765 = vmatpush1.msra.mxu0 0.0
        %766 = vmatprep.subr.mxu0 0.0
        %767 = vmatpush1.msra.mxu0 0.0
        %768 = vmatprep.subr.mxu0 0.0
        %769 = vmatpush1.msra.mxu0 0.0
        %770 = vmatprep.subr.mxu0 0.0
        %771 = vmatpush1.msra.mxu0 0.0
        %772 = vmatprep.subr.mxu0 0.0
        %773 = vmatpush1.msra.mxu0 0.0
        %774 = vmatprep.subr.mxu0 0.0
        %775 = vmatpush1.msra.mxu0 0.0
        %776 = vmatprep.subr.mxu0 0.0
        %777 = vmatpush1.msra.mxu0 0.0
        %778 = vmatprep.subr.mxu0 0.0
        %779 = vmatpush1.msra.mxu0 0.0
        %780 = vmatprep.subr.mxu0 0.0
        %781 = vmatpush1.msra.mxu0 0.0
        %782 = vmatprep.subr.mxu0 0.0
        %783 = vmatpush1.msra.mxu0 0.0
        %784 = vmatprep.subr.mxu0 0.0
        %785 = vmatpush1.msra.mxu0 0.0
        %786 = vmatprep.subr.mxu0 0.0
        %787 = vmatpush1.msra.mxu0 0.0
        %788 = vmatprep.subr.mxu0 0.0
        %789 = vmatpush1.msra.mxu0 0.0
        %790 = vmatprep.subr.mxu0 0.0
        %791 = vmatpush1.msra.mxu0 0.0
        %792 = vmatprep.subr.mxu0 0.0
        %793 = vmatpush1.msra.mxu0 0.0
        %794 = vmatprep.mubr.f32.mxu0 0.0
        %v795 = vand.u32 %v353, 4294901760
        %796 = vmatmul.mubr.f32.gmra.mrb[0].mxu0 %v795
        %v797 = vpop.f32.mrb[0].mxu0
        %v798 = vadd.f32 %v726, %v797
        %v799 = vpop.f32.mrb[0].mxu0
        %800 = vdwg.mxu0
        %v801 = vadd.f32 %v338, %v347
        %v802 = vlog2.pop %v798
        %v803 = vmul.f32 %v802, 0.6931472
        %v804 = vadd.f32 %v801, %v803
        %v805 = vsel %vm341, 1, 0
        %v806 = vlaneseq
        %v807 = vshrl.u32 %v806, 7
        %v808 = vsub.s32 0, %v807
        %v809 = vrot.slane %v805, %v808
        %vm810 = vcmp.eq.s32.totalorder %v809, 1
        %v811 = vsel %vm810, %v804, %v335
        %v812 = vlaneseq
        %v813 = vshrl.u32 %v812, 7
        %v814 = vsub.s32 0, %v813
        %v815 = vrot.slane %v339, %v814
        %vm816 = vcmp.eq.s32.totalorder %v326, %v815
        %v817 = vsel %vm816, 1, 0
        %v818 = vcvt.s32.f32 %v817
        %v819 = vlaneseq
        %v820 = vshrl.u32 %v819, 7
        %v821 = vsub.s32 0, %v820
        %v822 = vrot.slane %v337, %v821
        %vm823 = vcmp.eq.s32.totalorder %v326, %v822
        %v824 = vsel %vm823, 1, 0
        %v825 = vcvt.s32.f32 %v824
        %v827 = vsel %vm351, %v323, 0
        %829 = vmatprep.subr.mxu0 0.0
        %v830 = vand.u32 %v825, 4294901760
        %831 = vmatpush1.msra.mxu0 %v830
        %832 = vmatprep.subr.mxu0 0.0
        %833 = vmatpush1.msra.mxu0 0.0
        %834 = vmatprep.subr.mxu0 0.0
        %835 = vmatpush1.msra.mxu0 0.0
        %836 = vmatprep.subr.mxu0 0.0
        %837 = vmatpush1.msra.mxu0 0.0
        %838 = vmatprep.subr.mxu0 0.0
        %839 = vmatpush1.msra.mxu0 0.0
        %840 = vmatprep.subr.mxu0 0.0
        %841 = vmatpush1.msra.mxu0 0.0
        %842 = vmatprep.subr.mxu0 0.0
        %843 = vmatpush1.msra.mxu0 0.0
        %844 = vmatprep.subr.mxu0 0.0
        %845 = vmatpush1.msra.mxu0 0.0
        %846 = vmatprep.subr.mxu0 0.0
        %847 = vmatpush1.msra.mxu0 0.0
        %848 = vmatprep.subr.mxu0 0.0
        %849 = vmatpush1.msra.mxu0 0.0
        %850 = vmatprep.subr.mxu0 0.0
        %851 = vmatpush1.msra.mxu0 0.0
        %852 = vmatprep.subr.mxu0 0.0
        %853 = vmatpush1.msra.mxu0 0.0
        %854 = vmatprep.subr.mxu0 0.0
        %855 = vmatpush1.msra.mxu0 0.0
        %856 = vmatprep.subr.mxu0 0.0
        %857 = vmatpush1.msra.mxu0 0.0
        %858 = vmatprep.subr.mxu0 0.0
        %859 = vmatpush1.msra.mxu0 0.0
        %860 = vmatprep.subr.mxu0 0.0
        %861 = vmatpush1.msra.mxu0 0.0
        %862 = vmatprep.subr.mxu0 0.0
        %863 = vmatpush1.msra.mxu0 0.0
        %864 = vmatprep.subr.mxu0 0.0
        %865 = vmatpush1.msra.mxu0 0.0
        %866 = vmatprep.subr.mxu0 0.0
        %867 = vmatpush1.msra.mxu0 0.0
        %868 = vmatprep.subr.mxu0 0.0
        %869 = vmatpush1.msra.mxu0 0.0
        %870 = vmatprep.subr.mxu0 0.0
        %871 = vmatpush1.msra.mxu0 0.0
        %872 = vmatprep.subr.mxu0 0.0
        %873 = vmatpush1.msra.mxu0 0.0
        %874 = vmatprep.subr.mxu0 0.0
        %875 = vmatpush1.msra.mxu0 0.0
        %876 = vmatprep.subr.mxu0 0.0
        %877 = vmatpush1.msra.mxu0 0.0
        %878 = vmatprep.subr.mxu0 0.0
        %879 = vmatpush1.msra.mxu0 0.0
        %880 = vmatprep.subr.mxu0 0.0
        %881 = vmatpush1.msra.mxu0 0.0
        %882 = vmatprep.subr.mxu0 0.0
        %883 = vmatpush1.msra.mxu0 0.0
        %884 = vmatprep.subr.mxu0 0.0
        %885 = vmatpush1.msra.mxu0 0.0
        %886 = vmatprep.subr.mxu0 0.0
        %887 = vmatpush1.msra.mxu0 0.0
        %888 = vmatprep.subr.mxu0 0.0
        %889 = vmatpush1.msra.mxu0 0.0
        %890 = vmatprep.subr.mxu0 0.0
        %891 = vmatpush1.msra.mxu0 0.0
        %892 = vmatprep.subr.mxu0 0.0
        %893 = vmatpush1.msra.mxu0 0.0
        %894 = vmatprep.mubr.f32.mxu0 0.0
        %v895 = vand.u32 %v827, 4294901760
        %v896 = vsub.f32 %v827, %v895
        %v897 = vand.u32 %v896, 4294901760
        %v898 = vsub.f32 %v896, %v897
        %v899 = vand.u32 %v898, 4294901760
        %900 = vmatmul.mubr.f32.gmra.mrb[0].mxu0 %v899
        %v901 = vpop.f32.mrb[0].mxu0
        %v902 = vadd.f32 0.0, %v901
        %v903 = vpop.f32.mrb[0].mxu0
        %904 = vdwg.mxu0
        %905 = vmatprep.subr.mxu0 0.0
        %v906 = vand.u32 %v825, 4294901760
        %v907 = vsub.f32 %v825, %v906
        %v908 = vand.u32 %v907, 4294901760
        %v909 = vsub.f32 %v907, %v908
        %v910 = vand.u32 %v909, 4294901760
        %911 = vmatpush1.msra.mxu0 %v910
        %912 = vmatprep.subr.mxu0 0.0
        %913 = vmatpush1.msra.mxu0 0.0
        %914 = vmatprep.subr.mxu0 0.0
        %915 = vmatpush1.msra.mxu0 0.0
        %916 = vmatprep.subr.mxu0 0.0
        %917 = vmatpush1.msra.mxu0 0.0
        %918 = vmatprep.subr.mxu0 0.0
        %919 = vmatpush1.msra.mxu0 0.0
        %920 = vmatprep.subr.mxu0 0.0
        %921 = vmatpush1.msra.mxu0 0.0
        %922 = vmatprep.subr.mxu0 0.0
        %923 = vmatpush1.msra.mxu0 0.0
        %924 = vmatprep.subr.mxu0 0.0
        %925 = vmatpush1.msra.mxu0 0.0
        %926 = vmatprep.subr.mxu0 0.0
        %927 = vmatpush1.msra.mxu0 0.0
        %928 = vmatprep.subr.mxu0 0.0
        %929 = vmatpush1.msra.mxu0 0.0
        %930 = vmatprep.subr.mxu0 0.0
        %931 = vmatpush1.msra.mxu0 0.0
        %932 = vmatprep.subr.mxu0 0.0
        %933 = vmatpush1.msra.mxu0 0.0
        %934 = vmatprep.subr.mxu0 0.0
        %935 = vmatpush1.msra.mxu0 0.0
        %936 = vmatprep.subr.mxu0 0.0
        %937 = vmatpush1.msra.mxu0 0.0
        %938 = vmatprep.subr.mxu0 0.0
        %939 = vmatpush1.msra.mxu0 0.0
        %940 = vmatprep.subr.mxu0 0.0
        %941 = vmatpush1.msra.mxu0 0.0
        %942 = vmatprep.subr.mxu0 0.0
        %943 = vmatpush1.msra.mxu0 0.0
        %944 = vmatprep.subr.mxu0 0.0
        %945 = vmatpush1.msra.mxu0 0.0
        %946 = vmatprep.subr.mxu0 0.0
        %947 = vmatpush1.msra.mxu0 0.0
        %948 = vmatprep.subr.mxu0 0.0
        %949 = vmatpush1.msra.mxu0 0.0
        %950 = vmatprep.subr.mxu0 0.0
        %951 = vmatpush1.msra.mxu0 0.0
        %952 = vmatprep.subr.mxu0 0.0
        %953 = vmatpush1.msra.mxu0 0.0
        %954 = vmatprep.subr.mxu0 0.0
        %955 = vmatpush1.msra.mxu0 0.0
        %956 = vmatprep.subr.mxu0 0.0
        %957 = vmatpush1.msra.mxu0 0.0
        %958 = vmatprep.subr.mxu0 0.0
        %959 = vmatpush1.msra.mxu0 0.0
        %960 = vmatprep.subr.mxu0 0.0
        %961 = vmatpush1.msra.mxu0 0.0
        %962 = vmatprep.subr.mxu0 0.0
        %963 = vmatpush1.msra.mxu0 0.0
        %964 = vmatprep.subr.mxu0 0.0
        %965 = vmatpush1.msra.mxu0 0.0
        %966 = vmatprep.subr.mxu0 0.0
        %967 = vmatpush1.msra.mxu0 0.0
        %968 = vmatprep.subr.mxu0 0.0
        %969 = vmatpush1.msra.mxu0 0.0
        %970 = vmatprep.subr.mxu0 0.0
        %971 = vmatpush1.msra.mxu0 0.0
        %972 = vmatprep.subr.mxu0 0.0
        %973 = vmatpush1.msra.mxu0 0.0
        %974 = vmatprep.mubr.f32.mxu0 0.0
        %v975 = vand.u32 %v827, 4294901760
        %976 = vmatmul.mubr.f32.gmra.mrb[0].mxu0 %v975
        %v977 = vpop.f32.mrb[0].mxu0
        %v978 = vadd.f32 %v902, %v977
        %v979 = vpop.f32.mrb[0].mxu0
        %980 = vdwg.mxu0
        %981 = vmatprep.subr.mxu0 0.0
        %v982 = vand.u32 %v825, 4294901760
        %v983 = vsub.f32 %v825, %v982
        %984 = vmatpush1.msra.mxu0 %v983
        %985 = vmatprep.subr.mxu0 0.0
        %986 = vmatpush1.msra.mxu0 0.0
        %987 = vmatprep.subr.mxu0 0.0
        %988 = vmatpush1.msra.mxu0 0.0
        %989 = vmatprep.subr.mxu0 0.0
        %990 = vmatpush1.msra.mxu0 0.0
        %991 = vmatprep.subr.mxu0 0.0
        %992 = vmatpush1.msra.mxu0 0.0
        %993 = vmatprep.subr.mxu0 0.0
        %994 = vmatpush1.msra.mxu0 0.0
        %995 = vmatprep.subr.mxu0 0.0
        %996 = vmatpush1.msra.mxu0 0.0
        %997 = vmatprep.subr.mxu0 0.0
        %998 = vmatpush1.msra.mxu0 0.0
        %999 = vmatprep.subr.mxu0 0.0
        %1000 = vmatpush1.msra.mxu0 0.0
        %1001 = vmatprep.subr.mxu0 0.0
        %1002 = vmatpush1.msra.mxu0 0.0
        %1003 = vmatprep.subr.mxu0 0.0
        %1004 = vmatpush1.msra.mxu0 0.0
        %1005 = vmatprep.subr.mxu0 0.0
        %1006 = vmatpush1.msra.mxu0 0.0
        %1007 = vmatprep.subr.mxu0 0.0
        %1008 = vmatpush1.msra.mxu0 0.0
        %1009 = vmatprep.subr.mxu0 0.0
        %1010 = vmatpush1.msra.mxu0 0.0
        %1011 = vmatprep.subr.mxu0 0.0
        %1012 = vmatpush1.msra.mxu0 0.0
        %1013 = vmatprep.subr.mxu0 0.0
        %1014 = vmatpush1.msra.mxu0 0.0
        %1015 = vmatprep.subr.mxu0 0.0
        %1016 = vmatpush1.msra.mxu0 0.0
        %1017 = vmatprep.subr.mxu0 0.0
        %1018 = vmatpush1.msra.mxu0 0.0
        %1019 = vmatprep.subr.mxu0 0.0
        %1020 = vmatpush1.msra.mxu0 0.0
        %1021 = vmatprep.subr.mxu0 0.0
        %1022 = vmatpush1.msra.mxu0 0.0
        %1023 = vmatprep.subr.mxu0 0.0
        %1024 = vmatpush1.msra.mxu0 0.0
        %1025 = vmatprep.subr.mxu0 0.0
        %1026 = vmatpush1.msra.mxu0 0.0
        %1027 = vmatprep.subr.mxu0 0.0
        %1028 = vmatpush1.msra.mxu0 0.0
        %1029 = vmatprep.subr.mxu0 0.0
        %1030 = vmatpush1.msra.mxu0 0.0
        %1031 = vmatprep.subr.mxu0 0.0
        %1032 = vmatpush1.msra.mxu0 0.0
        %1033 = vmatprep.subr.mxu0 0.0
        %1034 = vmatpush1.msra.mxu0 0.0
        %1035 = vmatprep.subr.mxu0 0.0
        %1036 = vmatpush1.msra.mxu0 0.0
        %1037 = vmatprep.subr.mxu0 0.0
        %1038 = vmatpush1.msra.mxu0 0.0
        %1039 = vmatprep.subr.mxu0 0.0
        %1040 = vmatpush1.msra.mxu0 0.0
        %1041 = vmatprep.subr.mxu0 0.0
        %1042 = vmatpush1.msra.mxu0 0.0
        %1043 = vmatprep.subr.mxu0 0.0
        %1044 = vmatpush1.msra.mxu0 0.0
        %1045 = vmatprep.subr.mxu0 0.0
        %1046 = vmatpush1.msra.mxu0 0.0
        %1047 = vmatprep.mubr.f32.mxu0 0.0
        %v1048 = vand.u32 %v827, 4294901760
        %v1049 = vsub.f32 %v827, %v1048
        %1050 = vmatmul.mubr.f32.gmra.mrb[0].mxu0 %v1049
        %v1051 = vpop.f32.mrb[0].mxu0
        %v1052 = vadd.f32 %v978, %v1051
        %v1053 = vpop.f32.mrb[0].mxu0
        %1054 = vdwg.mxu0
        %1055 = vmatprep.subr.mxu0 0.0
        %v1056 = vand.u32 %v825, 4294901760
        %1057 = vmatpush1.msra.mxu0 %v1056
        %1058 = vmatprep.subr.mxu0 0.0
        %1059 = vmatpush1.msra.mxu0 0.0
        %1060 = vmatprep.subr.mxu0 0.0
        %1061 = vmatpush1.msra.mxu0 0.0
        %1062 = vmatprep.subr.mxu0 0.0
        %1063 = vmatpush1.msra.mxu0 0.0
        %1064 = vmatprep.subr.mxu0 0.0
        %1065 = vmatpush1.msra.mxu0 0.0
        %1066 = vmatprep.subr.mxu0 0.0
        %1067 = vmatpush1.msra.mxu0 0.0
        %1068 = vmatprep.subr.mxu0 0.0
        %1069 = vmatpush1.msra.mxu0 0.0
        %1070 = vmatprep.subr.mxu0 0.0
        %1071 = vmatpush1.msra.mxu0 0.0
        %1072 = vmatprep.subr.mxu0 0.0
        %1073 = vmatpush1.msra.mxu0 0.0
        %1074 = vmatprep.subr.mxu0 0.0
        %1075 = vmatpush1.msra.mxu0 0.0
        %1076 = vmatprep.subr.mxu0 0.0
        %1077 = vmatpush1.msra.mxu0 0.0
        %1078 = vmatprep.subr.mxu0 0.0
        %1079 = vmatpush1.msra.mxu0 0.0
        %1080 = vmatprep.subr.mxu0 0.0
        %1081 = vmatpush1.msra.mxu0 0.0
        %1082 = vmatprep.subr.mxu0 0.0
        %1083 = vmatpush1.msra.mxu0 0.0
        %1084 = vmatprep.subr.mxu0 0.0
        %1085 = vmatpush1.msra.mxu0 0.0
        %1086 = vmatprep.subr.mxu0 0.0
        %1087 = vmatpush1.msra.mxu0 0.0
        %1088 = vmatprep.subr.mxu0 0.0
        %1089 = vmatpush1.msra.mxu0 0.0
        %1090 = vmatprep.subr.mxu0 0.0
        %1091 = vmatpush1.msra.mxu0 0.0
        %1092 = vmatprep.subr.mxu0 0.0
        %1093 = vmatpush1.msra.mxu0 0.0
        %1094 = vmatprep.subr.mxu0 0.0
        %1095 = vmatpush1.msra.mxu0 0.0
        %1096 = vmatprep.subr.mxu0 0.0
        %1097 = vmatpush1.msra.mxu0 0.0
        %1098 = vmatprep.subr.mxu0 0.0
        %1099 = vmatpush1.msra.mxu0 0.0
        %1100 = vmatprep.subr.mxu0 0.0
        %1101 = vmatpush1.msra.mxu0 0.0
        %1102 = vmatprep.subr.mxu0 0.0
        %1103 = vmatpush1.msra.mxu0 0.0
        %1104 = vmatprep.subr.mxu0 0.0
        %1105 = vmatpush1.msra.mxu0 0.0
        %1106 = vmatprep.subr.mxu0 0.0
        %1107 = vmatpush1.msra.mxu0 0.0
        %1108 = vmatprep.subr.mxu0 0.0
        %1109 = vmatpush1.msra.mxu0 0.0
        %1110 = vmatprep.subr.mxu0 0.0
        %1111 = vmatpush1.msra.mxu0 0.0
        %1112 = vmatprep.subr.mxu0 0.0
        %1113 = vmatpush1.msra.mxu0 0.0
        %1114 = vmatprep.subr.mxu0 0.0
        %1115 = vmatpush1.msra.mxu0 0.0
        %1116 = vmatprep.subr.mxu0 0.0
        %1117 = vmatpush1.msra.mxu0 0.0
        %1118 = vmatprep.subr.mxu0 0.0
        %1119 = vmatpush1.msra.mxu0 0.0
        %1120 = vmatprep.mubr.f32.mxu0 0.0
        %v1121 = vand.u32 %v827, 4294901760
        %v1122 = vsub.f32 %v827, %v1121
        %v1123 = vand.u32 %v1122, 4294901760
        %1124 = vmatmul.mubr.f32.gmra.mrb[0].mxu0 %v1123
        %v1125 = vpop.f32.mrb[0].mxu0
        %v1126 = vadd.f32 %v1052, %v1125
        %v1127 = vpop.f32.mrb[0].mxu0
        %1128 = vdwg.mxu0
        %1129 = vmatprep.subr.mxu0 0.0
        %v1130 = vand.u32 %v825, 4294901760
        %v1131 = vsub.f32 %v825, %v1130
        %v1132 = vand.u32 %v1131, 4294901760
        %1133 = vmatpush1.msra.mxu0 %v1132
        %1134 = vmatprep.subr.mxu0 0.0
        %1135 = vmatpush1.msra.mxu0 0.0
        %1136 = vmatprep.subr.mxu0 0.0
        %1137 = vmatpush1.msra.mxu0 0.0
        %1138 = vmatprep.subr.mxu0 0.0
        %1139 = vmatpush1.msra.mxu0 0.0
        %1140 = vmatprep.subr.mxu0 0.0
        %1141 = vmatpush1.msra.mxu0 0.0
        %1142 = vmatprep.subr.mxu0 0.0
        %1143 = vmatpush1.msra.mxu0 0.0
        %1144 = vmatprep.subr.mxu0 0.0
        %1145 = vmatpush1.msra.mxu0 0.0
        %1146 = vmatprep.subr.mxu0 0.0
        %1147 = vmatpush1.msra.mxu0 0.0
        %1148 = vmatprep.subr.mxu0 0.0
        %1149 = vmatpush1.msra.mxu0 0.0
        %1150 = vmatprep.subr.mxu0 0.0
        %1151 = vmatpush1.msra.mxu0 0.0
        %1152 = vmatprep.subr.mxu0 0.0
        %1153 = vmatpush1.msra.mxu0 0.0
        %1154 = vmatprep.subr.mxu0 0.0
        %1155 = vmatpush1.msra.mxu0 0.0
        %1156 = vmatprep.subr.mxu0 0.0
        %1157 = vmatpush1.msra.mxu0 0.0
        %1158 = vmatprep.subr.mxu0 0.0
        %1159 = vmatpush1.msra.mxu0 0.0
        %1160 = vmatprep.subr.mxu0 0.0
        %1161 = vmatpush1.msra.mxu0 0.0
        %1162 = vmatprep.subr.mxu0 0.0
        %1163 = vmatpush1.msra.mxu0 0.0
        %1164 = vmatprep.subr.mxu0 0.0
        %1165 = vmatpush1.msra.mxu0 0.0
        %1166 = vmatprep.subr.mxu0 0.0
        %1167 = vmatpush1.msra.mxu0 0.0
        %1168 = vmatprep.subr.mxu0 0.0
        %1169 = vmatpush1.msra.mxu0 0.0
        %1170 = vmatprep.subr.mxu0 0.0
        %1171 = vmatpush1.msra.mxu0 0.0
        %1172 = vmatprep.subr.mxu0 0.0
        %1173 = vmatpush1.msra.mxu0 0.0
        %1174 = vmatprep.subr.mxu0 0.0
        %1175 = vmatpush1.msra.mxu0 0.0
        %1176 = vmatprep.subr.mxu0 0.0
        %1177 = vmatpush1.msra.mxu0 0.0
        %1178 = vmatprep.subr.mxu0 0.0
        %1179 = vmatpush1.msra.mxu0 0.0
        %1180 = vmatprep.subr.mxu0 0.0
        %1181 = vmatpush1.msra.mxu0 0.0
        %1182 = vmatprep.subr.mxu0 0.0
        %1183 = vmatpush1.msra.mxu0 0.0
        %1184 = vmatprep.subr.mxu0 0.0
        %1185 = vmatpush1.msra.mxu0 0.0
        %1186 = vmatprep.subr.mxu0 0.0
        %1187 = vmatpush1.msra.mxu0 0.0
        %1188 = vmatprep.subr.mxu0 0.0
        %1189 = vmatpush1.msra.mxu0 0.0
        %1190 = vmatprep.subr.mxu0 0.0
        %1191 = vmatpush1.msra.mxu0 0.0
        %1192 = vmatprep.subr.mxu0 0.0
        %1193 = vmatpush1.msra.mxu0 0.0
        %1194 = vmatprep.subr.mxu0 0.0
        %1195 = vmatpush1.msra.mxu0 0.0
        %1196 = vmatprep.mubr.f32.mxu0 0.0
        %v1197 = vand.u32 %v827, 4294901760
        %1198 = vmatmul.mubr.f32.gmra.mrb[0].mxu0 %v1197
        %v1199 = vpop.f32.mrb[0].mxu0
        %v1200 = vadd.f32 %v1126, %v1199
        %v1201 = vpop.f32.mrb[0].mxu0
        %1202 = vdwg.mxu0
        %1203 = vmatprep.subr.mxu0 0.0
        %v1204 = vand.u32 %v825, 4294901760
        %1205 = vmatpush1.msra.mxu0 %v1204
        %1206 = vmatprep.subr.mxu0 0.0
        %1207 = vmatpush1.msra.mxu0 0.0
        %1208 = vmatprep.subr.mxu0 0.0
        %1209 = vmatpush1.msra.mxu0 0.0
        %1210 = vmatprep.subr.mxu0 0.0
        %1211 = vmatpush1.msra.mxu0 0.0
        %1212 = vmatprep.subr.mxu0 0.0
        %1213 = vmatpush1.msra.mxu0 0.0
        %1214 = vmatprep.subr.mxu0 0.0
        %1215 = vmatpush1.msra.mxu0 0.0
        %1216 = vmatprep.subr.mxu0 0.0
        %1217 = vmatpush1.msra.mxu0 0.0
        %1218 = vmatprep.subr.mxu0 0.0
        %1219 = vmatpush1.msra.mxu0 0.0
        %1220 = vmatprep.subr.mxu0 0.0
        %1221 = vmatpush1.msra.mxu0 0.0
        %1222 = vmatprep.subr.mxu0 0.0
        %1223 = vmatpush1.msra.mxu0 0.0
        %1224 = vmatprep.subr.mxu0 0.0
        %1225 = vmatpush1.msra.mxu0 0.0
        %1226 = vmatprep.subr.mxu0 0.0
        %1227 = vmatpush1.msra.mxu0 0.0
        %1228 = vmatprep.subr.mxu0 0.0
        %1229 = vmatpush1.msra.mxu0 0.0
        %1230 = vmatprep.subr.mxu0 0.0
        %1231 = vmatpush1.msra.mxu0 0.0
        %1232 = vmatprep.subr.mxu0 0.0
        %1233 = vmatpush1.msra.mxu0 0.0
        %1234 = vmatprep.subr.mxu0 0.0
        %1235 = vmatpush1.msra.mxu0 0.0
        %1236 = vmatprep.subr.mxu0 0.0
        %1237 = vmatpush1.msra.mxu0 0.0
        %1238 = vmatprep.subr.mxu0 0.0
        %1239 = vmatpush1.msra.mxu0 0.0
        %1240 = vmatprep.subr.mxu0 0.0
        %1241 = vmatpush1.msra.mxu0 0.0
        %1242 = vmatprep.subr.mxu0 0.0
        %1243 = vmatpush1.msra.mxu0 0.0
        %1244 = vmatprep.subr.mxu0 0.0
        %1245 = vmatpush1.msra.mxu0 0.0
        %1246 = vmatprep.subr.mxu0 0.0
        %1247 = vmatpush1.msra.mxu0 0.0
        %1248 = vmatprep.subr.mxu0 0.0
        %1249 = vmatpush1.msra.mxu0 0.0
        %1250 = vmatprep.subr.mxu0 0.0
        %1251 = vmatpush1.msra.mxu0 0.0
        %1252 = vmatprep.subr.mxu0 0.0
        %1253 = vmatpush1.msra.mxu0 0.0
        %1254 = vmatprep.subr.mxu0 0.0
        %1255 = vmatpush1.msra.mxu0 0.0
        %1256 = vmatprep.subr.mxu0 0.0
        %1257 = vmatpush1.msra.mxu0 0.0
        %1258 = vmatprep.subr.mxu0 0.0
        %1259 = vmatpush1.msra.mxu0 0.0
        %1260 = vmatprep.subr.mxu0 0.0
        %1261 = vmatpush1.msra.mxu0 0.0
        %1262 = vmatprep.subr.mxu0 0.0
        %1263 = vmatpush1.msra.mxu0 0.0
        %1264 = vmatprep.subr.mxu0 0.0
        %1265 = vmatpush1.msra.mxu0 0.0
        %1266 = vmatprep.subr.mxu0 0.0
        %1267 = vmatpush1.msra.mxu0 0.0
        %1268 = vmatprep.mubr.f32.mxu0 0.0
        %v1269 = vand.u32 %v827, 4294901760
        %1270 = vmatmul.mubr.f32.gmra.mrb[0].mxu0 %v1269
        %v1271 = vpop.f32.mrb[0].mxu0
        %v1272 = vadd.f32 %v1200, %v1271
        %v1273 = vpop.f32.mrb[0].mxu0
        %1274 = vdwg.mxu0
        %v1275 = vadd.f32 %v338, %v1272
        %v1276 = vmul.f32 %v818, %v1275
        %v1277 = vrot.slane %v1276, 4
        %v1278 = vadd.f32 %v1276, %v1277
        %v1279 = vrot.slane %v1278, 2
        %v1280 = vadd.f32 %v1278, %v1279
        %v1281 = vrot.slane %v1280, 1
        %v1282 = vadd.f32 %v1280, %v1281
        %p1283 = scmp.gt.s32.totalorder %s334, 0
        %s1284 = scalar_select %p1283, 1, 0
        %v1285 = vstv %s1284
        %vm1286 = vcmp.eq.s32.totalorder %v1285, 1
        %vm1287 = vmand %vm1286, %vm341
        %v1288 = vsel %vm1287, %v1282, 0.0
        %v1289 = vadd.f32 %v336, %v1288
        %s1290 = sadd.s32 %s334, 1
        %s1291 = scalar_lea.vmem %s274, 8 [#allocation5]
        %v1292 = vld [vmem:[%s1291] sm:$0xff]
        %s1293 = scalar_lea.vmem %s283, 1 [#allocation8]
        %v1294 = vld [vmem:[%s1293] sm:$0x1]
        %v1295 = vstv %s1290
        %vm1296 = vcmp.lt.s32.totalorder %v1295, %v324
        %v1297 = vrot.slane %v811, 4
        %v1298 = vmax.f32 %v811, %v1297
        %v1299 = vrot.slane %v1298, 2
        %v1300 = vmax.f32 %v1298, %v1299
        %v1301 = vrot.slane %v1300, 1
        %v1302 = vmax.f32 %v1300, %v1301
        %v1303 = vsub.f32 %v811, %v1302
        %v1304 = vmul.f32 %v1303, 1.442695
        %v1305 = vpow.pop %v1304
        %1306 = vmatprep.subr.mxu0 0.0
        %v1307 = vand.u32 %v1305, 4294901760
        %1308 = vmatpush1.msra.mxu0 %v1307
        %1309 = vmatprep.subr.mxu0 0.0
        %1310 = vmatpush1.msra.mxu0 0.0
        %1311 = vmatprep.subr.mxu0 0.0
        %1312 = vmatpush1.msra.mxu0 0.0
        %1313 = vmatprep.subr.mxu0 0.0
        %1314 = vmatpush1.msra.mxu0 0.0
        %1315 = vmatprep.subr.mxu0 0.0
        %1316 = vmatpush1.msra.mxu0 0.0
        %1317 = vmatprep.subr.mxu0 0.0
        %1318 = vmatpush1.msra.mxu0 0.0
        %1319 = vmatprep.subr.mxu0 0.0
        %1320 = vmatpush1.msra.mxu0 0.0
        %1321 = vmatprep.subr.mxu0 0.0
        %1322 = vmatpush1.msra.mxu0 0.0
        %1323 = vmatprep.subr.mxu0 0.0
        %1324 = vmatpush1.msra.mxu0 0.0
        %1325 = vmatprep.subr.mxu0 0.0
        %1326 = vmatpush1.msra.mxu0 0.0
        %1327 = vmatprep.subr.mxu0 0.0
        %1328 = vmatpush1.msra.mxu0 0.0
        %1329 = vmatprep.subr.mxu0 0.0
        %1330 = vmatpush1.msra.mxu0 0.0
        %1331 = vmatprep.subr.mxu0 0.0
        %1332 = vmatpush1.msra.mxu0 0.0
        %1333 = vmatprep.subr.mxu0 0.0
        %1334 = vmatpush1.msra.mxu0 0.0
        %1335 = vmatprep.subr.mxu0 0.0
        %1336 = vmatpush1.msra.mxu0 0.0
        %1337 = vmatprep.subr.mxu0 0.0
        %1338 = vmatpush1.msra.mxu0 0.0
        %1339 = vmatprep.subr.mxu0 0.0
        %1340 = vmatpush1.msra.mxu0 0.0
        %1341 = vmatprep.subr.mxu0 0.0
        %1342 = vmatpush1.msra.mxu0 0.0
        %1343 = vmatprep.subr.mxu0 0.0
        %1344 = vmatpush1.msra.mxu0 0.0
        %1345 = vmatprep.subr.mxu0 0.0
        %1346 = vmatpush1.msra.mxu0 0.0
        %1347 = vmatprep.subr.mxu0 0.0
        %1348 = vmatpush1.msra.mxu0 0.0
        %1349 = vmatprep.subr.mxu0 0.0
        %1350 = vmatpush1.msra.mxu0 0.0
        %1351 = vmatprep.subr.mxu0 0.0
        %1352 = vmatpush1.msra.mxu0 0.0
        %1353 = vmatprep.subr.mxu0 0.0
        %1354 = vmatpush1.msra.mxu0 0.0
        %1355 = vmatprep.subr.mxu0 0.0
        %1356 = vmatpush1.msra.mxu0 0.0
        %1357 = vmatprep.subr.mxu0 0.0
        %1358 = vmatpush1.msra.mxu0 0.0
        %1359 = vmatprep.subr.mxu0 0.0
        %1360 = vmatpush1.msra.mxu0 0.0
        %1361 = vmatprep.subr.mxu0 0.0
        %1362 = vmatpush1.msra.mxu0 0.0
        %1363 = vmatprep.subr.mxu0 0.0
        %1364 = vmatpush1.msra.mxu0 0.0
        %1365 = vmatprep.subr.mxu0 0.0
        %1366 = vmatpush1.msra.mxu0 0.0
        %1367 = vmatprep.subr.mxu0 0.0
        %1368 = vmatpush1.msra.mxu0 0.0
        %1369 = vmatprep.subr.mxu0 0.0
        %1370 = vmatpush1.msra.mxu0 0.0
        %1371 = vmatprep.mubr.f32.mxu0 0.0
        %v1372 = vand.u32 %v353, 4294901760
        %v1373 = vsub.f32 %v353, %v1372
        %v1374 = vand.u32 %v1373, 4294901760
        %v1375 = vsub.f32 %v1373, %v1374
        %v1376 = vand.u32 %v1375, 4294901760
        %1377 = vmatmul.mubr.f32.gmra.mrb[0].mxu0 %v1376
        %v1378 = vpop.f32.mrb[0].mxu0
        %v1379 = vadd.f32 0.0, %v1378
        %v1380 = vpop.f32.mrb[0].mxu0
        %1381 = vdwg.mxu0
        %1382 = vmatprep.subr.mxu0 0.0
        %v1383 = vand.u32 %v1305, 4294901760
        %v1384 = vsub.f32 %v1305, %v1383
        %v1385 = vand.u32 %v1384, 4294901760
        %v1386 = vsub.f32 %v1384, %v1385
        %v1387 = vand.u32 %v1386, 4294901760
        %1388 = vmatpush1.msra.mxu0 %v1387
        %1389 = vmatprep.subr.mxu0 0.0
        %1390 = vmatpush1.msra.mxu0 0.0
        %1391 = vmatprep.subr.mxu0 0.0
        %1392 = vmatpush1.msra.mxu0 0.0
        %1393 = vmatprep.subr.mxu0 0.0
        %1394 = vmatpush1.msra.mxu0 0.0
        %1395 = vmatprep.subr.mxu0 0.0
        %1396 = vmatpush1.msra.mxu0 0.0
        %1397 = vmatprep.subr.mxu0 0.0
        %1398 = vmatpush1.msra.mxu0 0.0
        %1399 = vmatprep.subr.mxu0 0.0
        %1400 = vmatpush1.msra.mxu0 0.0
        %1401 = vmatprep.subr.mxu0 0.0
        %1402 = vmatpush1.msra.mxu0 0.0
        %1403 = vmatprep.subr.mxu0 0.0
        %1404 = vmatpush1.msra.mxu0 0.0
        %1405 = vmatprep.subr.mxu0 0.0
        %1406 = vmatpush1.msra.mxu0 0.0
        %1407 = vmatprep.subr.mxu0 0.0
        %1408 = vmatpush1.msra.mxu0 0.0
        %1409 = vmatprep.subr.mxu0 0.0
        %1410 = vmatpush1.msra.mxu0 0.0
        %1411 = vmatprep.subr.mxu0 0.0
        %1412 = vmatpush1.msra.mxu0 0.0
        %1413 = vmatprep.subr.mxu0 0.0
        %1414 = vmatpush1.msra.mxu0 0.0
        %1415 = vmatprep.subr.mxu0 0.0
        %1416 = vmatpush1.msra.mxu0 0.0
        %1417 = vmatprep.subr.mxu0 0.0
        %1418 = vmatpush1.msra.mxu0 0.0
        %1419 = vmatprep.subr.mxu0 0.0
        %1420 = vmatpush1.msra.mxu0 0.0
        %1421 = vmatprep.subr.mxu0 0.0
        %1422 = vmatpush1.msra.mxu0 0.0
        %1423 = vmatprep.subr.mxu0 0.0
        %1424 = vmatpush1.msra.mxu0 0.0
        %1425 = vmatprep.subr.mxu0 0.0
        %1426 = vmatpush1.msra.mxu0 0.0
        %1427 = vmatprep.subr.mxu0 0.0
        %1428 = vmatpush1.msra.mxu0 0.0
        %1429 = vmatprep.subr.mxu0 0.0
        %1430 = vmatpush1.msra.mxu0 0.0
        %1431 = vmatprep.subr.mxu0 0.0
        %1432 = vmatpush1.msra.mxu0 0.0
        %1433 = vmatprep.subr.mxu0 0.0
        %1434 = vmatpush1.msra.mxu0 0.0
        %1435 = vmatprep.subr.mxu0 0.0
        %1436 = vmatpush1.msra.mxu0 0.0
        %1437 = vmatprep.subr.mxu0 0.0
        %1438 = vmatpush1.msra.mxu0 0.0
        %1439 = vmatprep.subr.mxu0 0.0
        %1440 = vmatpush1.msra.mxu0 0.0
        %1441 = vmatprep.subr.mxu0 0.0
        %1442 = vmatpush1.msra.mxu0 0.0
        %1443 = vmatprep.subr.mxu0 0.0
        %1444 = vmatpush1.msra.mxu0 0.0
        %1445 = vmatprep.subr.mxu0 0.0
        %1446 = vmatpush1.msra.mxu0 0.0
        %1447 = vmatprep.subr.mxu0 0.0
        %1448 = vmatpush1.msra.mxu0 0.0
        %1449 = vmatprep.subr.mxu0 0.0
        %1450 = vmatpush1.msra.mxu0 0.0
        %1451 = vmatprep.mubr.f32.mxu0 0.0
        %v1452 = vand.u32 %v353, 4294901760
        %1453 = vmatmul.mubr.f32.gmra.mrb[0].mxu0 %v1452
        %v1454 = vpop.f32.mrb[0].mxu0
        %v1455 = vadd.f32 %v1379, %v1454
        %v1456 = vpop.f32.mrb[0].mxu0
        %1457 = vdwg.mxu0
        %1458 = vmatprep.subr.mxu0 0.0
        %v1459 = vand.u32 %v1305, 4294901760
        %v1460 = vsub.f32 %v1305, %v1459
        %1461 = vmatpush1.msra.mxu0 %v1460
        %1462 = vmatprep.subr.mxu0 0.0
        %1463 = vmatpush1.msra.mxu0 0.0
        %1464 = vmatprep.subr.mxu0 0.0
        %1465 = vmatpush1.msra.mxu0 0.0
        %1466 = vmatprep.subr.mxu0 0.0
        %1467 = vmatpush1.msra.mxu0 0.0
        %1468 = vmatprep.subr.mxu0 0.0
        %1469 = vmatpush1.msra.mxu0 0.0
        %1470 = vmatprep.subr.mxu0 0.0
        %1471 = vmatpush1.msra.mxu0 0.0
        %1472 = vmatprep.subr.mxu0 0.0
        %1473 = vmatpush1.msra.mxu0 0.0
        %1474 = vmatprep.subr.mxu0 0.0
        %1475 = vmatpush1.msra.mxu0 0.0
        %1476 = vmatprep.subr.mxu0 0.0
        %1477 = vmatpush1.msra.mxu0 0.0
        %1478 = vmatprep.subr.mxu0 0.0
        %1479 = vmatpush1.msra.mxu0 0.0
        %1480 = vmatprep.subr.mxu0 0.0
        %1481 = vmatpush1.msra.mxu0 0.0
        %1482 = vmatprep.subr.mxu0 0.0
        %1483 = vmatpush1.msra.mxu0 0.0
        %1484 = vmatprep.subr.mxu0 0.0
        %1485 = vmatpush1.msra.mxu0 0.0
        %1486 = vmatprep.subr.mxu0 0.0
        %1487 = vmatpush1.msra.mxu0 0.0
        %1488 = vmatprep.subr.mxu0 0.0
        %1489 = vmatpush1.msra.mxu0 0.0
        %1490 = vmatprep.subr.mxu0 0.0
        %1491 = vmatpush1.msra.mxu0 0.0
        %1492 = vmatprep.subr.mxu0 0.0
        %1493 = vmatpush1.msra.mxu0 0.0
        %1494 = vmatprep.subr.mxu0 0.0
        %1495 = vmatpush1.msra.mxu0 0.0
        %1496 = vmatprep.subr.mxu0 0.0
        %1497 = vmatpush1.msra.mxu0 0.0
        %1498 = vmatprep.subr.mxu0 0.0
        %1499 = vmatpush1.msra.mxu0 0.0
        %1500 = vmatprep.subr.mxu0 0.0
        %1501 = vmatpush1.msra.mxu0 0.0
        %1502 = vmatprep.subr.mxu0 0.0
        %1503 = vmatpush1.msra.mxu0 0.0
        %1504 = vmatprep.subr.mxu0 0.0
        %1505 = vmatpush1.msra.mxu0 0.0
        %1506 = vmatprep.subr.mxu0 0.0
        %1507 = vmatpush1.msra.mxu0 0.0
        %1508 = vmatprep.subr.mxu0 0.0
        %1509 = vmatpush1.msra.mxu0 0.0
        %1510 = vmatprep.subr.mxu0 0.0
        %1511 = vmatpush1.msra.mxu0 0.0
        %1512 = vmatprep.subr.mxu0 0.0
        %1513 = vmatpush1.msra.mxu0 0.0
        %1514 = vmatprep.subr.mxu0 0.0
        %1515 = vmatpush1.msra.mxu0 0.0
        %1516 = vmatprep.subr.mxu0 0.0
        %1517 = vmatpush1.msra.mxu0 0.0
        %1518 = vmatprep.subr.mxu0 0.0
        %1519 = vmatpush1.msra.mxu0 0.0
        %1520 = vmatprep.subr.mxu0 0.0
        %1521 = vmatpush1.msra.mxu0 0.0
        %1522 = vmatprep.subr.mxu0 0.0
        %1523 = vmatpush1.msra.mxu0 0.0
        %1524 = vmatprep.mubr.f32.mxu0 0.0
        %v1525 = vand.u32 %v353, 4294901760
        %v1526 = vsub.f32 %v353, %v1525
        %1527 = vmatmul.mubr.f32.gmra.mrb[0].mxu0 %v1526
        %v1528 = vpop.f32.mrb[0].mxu0
        %v1529 = vadd.f32 %v1455, %v1528
        %v1530 = vpop.f32.mrb[0].mxu0
        %1531 = vdwg.mxu0
        %1532 = vmatprep.subr.mxu0 0.0
        %v1533 = vand.u32 %v1305, 4294901760
        %1534 = vmatpush1.msra.mxu0 %v1533
        %1535 = vmatprep.subr.mxu0 0.0
        %1536 = vmatpush1.msra.mxu0 0.0
        %1537 = vmatprep.subr.mxu0 0.0
        %1538 = vmatpush1.msra.mxu0 0.0
        %1539 = vmatprep.subr.mxu0 0.0
        %1540 = vmatpush1.msra.mxu0 0.0
        %1541 = vmatprep.subr.mxu0 0.0
        %1542 = vmatpush1.msra.mxu0 0.0
        %1543 = vmatprep.subr.mxu0 0.0
        %1544 = vmatpush1.msra.mxu0 0.0
        %1545 = vmatprep.subr.mxu0 0.0
        %1546 = vmatpush1.msra.mxu0 0.0
        %1547 = vmatprep.subr.mxu0 0.0
        %1548 = vmatpush1.msra.mxu0 0.0
        %1549 = vmatprep.subr.mxu0 0.0
        %1550 = vmatpush1.msra.mxu0 0.0
        %1551 = vmatprep.subr.mxu0 0.0
        %1552 = vmatpush1.msra.mxu0 0.0
        %1553 = vmatprep.subr.mxu0 0.0
        %1554 = vmatpush1.msra.mxu0 0.0
        %1555 = vmatprep.subr.mxu0 0.0
        %1556 = vmatpush1.msra.mxu0 0.0
        %1557 = vmatprep.subr.mxu0 0.0
        %1558 = vmatpush1.msra.mxu0 0.0
        %1559 = vmatprep.subr.mxu0 0.0
        %1560 = vmatpush1.msra.mxu0 0.0
        %1561 = vmatprep.subr.mxu0 0.0
        %1562 = vmatpush1.msra.mxu0 0.0
        %1563 = vmatprep.subr.mxu0 0.0
        %1564 = vmatpush1.msra.mxu0 0.0
        %1565 = vmatprep.subr.mxu0 0.0
        %1566 = vmatpush1.msra.mxu0 0.0
        %1567 = vmatprep.subr.mxu0 0.0
        %1568 = vmatpush1.msra.mxu0 0.0
        %1569 = vmatprep.subr.mxu0 0.0
        %1570 = vmatpush1.msra.mxu0 0.0
        %1571 = vmatprep.subr.mxu0 0.0
        %1572 = vmatpush1.msra.mxu0 0.0
        %1573 = vmatprep.subr.mxu0 0.0
        %1574 = vmatpush1.msra.mxu0 0.0
        %1575 = vmatprep.subr.mxu0 0.0
        %1576 = vmatpush1.msra.mxu0 0.0
        %1577 = vmatprep.subr.mxu0 0.0
        %1578 = vmatpush1.msra.mxu0 0.0
        %1579 = vmatprep.subr.mxu0 0.0
        %1580 = vmatpush1.msra.mxu0 0.0
        %1581 = vmatprep.subr.mxu0 0.0
        %1582 = vmatpush1.msra.mxu0 0.0
        %1583 = vmatprep.subr.mxu0 0.0
        %1584 = vmatpush1.msra.mxu0 0.0
        %1585 = vmatprep.subr.mxu0 0.0
        %1586 = vmatpush1.msra.mxu0 0.0
        %1587 = vmatprep.subr.mxu0 0.0
        %1588 = vmatpush1.msra.mxu0 0.0
        %1589 = vmatprep.subr.mxu0 0.0
        %1590 = vmatpush1.msra.mxu0 0.0
        %1591 = vmatprep.subr.mxu0 0.0
        %1592 = vmatpush1.msra.mxu0 0.0
        %1593 = vmatprep.subr.mxu0 0.0
        %1594 = vmatpush1.msra.mxu0 0.0
        %1595 = vmatprep.subr.mxu0 0.0
        %1596 = vmatpush1.msra.mxu0 0.0
        %1597 = vmatprep.mubr.f32.mxu0 0.0
        %v1598 = vand.u32 %v353, 4294901760
        %v1599 = vsub.f32 %v353, %v1598
        %v1600 = vand.u32 %v1599, 4294901760
        %1601 = vmatmul.mubr.f32.gmra.mrb[0].mxu0 %v1600
        %v1602 = vpop.f32.mrb[0].mxu0
        %v1603 = vadd.f32 %v1529, %v1602
        %v1604 = vpop.f32.mrb[0].mxu0
        %1605 = vdwg.mxu0
        %1606 = vmatprep.subr.mxu0 0.0
        %v1607 = vand.u32 %v1305, 4294901760
        %v1608 = vsub.f32 %v1305, %v1607
        %v1609 = vand.u32 %v1608, 4294901760
        %1610 = vmatpush1.msra.mxu0 %v1609
        %1611 = vmatprep.subr.mxu0 0.0
        %1612 = vmatpush1.msra.mxu0 0.0
        %1613 = vmatprep.subr.mxu0 0.0
        %1614 = vmatpush1.msra.mxu0 0.0
        %1615 = vmatprep.subr.mxu0 0.0
        %1616 = vmatpush1.msra.mxu0 0.0
        %1617 = vmatprep.subr.mxu0 0.0
        %1618 = vmatpush1.msra.mxu0 0.0
        %1619 = vmatprep.subr.mxu0 0.0
        %1620 = vmatpush1.msra.mxu0 0.0
        %1621 = vmatprep.subr.mxu0 0.0
        %1622 = vmatpush1.msra.mxu0 0.0
        %1623 = vmatprep.subr.mxu0 0.0
        %1624 = vmatpush1.msra.mxu0 0.0
        %1625 = vmatprep.subr.mxu0 0.0
        %1626 = vmatpush1.msra.mxu0 0.0
        %1627 = vmatprep.subr.mxu0 0.0
        %1628 = vmatpush1.msra.mxu0 0.0
        %1629 = vmatprep.subr.mxu0 0.0
        %1630 = vmatpush1.msra.mxu0 0.0
        %1631 = vmatprep.subr.mxu0 0.0
        %1632 = vmatpush1.msra.mxu0 0.0
        %1633 = vmatprep.subr.mxu0 0.0
        %1634 = vmatpush1.msra.mxu0 0.0
        %1635 = vmatprep.subr.mxu0 0.0
        %1636 = vmatpush1.msra.mxu0 0.0
        %1637 = vmatprep.subr.mxu0 0.0
        %1638 = vmatpush1.msra.mxu0 0.0
        %1639 = vmatprep.subr.mxu0 0.0
        %1640 = vmatpush1.msra.mxu0 0.0
        %1641 = vmatprep.subr.mxu0 0.0
        %1642 = vmatpush1.msra.mxu0 0.0
        %1643 = vmatprep.subr.mxu0 0.0
        %1644 = vmatpush1.msra.mxu0 0.0
        %1645 = vmatprep.subr.mxu0 0.0
        %1646 = vmatpush1.msra.mxu0 0.0
        %1647 = vmatprep.subr.mxu0 0.0
        %1648 = vmatpush1.msra.mxu0 0.0
        %1649 = vmatprep.subr.mxu0 0.0
        %1650 = vmatpush1.msra.mxu0 0.0
        %1651 = vmatprep.subr.mxu0 0.0
        %1652 = vmatpush1.msra.mxu0 0.0
        %1653 = vmatprep.subr.mxu0 0.0
        %1654 = vmatpush1.msra.mxu0 0.0
        %1655 = vmatprep.subr.mxu0 0.0
        %1656 = vmatpush1.msra.mxu0 0.0
        %1657 = vmatprep.subr.mxu0 0.0
        %1658 = vmatpush1.msra.mxu0 0.0
        %1659 = vmatprep.subr.mxu0 0.0
        %1660 = vmatpush1.msra.mxu0 0.0
        %1661 = vmatprep.subr.mxu0 0.0
        %1662 = vmatpush1.msra.mxu0 0.0
        %1663 = vmatprep.subr.mxu0 0.0
        %1664 = vmatpush1.msra.mxu0 0.0
        %1665 = vmatprep.subr.mxu0 0.0
        %1666 = vmatpush1.msra.mxu0 0.0
        %1667 = vmatprep.subr.mxu0 0.0
        %1668 = vmatpush1.msra.mxu0 0.0
        %1669 = vmatprep.subr.mxu0 0.0
        %1670 = vmatpush1.msra.mxu0 0.0
        %1671 = vmatprep.subr.mxu0 0.0
        %1672 = vmatpush1.msra.mxu0 0.0
        %1673 = vmatprep.mubr.f32.mxu0 0.0
        %v1674 = vand.u32 %v353, 4294901760
        %1675 = vmatmul.mubr.f32.gmra.mrb[0].mxu0 %v1674
        %v1676 = vpop.f32.mrb[0].mxu0
        %v1677 = vadd.f32 %v1603, %v1676
        %v1678 = vpop.f32.mrb[0].mxu0
        %1679 = vdwg.mxu0
        %1680 = vmatprep.subr.mxu0 0.0
        %v1681 = vand.u32 %v1305, 4294901760
        %1682 = vmatpush1.msra.mxu0 %v1681
        %1683 = vmatprep.subr.mxu0 0.0
        %1684 = vmatpush1.msra.mxu0 0.0
        %1685 = vmatprep.subr.mxu0 0.0
        %1686 = vmatpush1.msra.mxu0 0.0
        %1687 = vmatprep.subr.mxu0 0.0
        %1688 = vmatpush1.msra.mxu0 0.0
        %1689 = vmatprep.subr.mxu0 0.0
        %1690 = vmatpush1.msra.mxu0 0.0
        %1691 = vmatprep.subr.mxu0 0.0
        %1692 = vmatpush1.msra.mxu0 0.0
        %1693 = vmatprep.subr.mxu0 0.0
        %1694 = vmatpush1.msra.mxu0 0.0
        %1695 = vmatprep.subr.mxu0 0.0
        %1696 = vmatpush1.msra.mxu0 0.0
        %1697 = vmatprep.subr.mxu0 0.0
        %1698 = vmatpush1.msra.mxu0 0.0
        %1699 = vmatprep.subr.mxu0 0.0
        %1700 = vmatpush1.msra.mxu0 0.0
        %1701 = vmatprep.subr.mxu0 0.0
        %1702 = vmatpush1.msra.mxu0 0.0
        %1703 = vmatprep.subr.mxu0 0.0
        %1704 = vmatpush1.msra.mxu0 0.0
        %1705 = vmatprep.subr.mxu0 0.0
        %1706 = vmatpush1.msra.mxu0 0.0
        %1707 = vmatprep.subr.mxu0 0.0
        %1708 = vmatpush1.msra.mxu0 0.0
        %1709 = vmatprep.subr.mxu0 0.0
        %1710 = vmatpush1.msra.mxu0 0.0
        %1711 = vmatprep.subr.mxu0 0.0
        %1712 = vmatpush1.msra.mxu0 0.0
        %1713 = vmatprep.subr.mxu0 0.0
        %1714 = vmatpush1.msra.mxu0 0.0
        %1715 = vmatprep.subr.mxu0 0.0
        %1716 = vmatpush1.msra.mxu0 0.0
        %1717 = vmatprep.subr.mxu0 0.0
        %1718 = vmatpush1.msra.mxu0 0.0
        %1719 = vmatprep.subr.mxu0 0.0
        %1720 = vmatpush1.msra.mxu0 0.0
        %1721 = vmatprep.subr.mxu0 0.0
        %1722 = vmatpush1.msra.mxu0 0.0
        %1723 = vmatprep.subr.mxu0 0.0
        %1724 = vmatpush1.msra.mxu0 0.0
        %1725 = vmatprep.subr.mxu0 0.0
        %1726 = vmatpush1.msra.mxu0 0.0
        %1727 = vmatprep.subr.mxu0 0.0
        %1728 = vmatpush1.msra.mxu0 0.0
        %1729 = vmatprep.subr.mxu0 0.0
        %1730 = vmatpush1.msra.mxu0 0.0
        %1731 = vmatprep.subr.mxu0 0.0
        %1732 = vmatpush1.msra.mxu0 0.0
        %1733 = vmatprep.subr.mxu0 0.0
        %1734 = vmatpush1.msra.mxu0 0.0
        %1735 = vmatprep.subr.mxu0 0.0
        %1736 = vmatpush1.msra.mxu0 0.0
        %1737 = vmatprep.subr.mxu0 0.0
        %1738 = vmatpush1.msra.mxu0 0.0
        %1739 = vmatprep.subr.mxu0 0.0
        %1740 = vmatpush1.msra.mxu0 0.0
        %1741 = vmatprep.subr.mxu0 0.0
        %1742 = vmatpush1.msra.mxu0 0.0
        %1743 = vmatprep.subr.mxu0 0.0
        %1744 = vmatpush1.msra.mxu0 0.0
        %1745 = vmatprep.mubr.f32.mxu0 0.0
        %v1746 = vand.u32 %v353, 4294901760
        %1747 = vmatmul.mubr.f32.gmra.mrb[0].mxu0 %v1746
        %v1748 = vpop.f32.mrb[0].mxu0
        %v1749 = vadd.f32 %v1677, %v1748
        %v1750 = vpop.f32.mrb[0].mxu0
        %1751 = vdwg.mxu0
        %v1752 = vadd.f32 %v1292, %v1302
        %v1753 = vlog2.pop %v1749
        %v1754 = vmul.f32 %v1753, 0.6931472
        %v1755 = vadd.f32 %v1752, %v1754
        %v1756 = vsel %vm1296, 1, 0
        %v1757 = vlaneseq
        %v1758 = vshrl.u32 %v1757, 7
        %v1759 = vsub.s32 0, %v1758
        %v1760 = vrot.slane %v1756, %v1759
        %vm1761 = vcmp.eq.s32.totalorder %v1760, 1
        %v1762 = vsel %vm1761, %v1755, %v811
        %v1763 = vlaneseq
        %v1764 = vshrl.u32 %v1763, 7
        %v1765 = vsub.s32 0, %v1764
        %v1766 = vrot.slane %v1294, %v1765
        %vm1767 = vcmp.eq.s32.totalorder %v326, %v1766
        %v1768 = vsel %vm1767, 1, 0
        %v1769 = vcvt.s32.f32 %v1768
        %1770 = vmatprep.subr.mxu0 0.0
        %v1771 = vand.u32 %v818, 4294901760
        %1772 = vmatpush1.msra.mxu0 %v1771
        %1773 = vmatprep.subr.mxu0 0.0
        %1774 = vmatpush1.msra.mxu0 0.0
        %1775 = vmatprep.subr.mxu0 0.0
        %1776 = vmatpush1.msra.mxu0 0.0
        %1777 = vmatprep.subr.mxu0 0.0
        %1778 = vmatpush1.msra.mxu0 0.0
        %1779 = vmatprep.subr.mxu0 0.0
        %1780 = vmatpush1.msra.mxu0 0.0
        %1781 = vmatprep.subr.mxu0 0.0
        %1782 = vmatpush1.msra.mxu0 0.0
        %1783 = vmatprep.subr.mxu0 0.0
        %1784 = vmatpush1.msra.mxu0 0.0
        %1785 = vmatprep.subr.mxu0 0.0
        %1786 = vmatpush1.msra.mxu0 0.0
        %1787 = vmatprep.subr.mxu0 0.0
        %1788 = vmatpush1.msra.mxu0 0.0
        %1789 = vmatprep.subr.mxu0 0.0
        %1790 = vmatpush1.msra.mxu0 0.0
        %1791 = vmatprep.subr.mxu0 0.0
        %1792 = vmatpush1.msra.mxu0 0.0
        %1793 = vmatprep.subr.mxu0 0.0
        %1794 = vmatpush1.msra.mxu0 0.0
        %1795 = vmatprep.subr.mxu0 0.0
        %1796 = vmatpush1.msra.mxu0 0.0
        %1797 = vmatprep.subr.mxu0 0.0
        %1798 = vmatpush1.msra.mxu0 0.0
        %1799 = vmatprep.subr.mxu0 0.0
        %1800 = vmatpush1.msra.mxu0 0.0
        %1801 = vmatprep.subr.mxu0 0.0
        %1802 = vmatpush1.msra.mxu0 0.0
        %1803 = vmatprep.subr.mxu0 0.0
        %1804 = vmatpush1.msra.mxu0 0.0
        %1805 = vmatprep.subr.mxu0 0.0
        %1806 = vmatpush1.msra.mxu0 0.0
        %1807 = vmatprep.subr.mxu0 0.0
        %1808 = vmatpush1.msra.mxu0 0.0
        %1809 = vmatprep.subr.mxu0 0.0
        %1810 = vmatpush1.msra.mxu0 0.0
        %1811 = vmatprep.subr.mxu0 0.0
        %1812 = vmatpush1.msra.mxu0 0.0
        %1813 = vmatprep.subr.mxu0 0.0
        %1814 = vmatpush1.msra.mxu0 0.0
        %1815 = vmatprep.subr.mxu0 0.0
        %1816 = vmatpush1.msra.mxu0 0.0
        %1817 = vmatprep.subr.mxu0 0.0
        %1818 = vmatpush1.msra.mxu0 0.0
        %1819 = vmatprep.subr.mxu0 0.0
        %1820 = vmatpush1.msra.mxu0 0.0
        %1821 = vmatprep.subr.mxu0 0.0
        %1822 = vmatpush1.msra.mxu0 0.0
        %1823 = vmatprep.subr.mxu0 0.0
        %1824 = vmatpush1.msra.mxu0 0.0
        %1825 = vmatprep.subr.mxu0 0.0
        %1826 = vmatpush1.msra.mxu0 0.0
        %1827 = vmatprep.subr.mxu0 0.0
        %1828 = vmatpush1.msra.mxu0 0.0
        %1829 = vmatprep.subr.mxu0 0.0
        %1830 = vmatpush1.msra.mxu0 0.0
        %1831 = vmatprep.subr.mxu0 0.0
        %1832 = vmatpush1.msra.mxu0 0.0
        %1833 = vmatprep.subr.mxu0 0.0
        %1834 = vmatpush1.msra.mxu0 0.0
        %1835 = vmatprep.mubr.f32.mxu0 0.0
        %v1836 = vand.u32 %v827, 4294901760
        %v1837 = vsub.f32 %v827, %v1836
        %v1838 = vand.u32 %v1837, 4294901760
        %v1839 = vsub.f32 %v1837, %v1838
        %v1840 = vand.u32 %v1839, 4294901760
        %1841 = vmatmul.mubr.f32.gmra.mrb[0].mxu0 %v1840
        %v1842 = vpop.f32.mrb[0].mxu0
        %v1843 = vadd.f32 0.0, %v1842
        %v1844 = vpop.f32.mrb[0].mxu0
        %1845 = vdwg.mxu0
        %1846 = vmatprep.subr.mxu0 0.0
        %v1847 = vand.u32 %v818, 4294901760
        %v1848 = vsub.f32 %v818, %v1847
        %v1849 = vand.u32 %v1848, 4294901760
        %v1850 = vsub.f32 %v1848, %v1849
        %v1851 = vand.u32 %v1850, 4294901760
        %1852 = vmatpush1.msra.mxu0 %v1851
        %1853 = vmatprep.subr.mxu0 0.0
        %1854 = vmatpush1.msra.mxu0 0.0
        %1855 = vmatprep.subr.mxu0 0.0
        %1856 = vmatpush1.msra.mxu0 0.0
        %1857 = vmatprep.subr.mxu0 0.0
        %1858 = vmatpush1.msra.mxu0 0.0
        %1859 = vmatprep.subr.mxu0 0.0
        %1860 = vmatpush1.msra.mxu0 0.0
        %1861 = vmatprep.subr.mxu0 0.0
        %1862 = vmatpush1.msra.mxu0 0.0
        %1863 = vmatprep.subr.mxu0 0.0
        %1864 = vmatpush1.msra.mxu0 0.0
        %1865 = vmatprep.subr.mxu0 0.0
        %1866 = vmatpush1.msra.mxu0 0.0
        %1867 = vmatprep.subr.mxu0 0.0
        %1868 = vmatpush1.msra.mxu0 0.0
        %1869 = vmatprep.subr.mxu0 0.0
        %1870 = vmatpush1.msra.mxu0 0.0
        %1871 = vmatprep.subr.mxu0 0.0
        %1872 = vmatpush1.msra.mxu0 0.0
        %1873 = vmatprep.subr.mxu0 0.0
        %1874 = vmatpush1.msra.mxu0 0.0
        %1875 = vmatprep.subr.mxu0 0.0
        %1876 = vmatpush1.msra.mxu0 0.0
        %1877 = vmatprep.subr.mxu0 0.0
        %1878 = vmatpush1.msra.mxu0 0.0
        %1879 = vmatprep.subr.mxu0 0.0
        %1880 = vmatpush1.msra.mxu0 0.0
        %1881 = vmatprep.subr.mxu0 0.0
        %1882 = vmatpush1.msra.mxu0 0.0
        %1883 = vmatprep.subr.mxu0 0.0
        %1884 = vmatpush1.msra.mxu0 0.0
        %1885 = vmatprep.subr.mxu0 0.0
        %1886 = vmatpush1.msra.mxu0 0.0
        %1887 = vmatprep.subr.mxu0 0.0
        %1888 = vmatpush1.msra.mxu0 0.0
        %1889 = vmatprep.subr.mxu0 0.0
        %1890 = vmatpush1.msra.mxu0 0.0
        %1891 = vmatprep.subr.mxu0 0.0
        %1892 = vmatpush1.msra.mxu0 0.0
        %1893 = vmatprep.subr.mxu0 0.0
        %1894 = vmatpush1.msra.mxu0 0.0
        %1895 = vmatprep.subr.mxu0 0.0
        %1896 = vmatpush1.msra.mxu0 0.0
        %1897 = vmatprep.subr.mxu0 0.0
        %1898 = vmatpush1.msra.mxu0 0.0
        %1899 = vmatprep.subr.mxu0 0.0
        %1900 = vmatpush1.msra.mxu0 0.0
        %1901 = vmatprep.subr.mxu0 0.0
        %1902 = vmatpush1.msra.mxu0 0.0
        %1903 = vmatprep.subr.mxu0 0.0
        %1904 = vmatpush1.msra.mxu0 0.0
        %1905 = vmatprep.subr.mxu0 0.0
        %1906 = vmatpush1.msra.mxu0 0.0
        %1907 = vmatprep.subr.mxu0 0.0
        %1908 = vmatpush1.msra.mxu0 0.0
        %1909 = vmatprep.subr.mxu0 0.0
        %1910 = vmatpush1.msra.mxu0 0.0
        %1911 = vmatprep.subr.mxu0 0.0
        %1912 = vmatpush1.msra.mxu0 0.0
        %1913 = vmatprep.subr.mxu0 0.0
        %1914 = vmatpush1.msra.mxu0 0.0
        %1915 = vmatprep.mubr.f32.mxu0 0.0
        %v1916 = vand.u32 %v827, 4294901760
        %1917 = vmatmul.mubr.f32.gmra.mrb[0].mxu0 %v1916
        %v1918 = vpop.f32.mrb[0].mxu0
        %v1919 = vadd.f32 %v1843, %v1918
        %v1920 = vpop.f32.mrb[0].mxu0
        %1921 = vdwg.mxu0
        %1922 = vmatprep.subr.mxu0 0.0
        %v1923 = vand.u32 %v818, 4294901760
        %v1924 = vsub.f32 %v818, %v1923
        %1925 = vmatpush1.msra.mxu0 %v1924
        %1926 = vmatprep.subr.mxu0 0.0
        %1927 = vmatpush1.msra.mxu0 0.0
        %1928 = vmatprep.subr.mxu0 0.0
        %1929 = vmatpush1.msra.mxu0 0.0
        %1930 = vmatprep.subr.mxu0 0.0
        %1931 = vmatpush1.msra.mxu0 0.0
        %1932 = vmatprep.subr.mxu0 0.0
        %1933 = vmatpush1.msra.mxu0 0.0
        %1934 = vmatprep.subr.mxu0 0.0
        %1935 = vmatpush1.msra.mxu0 0.0
        %1936 = vmatprep.subr.mxu0 0.0
        %1937 = vmatpush1.msra.mxu0 0.0
        %1938 = vmatprep.subr.mxu0 0.0
        %1939 = vmatpush1.msra.mxu0 0.0
        %1940 = vmatprep.subr.mxu0 0.0
        %1941 = vmatpush1.msra.mxu0 0.0
        %1942 = vmatprep.subr.mxu0 0.0
        %1943 = vmatpush1.msra.mxu0 0.0
        %1944 = vmatprep.subr.mxu0 0.0
        %1945 = vmatpush1.msra.mxu0 0.0
        %1946 = vmatprep.subr.mxu0 0.0
        %1947 = vmatpush1.msra.mxu0 0.0
        %1948 = vmatprep.subr.mxu0 0.0
        %1949 = vmatpush1.msra.mxu0 0.0
        %1950 = vmatprep.subr.mxu0 0.0
        %1951 = vmatpush1.msra.mxu0 0.0
        %1952 = vmatprep.subr.mxu0 0.0
        %1953 = vmatpush1.msra.mxu0 0.0
        %1954 = vmatprep.subr.mxu0 0.0
        %1955 = vmatpush1.msra.mxu0 0.0
        %1956 = vmatprep.subr.mxu0 0.0
        %1957 = vmatpush1.msra.mxu0 0.0
        %1958 = vmatprep.subr.mxu0 0.0
        %1959 = vmatpush1.msra.mxu0 0.0
        %1960 = vmatprep.subr.mxu0 0.0
        %1961 = vmatpush1.msra.mxu0 0.0
        %1962 = vmatprep.subr.mxu0 0.0
        %1963 = vmatpush1.msra.mxu0 0.0
        %1964 = vmatprep.subr.mxu0 0.0
        %1965 = vmatpush1.msra.mxu0 0.0
        %1966 = vmatprep.subr.mxu0 0.0
        %1967 = vmatpush1.msra.mxu0 0.0
        %1968 = vmatprep.subr.mxu0 0.0
        %1969 = vmatpush1.msra.mxu0 0.0
        %1970 = vmatprep.subr.mxu0 0.0
        %1971 = vmatpush1.msra.mxu0 0.0
        %1972 = vmatprep.subr.mxu0 0.0
        %1973 = vmatpush1.msra.mxu0 0.0
        %1974 = vmatprep.subr.mxu0 0.0
        %1975 = vmatpush1.msra.mxu0 0.0
        %1976 = vmatprep.subr.mxu0 0.0
        %1977 = vmatpush1.msra.mxu0 0.0
        %1978 = vmatprep.subr.mxu0 0.0
        %1979 = vmatpush1.msra.mxu0 0.0
        %1980 = vmatprep.subr.mxu0 0.0
        %1981 = vmatpush1.msra.mxu0 0.0
        %1982 = vmatprep.subr.mxu0 0.0
        %1983 = vmatpush1.msra.mxu0 0.0
        %1984 = vmatprep.subr.mxu0 0.0
        %1985 = vmatpush1.msra.mxu0 0.0
        %1986 = vmatprep.subr.mxu0 0.0
        %1987 = vmatpush1.msra.mxu0 0.0
        %1988 = vmatprep.mubr.f32.mxu0 0.0
        %v1989 = vand.u32 %v827, 4294901760
        %v1990 = vsub.f32 %v827, %v1989
        %1991 = vmatmul.mubr.f32.gmra.mrb[0].mxu0 %v1990
        %v1992 = vpop.f32.mrb[0].mxu0
        %v1993 = vadd.f32 %v1919, %v1992
        %v1994 = vpop.f32.mrb[0].mxu0
        %1995 = vdwg.mxu0
        %1996 = vmatprep.subr.mxu0 0.0
        %v1997 = vand.u32 %v818, 4294901760
        %1998 = vmatpush1.msra.mxu0 %v1997
        %1999 = vmatprep.subr.mxu0 0.0
        %2000 = vmatpush1.msra.mxu0 0.0
        %2001 = vmatprep.subr.mxu0 0.0
        %2002 = vmatpush1.msra.mxu0 0.0
        %2003 = vmatprep.subr.mxu0 0.0
        %2004 = vmatpush1.msra.mxu0 0.0
        %2005 = vmatprep.subr.mxu0 0.0
        %2006 = vmatpush1.msra.mxu0 0.0
        %2007 = vmatprep.subr.mxu0 0.0
        %2008 = vmatpush1.msra.mxu0 0.0
        %2009 = vmatprep.subr.mxu0 0.0
        %2010 = vmatpush1.msra.mxu0 0.0
        %2011 = vmatprep.subr.mxu0 0.0
        %2012 = vmatpush1.msra.mxu0 0.0
        %2013 = vmatprep.subr.mxu0 0.0
        %2014 = vmatpush1.msra.mxu0 0.0
        %2015 = vmatprep.subr.mxu0 0.0
        %2016 = vmatpush1.msra.mxu0 0.0
        %2017 = vmatprep.subr.mxu0 0.0
        %2018 = vmatpush1.msra.mxu0 0.0
        %2019 = vmatprep.subr.mxu0 0.0
        %2020 = vmatpush1.msra.mxu0 0.0
        %2021 = vmatprep.subr.mxu0 0.0
        %2022 = vmatpush1.msra.mxu0 0.0
        %2023 = vmatprep.subr.mxu0 0.0
        %2024 = vmatpush1.msra.mxu0 0.0
        %2025 = vmatprep.subr.mxu0 0.0
        %2026 = vmatpush1.msra.mxu0 0.0
        %2027 = vmatprep.subr.mxu0 0.0
        %2028 = vmatpush1.msra.mxu0 0.0
        %2029 = vmatprep.subr.mxu0 0.0
        %2030 = vmatpush1.msra.mxu0 0.0
        %2031 = vmatprep.subr.mxu0 0.0
        %2032 = vmatpush1.msra.mxu0 0.0
        %2033 = vmatprep.subr.mxu0 0.0
        %2034 = vmatpush1.msra.mxu0 0.0
        %2035 = vmatprep.subr.mxu0 0.0
        %2036 = vmatpush1.msra.mxu0 0.0
        %2037 = vmatprep.subr.mxu0 0.0
        %2038 = vmatpush1.msra.mxu0 0.0
        %2039 = vmatprep.subr.mxu0 0.0
        %2040 = vmatpush1.msra.mxu0 0.0
        %2041 = vmatprep.subr.mxu0 0.0
        %2042 = vmatpush1.msra.mxu0 0.0
        %2043 = vmatprep.subr.mxu0 0.0
        %2044 = vmatpush1.msra.mxu0 0.0
        %2045 = vmatprep.subr.mxu0 0.0
        %2046 = vmatpush1.msra.mxu0 0.0
        %2047 = vmatprep.subr.mxu0 0.0
        %2048 = vmatpush1.msra.mxu0 0.0
        %2049 = vmatprep.subr.mxu0 0.0
        %2050 = vmatpush1.msra.mxu0 0.0
        %2051 = vmatprep.subr.mxu0 0.0
        %2052 = vmatpush1.msra.mxu0 0.0
        %2053 = vmatprep.subr.mxu0 0.0
        %2054 = vmatpush1.msra.mxu0 0.0
        %2055 = vmatprep.subr.mxu0 0.0
        %2056 = vmatpush1.msra.mxu0 0.0
        %2057 = vmatprep.subr.mxu0 0.0
        %2058 = vmatpush1.msra.mxu0 0.0
        %2059 = vmatprep.subr.mxu0 0.0
        %2060 = vmatpush1.msra.mxu0 0.0
        %2061 = vmatprep.mubr.f32.mxu0 0.0
        %v2062 = vand.u32 %v827, 4294901760
        %v2063 = vsub.f32 %v827, %v2062
        %v2064 = vand.u32 %v2063, 4294901760
        %2065 = vmatmul.mubr.f32.gmra.mrb[0].mxu0 %v2064
        %v2066 = vpop.f32.mrb[0].mxu0
        %v2067 = vadd.f32 %v1993, %v2066
        %v2068 = vpop.f32.mrb[0].mxu0
        %2069 = vdwg.mxu0
        %2070 = vmatprep.subr.mxu0 0.0
        %v2071 = vand.u32 %v818, 4294901760
        %v2072 = vsub.f32 %v818, %v2071
        %v2073 = vand.u32 %v2072, 4294901760
        %2074 = vmatpush1.msra.mxu0 %v2073
        %2075 = vmatprep.subr.mxu0 0.0
        %2076 = vmatpush1.msra.mxu0 0.0
        %2077 = vmatprep.subr.mxu0 0.0
        %2078 = vmatpush1.msra.mxu0 0.0
        %2079 = vmatprep.subr.mxu0 0.0
        %2080 = vmatpush1.msra.mxu0 0.0
        %2081 = vmatprep.subr.mxu0 0.0
        %2082 = vmatpush1.msra.mxu0 0.0
        %2083 = vmatprep.subr.mxu0 0.0
        %2084 = vmatpush1.msra.mxu0 0.0
        %2085 = vmatprep.subr.mxu0 0.0
        %2086 = vmatpush1.msra.mxu0 0.0
        %2087 = vmatprep.subr.mxu0 0.0
        %2088 = vmatpush1.msra.mxu0 0.0
        %2089 = vmatprep.subr.mxu0 0.0
        %2090 = vmatpush1.msra.mxu0 0.0
        %2091 = vmatprep.subr.mxu0 0.0
        %2092 = vmatpush1.msra.mxu0 0.0
        %2093 = vmatprep.subr.mxu0 0.0
        %2094 = vmatpush1.msra.mxu0 0.0
        %2095 = vmatprep.subr.mxu0 0.0
        %2096 = vmatpush1.msra.mxu0 0.0
        %2097 = vmatprep.subr.mxu0 0.0
        %2098 = vmatpush1.msra.mxu0 0.0
        %2099 = vmatprep.subr.mxu0 0.0
        %2100 = vmatpush1.msra.mxu0 0.0
        %2101 = vmatprep.subr.mxu0 0.0
        %2102 = vmatpush1.msra.mxu0 0.0
        %2103 = vmatprep.subr.mxu0 0.0
        %2104 = vmatpush1.msra.mxu0 0.0
        %2105 = vmatprep.subr.mxu0 0.0
        %2106 = vmatpush1.msra.mxu0 0.0
        %2107 = vmatprep.subr.mxu0 0.0
        %2108 = vmatpush1.msra.mxu0 0.0
        %2109 = vmatprep.subr.mxu0 0.0
        %2110 = vmatpush1.msra.mxu0 0.0
        %2111 = vmatprep.subr.mxu0 0.0
        %2112 = vmatpush1.msra.mxu0 0.0
        %2113 = vmatprep.subr.mxu0 0.0
        %2114 = vmatpush1.msra.mxu0 0.0
        %2115 = vmatprep.subr.mxu0 0.0
        %2116 = vmatpush1.msra.mxu0 0.0
        %2117 = vmatprep.subr.mxu0 0.0
        %2118 = vmatpush1.msra.mxu0 0.0
        %2119 = vmatprep.subr.mxu0 0.0
        %2120 = vmatpush1.msra.mxu0 0.0
        %2121 = vmatprep.subr.mxu0 0.0
        %2122 = vmatpush1.msra.mxu0 0.0
        %2123 = vmatprep.subr.mxu0 0.0
        %2124 = vmatpush1.msra.mxu0 0.0
        %2125 = vmatprep.subr.mxu0 0.0
        %2126 = vmatpush1.msra.mxu0 0.0
        %2127 = vmatprep.subr.mxu0 0.0
        %2128 = vmatpush1.msra.mxu0 0.0
        %2129 = vmatprep.subr.mxu0 0.0
        %2130 = vmatpush1.msra.mxu0 0.0
        %2131 = vmatprep.subr.mxu0 0.0
        %2132 = vmatpush1.msra.mxu0 0.0
        %2133 = vmatprep.subr.mxu0 0.0
        %2134 = vmatpush1.msra.mxu0 0.0
        %2135 = vmatprep.subr.mxu0 0.0
        %2136 = vmatpush1.msra.mxu0 0.0
        %2137 = vmatprep.mubr.f32.mxu0 0.0
        %v2138 = vand.u32 %v827, 4294901760
        %2139 = vmatmul.mubr.f32.gmra.mrb[0].mxu0 %v2138
        %v2140 = vpop.f32.mrb[0].mxu0
        %v2141 = vadd.f32 %v2067, %v2140
        %v2142 = vpop.f32.mrb[0].mxu0
        %2143 = vdwg.mxu0
        %2144 = vmatprep.subr.mxu0 0.0
        %v2145 = vand.u32 %v818, 4294901760
        %2146 = vmatpush1.msra.mxu0 %v2145
        %2147 = vmatprep.subr.mxu0 0.0
        %2148 = vmatpush1.msra.mxu0 0.0
        %2149 = vmatprep.subr.mxu0 0.0
        %2150 = vmatpush1.msra.mxu0 0.0
        %2151 = vmatprep.subr.mxu0 0.0
        %2152 = vmatpush1.msra.mxu0 0.0
        %2153 = vmatprep.subr.mxu0 0.0
        %2154 = vmatpush1.msra.mxu0 0.0
        %2155 = vmatprep.subr.mxu0 0.0
        %2156 = vmatpush1.msra.mxu0 0.0
        %2157 = vmatprep.subr.mxu0 0.0
        %2158 = vmatpush1.msra.mxu0 0.0
        %2159 = vmatprep.subr.mxu0 0.0
        %2160 = vmatpush1.msra.mxu0 0.0
        %2161 = vmatprep.subr.mxu0 0.0
        %2162 = vmatpush1.msra.mxu0 0.0
        %2163 = vmatprep.subr.mxu0 0.0
        %2164 = vmatpush1.msra.mxu0 0.0
        %2165 = vmatprep.subr.mxu0 0.0
        %2166 = vmatpush1.msra.mxu0 0.0
        %2167 = vmatprep.subr.mxu0 0.0
        %2168 = vmatpush1.msra.mxu0 0.0
        %2169 = vmatprep.subr.mxu0 0.0
        %2170 = vmatpush1.msra.mxu0 0.0
        %2171 = vmatprep.subr.mxu0 0.0
        %2172 = vmatpush1.msra.mxu0 0.0
        %2173 = vmatprep.subr.mxu0 0.0
        %2174 = vmatpush1.msra.mxu0 0.0
        %2175 = vmatprep.subr.mxu0 0.0
        %2176 = vmatpush1.msra.mxu0 0.0
        %2177 = vmatprep.subr.mxu0 0.0
        %2178 = vmatpush1.msra.mxu0 0.0
        %2179 = vmatprep.subr.mxu0 0.0
        %2180 = vmatpush1.msra.mxu0 0.0
        %2181 = vmatprep.subr.mxu0 0.0
        %2182 = vmatpush1.msra.mxu0 0.0
        %2183 = vmatprep.subr.mxu0 0.0
        %2184 = vmatpush1.msra.mxu0 0.0
        %2185 = vmatprep.subr.mxu0 0.0
        %2186 = vmatpush1.msra.mxu0 0.0
        %2187 = vmatprep.subr.mxu0 0.0
        %2188 = vmatpush1.msra.mxu0 0.0
        %2189 = vmatprep.subr.mxu0 0.0
        %2190 = vmatpush1.msra.mxu0 0.0
        %2191 = vmatprep.subr.mxu0 0.0
        %2192 = vmatpush1.msra.mxu0 0.0
        %2193 = vmatprep.subr.mxu0 0.0
        %2194 = vmatpush1.msra.mxu0 0.0
        %2195 = vmatprep.subr.mxu0 0.0
        %2196 = vmatpush1.msra.mxu0 0.0
        %2197 = vmatprep.subr.mxu0 0.0
        %2198 = vmatpush1.msra.mxu0 0.0
        %2199 = vmatprep.subr.mxu0 0.0
        %2200 = vmatpush1.msra.mxu0 0.0
        %2201 = vmatprep.subr.mxu0 0.0
        %2202 = vmatpush1.msra.mxu0 0.0
        %2203 = vmatprep.subr.mxu0 0.0
        %2204 = vmatpush1.msra.mxu0 0.0
        %2205 = vmatprep.subr.mxu0 0.0
        %2206 = vmatpush1.msra.mxu0 0.0
        %2207 = vmatprep.subr.mxu0 0.0
        %2208 = vmatpush1.msra.mxu0 0.0
        %2209 = vmatprep.mubr.f32.mxu0 0.0
        %v2210 = vand.u32 %v827, 4294901760
        %2211 = vmatmul.mubr.f32.gmra.mrb[0].mxu0 %v2210
        %v2212 = vpop.f32.mrb[0].mxu0
        %v2213 = vadd.f32 %v2141, %v2212
        %v2214 = vpop.f32.mrb[0].mxu0
        %2215 = vdwg.mxu0
        %v2216 = vadd.f32 %v1292, %v2213
        %v2217 = vmul.f32 %v1769, %v2216
        %v2218 = vrot.slane %v2217, 4
        %v2219 = vadd.f32 %v2217, %v2218
        %v2220 = vrot.slane %v2219, 2
        %v2221 = vadd.f32 %v2219, %v2220
        %v2222 = vrot.slane %v2221, 1
        %v2223 = vadd.f32 %v2221, %v2222
        %p2224 = scmp.gt.s32.totalorder %s1290, 0
        %s2225 = scalar_select %p2224, 1, 0
        %v2226 = vstv %s2225
        %vm2227 = vcmp.eq.s32.totalorder %v2226, 1
        %vm2228 = vmand %vm2227, %vm1296
        %v2229 = vsel %vm2228, %v2223, 0.0
        %v2230 = vadd.f32 %v1289, %v2229
        %s2231 = sadd.s32 %s334, 2
        %s2232 = scalar_lea.vmem %s274, 16 [#allocation5]
        %v2233 = vld [vmem:[%s2232] sm:$0xff]
        %s2234 = scalar_lea.vmem %s283, 2 [#allocation8]
        %v2235 = vld [vmem:[%s2234] sm:$0x1]
        %v2236 = vstv %s2231
        %vm2237 = vcmp.lt.s32.totalorder %v2236, %v324
        %v2238 = vrot.slane %v1762, 4
        %v2239 = vmax.f32 %v1762, %v2238
        %v2240 = vrot.slane %v2239, 2
        %v2241 = vmax.f32 %v2239, %v2240
        %v2242 = vrot.slane %v2241, 1
        %v2243 = vmax.f32 %v2241, %v2242
        %v2244 = vsub.f32 %v1762, %v2243
        %v2245 = vmul.f32 %v2244, 1.442695
        %v2246 = vpow.pop %v2245
        %2247 = vmatprep.subr.mxu0 0.0
        %v2248 = vand.u32 %v2246, 4294901760
        %2249 = vmatpush1.msra.mxu0 %v2248
        %2250 = vmatprep.subr.mxu0 0.0
        %2251 = vmatpush1.msra.mxu0 0.0
        %2252 = vmatprep.subr.mxu0 0.0
        %2253 = vmatpush1.msra.mxu0 0.0
        %2254 = vmatprep.subr.mxu0 0.0
        %2255 = vmatpush1.msra.mxu0 0.0
        %2256 = vmatprep.subr.mxu0 0.0
        %2257 = vmatpush1.msra.mxu0 0.0
        %2258 = vmatprep.subr.mxu0 0.0
        %2259 = vmatpush1.msra.mxu0 0.0
        %2260 = vmatprep.subr.mxu0 0.0
        %2261 = vmatpush1.msra.mxu0 0.0
        %2262 = vmatprep.subr.mxu0 0.0
        %2263 = vmatpush1.msra.mxu0 0.0
        %2264 = vmatprep.subr.mxu0 0.0
        %2265 = vmatpush1.msra.mxu0 0.0
        %2266 = vmatprep.subr.mxu0 0.0
        %2267 = vmatpush1.msra.mxu0 0.0
        %2268 = vmatprep.subr.mxu0 0.0
        %2269 = vmatpush1.msra.mxu0 0.0
        %2270 = vmatprep.subr.mxu0 0.0
        %2271 = vmatpush1.msra.mxu0 0.0
        %2272 = vmatprep.subr.mxu0 0.0
        %2273 = vmatpush1.msra.mxu0 0.0
        %2274 = vmatprep.subr.mxu0 0.0
        %2275 = vmatpush1.msra.mxu0 0.0
        %2276 = vmatprep.subr.mxu0 0.0
        %2277 = vmatpush1.msra.mxu0 0.0
        %2278 = vmatprep.subr.mxu0 0.0
        %2279 = vmatpush1.msra.mxu0 0.0
        %2280 = vmatprep.subr.mxu0 0.0
        %2281 = vmatpush1.msra.mxu0 0.0
        %2282 = vmatprep.subr.mxu0 0.0
        %2283 = vmatpush1.msra.mxu0 0.0
        %2284 = vmatprep.subr.mxu0 0.0
        %2285 = vmatpush1.msra.mxu0 0.0
        %2286 = vmatprep.subr.mxu0 0.0
        %2287 = vmatpush1.msra.mxu0 0.0
        %2288 = vmatprep.subr.mxu0 0.0
        %2289 = vmatpush1.msra.mxu0 0.0
        %2290 = vmatprep.subr.mxu0 0.0
        %2291 = vmatpush1.msra.mxu0 0.0
        %2292 = vmatprep.subr.mxu0 0.0
        %2293 = vmatpush1.msra.mxu0 0.0
        %2294 = vmatprep.subr.mxu0 0.0
        %2295 = vmatpush1.msra.mxu0 0.0
        %2296 = vmatprep.subr.mxu0 0.0
        %2297 = vmatpush1.msra.mxu0 0.0
        %2298 = vmatprep.subr.mxu0 0.0
        %2299 = vmatpush1.msra.mxu0 0.0
        %2300 = vmatprep.subr.mxu0 0.0
        %2301 = vmatpush1.msra.mxu0 0.0
        %2302 = vmatprep.subr.mxu0 0.0
        %2303 = vmatpush1.msra.mxu0 0.0
        %2304 = vmatprep.subr.mxu0 0.0
        %2305 = vmatpush1.msra.mxu0 0.0
        %2306 = vmatprep.subr.mxu0 0.0
        %2307 = vmatpush1.msra.mxu0 0.0
        %2308 = vmatprep.subr.mxu0 0.0
        %2309 = vmatpush1.msra.mxu0 0.0
        %2310 = vmatprep.subr.mxu0 0.0
        %2311 = vmatpush1.msra.mxu0 0.0
        %2312 = vmatprep.mubr.f32.mxu0 0.0
        %v2313 = vand.u32 %v353, 4294901760
        %v2314 = vsub.f32 %v353, %v2313
        %v2315 = vand.u32 %v2314, 4294901760
        %v2316 = vsub.f32 %v2314, %v2315
        %v2317 = vand.u32 %v2316, 4294901760
        %2318 = vmatmul.mubr.f32.gmra.mrb[0].mxu0 %v2317
        %v2319 = vpop.f32.mrb[0].mxu0
        %v2320 = vadd.f32 0.0, %v2319
        %v2321 = vpop.f32.mrb[0].mxu0
        %2322 = vdwg.mxu0
        %2323 = vmatprep.subr.mxu0 0.0
        %v2324 = vand.u32 %v2246, 4294901760
        %v2325 = vsub.f32 %v2246, %v2324
        %v2326 = vand.u32 %v2325, 4294901760
        %v2327 = vsub.f32 %v2325, %v2326
        %v2328 = vand.u32 %v2327, 4294901760
        %2329 = vmatpush1.msra.mxu0 %v2328
        %2330 = vmatprep.subr.mxu0 0.0
        %2331 = vmatpush1.msra.mxu0 0.0
        %2332 = vmatprep.subr.mxu0 0.0
        %2333 = vmatpush1.msra.mxu0 0.0
        %2334 = vmatprep.subr.mxu0 0.0
        %2335 = vmatpush1.msra.mxu0 0.0
        %2336 = vmatprep.subr.mxu0 0.0
        %2337 = vmatpush1.msra.mxu0 0.0
        %2338 = vmatprep.subr.mxu0 0.0
        %2339 = vmatpush1.msra.mxu0 0.0
        %2340 = vmatprep.subr.mxu0 0.0
        %2341 = vmatpush1.msra.mxu0 0.0
        %2342 = vmatprep.subr.mxu0 0.0
        %2343 = vmatpush1.msra.mxu0 0.0
        %2344 = vmatprep.subr.mxu0 0.0
        %2345 = vmatpush1.msra.mxu0 0.0
        %2346 = vmatprep.subr.mxu0 0.0
        %2347 = vmatpush1.msra.mxu0 0.0
        %2348 = vmatprep.subr.mxu0 0.0
        %2349 = vmatpush1.msra.mxu0 0.0
        %2350 = vmatprep.subr.mxu0 0.0
        %2351 = vmatpush1.msra.mxu0 0.0
        %2352 = vmatprep.subr.mxu0 0.0
        %2353 = vmatpush1.msra.mxu0 0.0
        %2354 = vmatprep.subr.mxu0 0.0
        %2355 = vmatpush1.msra.mxu0 0.0
        %2356 = vmatprep.subr.mxu0 0.0
        %2357 = vmatpush1.msra.mxu0 0.0
        %2358 = vmatprep.subr.mxu0 0.0
        %2359 = vmatpush1.msra.mxu0 0.0
        %2360 = vmatprep.subr.mxu0 0.0
        %2361 = vmatpush1.msra.mxu0 0.0
        %2362 = vmatprep.subr.mxu0 0.0
        %2363 = vmatpush1.msra.mxu0 0.0
        %2364 = vmatprep.subr.mxu0 0.0
        %2365 = vmatpush1.msra.mxu0 0.0
        %2366 = vmatprep.subr.mxu0 0.0
        %2367 = vmatpush1.msra.mxu0 0.0
        %2368 = vmatprep.subr.mxu0 0.0
        %2369 = vmatpush1.msra.mxu0 0.0
        %2370 = vmatprep.subr.mxu0 0.0
        %2371 = vmatpush1.msra.mxu0 0.0
        %2372 = vmatprep.subr.mxu0 0.0
        %2373 = vmatpush1.msra.mxu0 0.0
        %2374 = vmatprep.subr.mxu0 0.0
        %2375 = vmatpush1.msra.mxu0 0.0
        %2376 = vmatprep.subr.mxu0 0.0
        %2377 = vmatpush1.msra.mxu0 0.0
        %2378 = vmatprep.subr.mxu0 0.0
        %2379 = vmatpush1.msra.mxu0 0.0
        %2380 = vmatprep.subr.mxu0 0.0
        %2381 = vmatpush1.msra.mxu0 0.0
        %2382 = vmatprep.subr.mxu0 0.0
        %2383 = vmatpush1.msra.mxu0 0.0
        %2384 = vmatprep.subr.mxu0 0.0
        %2385 = vmatpush1.msra.mxu0 0.0
        %2386 = vmatprep.subr.mxu0 0.0
        %2387 = vmatpush1.msra.mxu0 0.0
        %2388 = vmatprep.subr.mxu0 0.0
        %2389 = vmatpush1.msra.mxu0 0.0
        %2390 = vmatprep.subr.mxu0 0.0
        %2391 = vmatpush1.msra.mxu0 0.0
        %2392 = vmatprep.mubr.f32.mxu0 0.0
        %v2393 = vand.u32 %v353, 4294901760
        %2394 = vmatmul.mubr.f32.gmra.mrb[0].mxu0 %v2393
        %v2395 = vpop.f32.mrb[0].mxu0
        %v2396 = vadd.f32 %v2320, %v2395
        %v2397 = vpop.f32.mrb[0].mxu0
        %2398 = vdwg.mxu0
        %2399 = vmatprep.subr.mxu0 0.0
        %v2400 = vand.u32 %v2246, 4294901760
        %v2401 = vsub.f32 %v2246, %v2400
        %2402 = vmatpush1.msra.mxu0 %v2401
        %2403 = vmatprep.subr.mxu0 0.0
        %2404 = vmatpush1.msra.mxu0 0.0
        %2405 = vmatprep.subr.mxu0 0.0
        %2406 = vmatpush1.msra.mxu0 0.0
        %2407 = vmatprep.subr.mxu0 0.0
        %2408 = vmatpush1.msra.mxu0 0.0
        %2409 = vmatprep.subr.mxu0 0.0
        %2410 = vmatpush1.msra.mxu0 0.0
        %2411 = vmatprep.subr.mxu0 0.0
        %2412 = vmatpush1.msra.mxu0 0.0
        %2413 = vmatprep.subr.mxu0 0.0
        %2414 = vmatpush1.msra.mxu0 0.0
        %2415 = vmatprep.subr.mxu0 0.0
        %2416 = vmatpush1.msra.mxu0 0.0
        %2417 = vmatprep.subr.mxu0 0.0
        %2418 = vmatpush1.msra.mxu0 0.0
        %2419 = vmatprep.subr.mxu0 0.0
        %2420 = vmatpush1.msra.mxu0 0.0
        %2421 = vmatprep.subr.mxu0 0.0
        %2422 = vmatpush1.msra.mxu0 0.0
        %2423 = vmatprep.subr.mxu0 0.0
        %2424 = vmatpush1.msra.mxu0 0.0
        %2425 = vmatprep.subr.mxu0 0.0
        %2426 = vmatpush1.msra.mxu0 0.0
        %2427 = vmatprep.subr.mxu0 0.0
        %2428 = vmatpush1.msra.mxu0 0.0
        %2429 = vmatprep.subr.mxu0 0.0
        %2430 = vmatpush1.msra.mxu0 0.0
        %2431 = vmatprep.subr.mxu0 0.0
        %2432 = vmatpush1.msra.mxu0 0.0
        %2433 = vmatprep.subr.mxu0 0.0
        %2434 = vmatpush1.msra.mxu0 0.0
        %2435 = vmatprep.subr.mxu0 0.0
        %2436 = vmatpush1.msra.mxu0 0.0
        %2437 = vmatprep.subr.mxu0 0.0
        %2438 = vmatpush1.msra.mxu0 0.0
        %2439 = vmatprep.subr.mxu0 0.0
        %2440 = vmatpush1.msra.mxu0 0.0
        %2441 = vmatprep.subr.mxu0 0.0
        %2442 = vmatpush1.msra.mxu0 0.0
        %2443 = vmatprep.subr.mxu0 0.0
        %2444 = vmatpush1.msra.mxu0 0.0
        %2445 = vmatprep.subr.mxu0 0.0
        %2446 = vmatpush1.msra.mxu0 0.0
        %2447 = vmatprep.subr.mxu0 0.0
        %2448 = vmatpush1.msra.mxu0 0.0
        %2449 = vmatprep.subr.mxu0 0.0
        %2450 = vmatpush1.msra.mxu0 0.0
        %2451 = vmatprep.subr.mxu0 0.0
        %2452 = vmatpush1.msra.mxu0 0.0
        %2453 = vmatprep.subr.mxu0 0.0
        %2454 = vmatpush1.msra.mxu0 0.0
        %2455 = vmatprep.subr.mxu0 0.0
        %2456 = vmatpush1.msra.mxu0 0.0
        %2457 = vmatprep.subr.mxu0 0.0
        %2458 = vmatpush1.msra.mxu0 0.0
        %2459 = vmatprep.subr.mxu0 0.0
        %2460 = vmatpush1.msra.mxu0 0.0
        %2461 = vmatprep.subr.mxu0 0.0
        %2462 = vmatpush1.msra.mxu0 0.0
        %2463 = vmatprep.subr.mxu0 0.0
        %2464 = vmatpush1.msra.mxu0 0.0
        %2465 = vmatprep.mubr.f32.mxu0 0.0
        %v2466 = vand.u32 %v353, 4294901760
        %v2467 = vsub.f32 %v353, %v2466
        %2468 = vmatmul.mubr.f32.gmra.mrb[0].mxu0 %v2467
        %v2469 = vpop.f32.mrb[0].mxu0
        %v2470 = vadd.f32 %v2396, %v2469
        %v2471 = vpop.f32.mrb[0].mxu0
        %2472 = vdwg.mxu0
        %2473 = vmatprep.subr.mxu0 0.0
        %v2474 = vand.u32 %v2246, 4294901760
        %2475 = vmatpush1.msra.mxu0 %v2474
        %2476 = vmatprep.subr.mxu0 0.0
        %2477 = vmatpush1.msra.mxu0 0.0
        %2478 = vmatprep.subr.mxu0 0.0
        %2479 = vmatpush1.msra.mxu0 0.0
        %2480 = vmatprep.subr.mxu0 0.0
        %2481 = vmatpush1.msra.mxu0 0.0
        %2482 = vmatprep.subr.mxu0 0.0
        %2483 = vmatpush1.msra.mxu0 0.0
        %2484 = vmatprep.subr.mxu0 0.0
        %2485 = vmatpush1.msra.mxu0 0.0
        %2486 = vmatprep.subr.mxu0 0.0
        %2487 = vmatpush1.msra.mxu0 0.0
        %2488 = vmatprep.subr.mxu0 0.0
        %2489 = vmatpush1.msra.mxu0 0.0
        %2490 = vmatprep.subr.mxu0 0.0
        %2491 = vmatpush1.msra.mxu0 0.0
        %2492 = vmatprep.subr.mxu0 0.0
        %2493 = vmatpush1.msra.mxu0 0.0
        %2494 = vmatprep.subr.mxu0 0.0
        %2495 = vmatpush1.msra.mxu0 0.0
        %2496 = vmatprep.subr.mxu0 0.0
        %2497 = vmatpush1.msra.mxu0 0.0
        %2498 = vmatprep.subr.mxu0 0.0
        %2499 = vmatpush1.msra.mxu0 0.0
        %2500 = vmatprep.subr.mxu0 0.0
        %2501 = vmatpush1.msra.mxu0 0.0
        %2502 = vmatprep.subr.mxu0 0.0
        %2503 = vmatpush1.msra.mxu0 0.0
        %2504 = vmatprep.subr.mxu0 0.0
        %2505 = vmatpush1.msra.mxu0 0.0
        %2506 = vmatprep.subr.mxu0 0.0
        %2507 = vmatpush1.msra.mxu0 0.0
        %2508 = vmatprep.subr.mxu0 0.0
        %2509 = vmatpush1.msra.mxu0 0.0
        %2510 = vmatprep.subr.mxu0 0.0
        %2511 = vmatpush1.msra.mxu0 0.0
        %2512 = vmatprep.subr.mxu0 0.0
        %2513 = vmatpush1.msra.mxu0 0.0
        %2514 = vmatprep.subr.mxu0 0.0
        %2515 = vmatpush1.msra.mxu0 0.0
        %2516 = vmatprep.subr.mxu0 0.0
        %2517 = vmatpush1.msra.mxu0 0.0
        %2518 = vmatprep.subr.mxu0 0.0
        %2519 = vmatpush1.msra.mxu0 0.0
        %2520 = vmatprep.subr.mxu0 0.0
        %2521 = vmatpush1.msra.mxu0 0.0
        %2522 = vmatprep.subr.mxu0 0.0
        %2523 = vmatpush1.msra.mxu0 0.0
        %2524 = vmatprep.subr.mxu0 0.0
        %2525 = vmatpush1.msra.mxu0 0.0
        %2526 = vmatprep.subr.mxu0 0.0
        %2527 = vmatpush1.msra.mxu0 0.0
        %2528 = vmatprep.subr.mxu0 0.0
        %2529 = vmatpush1.msra.mxu0 0.0
        %2530 = vmatprep.subr.mxu0 0.0
        %2531 = vmatpush1.msra.mxu0 0.0
        %2532 = vmatprep.subr.mxu0 0.0
        %2533 = vmatpush1.msra.mxu0 0.0
        %2534 = vmatprep.subr.mxu0 0.0
        %2535 = vmatpush1.msra.mxu0 0.0
        %2536 = vmatprep.subr.mxu0 0.0
        %2537 = vmatpush1.msra.mxu0 0.0
        %2538 = vmatprep.mubr.f32.mxu0 0.0
        %v2539 = vand.u32 %v353, 4294901760
        %v2540 = vsub.f32 %v353, %v2539
        %v2541 = vand.u32 %v2540, 4294901760
        %2542 = vmatmul.mubr.f32.gmra.mrb[0].mxu0 %v2541
        %v2543 = vpop.f32.mrb[0].mxu0
        %v2544 = vadd.f32 %v2470, %v2543
        %v2545 = vpop.f32.mrb[0].mxu0
        %2546 = vdwg.mxu0
        %2547 = vmatprep.subr.mxu0 0.0
        %v2548 = vand.u32 %v2246, 4294901760
        %v2549 = vsub.f32 %v2246, %v2548
        %v2550 = vand.u32 %v2549, 4294901760
        %2551 = vmatpush1.msra.mxu0 %v2550
        %2552 = vmatprep.subr.mxu0 0.0
        %2553 = vmatpush1.msra.mxu0 0.0
        %2554 = vmatprep.subr.mxu0 0.0
        %2555 = vmatpush1.msra.mxu0 0.0
        %2556 = vmatprep.subr.mxu0 0.0
        %2557 = vmatpush1.msra.mxu0 0.0
        %2558 = vmatprep.subr.mxu0 0.0
        %2559 = vmatpush1.msra.mxu0 0.0
        %2560 = vmatprep.subr.mxu0 0.0
        %2561 = vmatpush1.msra.mxu0 0.0
        %2562 = vmatprep.subr.mxu0 0.0
        %2563 = vmatpush1.msra.mxu0 0.0
        %2564 = vmatprep.subr.mxu0 0.0
        %2565 = vmatpush1.msra.mxu0 0.0
        %2566 = vmatprep.subr.mxu0 0.0
        %2567 = vmatpush1.msra.mxu0 0.0
        %2568 = vmatprep.subr.mxu0 0.0
        %2569 = vmatpush1.msra.mxu0 0.0
        %2570 = vmatprep.subr.mxu0 0.0
        %2571 = vmatpush1.msra.mxu0 0.0
        %2572 = vmatprep.subr.mxu0 0.0
        %2573 = vmatpush1.msra.mxu0 0.0
        %2574 = vmatprep.subr.mxu0 0.0
        %2575 = vmatpush1.msra.mxu0 0.0
        %2576 = vmatprep.subr.mxu0 0.0
        %2577 = vmatpush1.msra.mxu0 0.0
        %2578 = vmatprep.subr.mxu0 0.0
        %2579 = vmatpush1.msra.mxu0 0.0
        %2580 = vmatprep.subr.mxu0 0.0
        %2581 = vmatpush1.msra.mxu0 0.0
        %2582 = vmatprep.subr.mxu0 0.0
        %2583 = vmatpush1.msra.mxu0 0.0
        %2584 = vmatprep.subr.mxu0 0.0
        %2585 = vmatpush1.msra.mxu0 0.0
        %2586 = vmatprep.subr.mxu0 0.0
        %2587 = vmatpush1.msra.mxu0 0.0
        %2588 = vmatprep.subr.mxu0 0.0
        %2589 = vmatpush1.msra.mxu0 0.0
        %2590 = vmatprep.subr.mxu0 0.0
        %2591 = vmatpush1.msra.mxu0 0.0
        %2592 = vmatprep.subr.mxu0 0.0
        %2593 = vmatpush1.msra.mxu0 0.0
        %2594 = vmatprep.subr.mxu0 0.0
        %2595 = vmatpush1.msra.mxu0 0.0
        %2596 = vmatprep.subr.mxu0 0.0
        %2597 = vmatpush1.msra.mxu0 0.0
        %2598 = vmatprep.subr.mxu0 0.0
        %2599 = vmatpush1.msra.mxu0 0.0
        %2600 = vmatprep.subr.mxu0 0.0
        %2601 = vmatpush1.msra.mxu0 0.0
        %2602 = vmatprep.subr.mxu0 0.0
        %2603 = vmatpush1.msra.mxu0 0.0
        %2604 = vmatprep.subr.mxu0 0.0
        %2605 = vmatpush1.msra.mxu0 0.0
        %2606 = vmatprep.subr.mxu0 0.0
        %2607 = vmatpush1.msra.mxu0 0.0
        %2608 = vmatprep.subr.mxu0 0.0
        %2609 = vmatpush1.msra.mxu0 0.0
        %2610 = vmatprep.subr.mxu0 0.0
        %2611 = vmatpush1.msra.mxu0 0.0
        %2612 = vmatprep.subr.mxu0 0.0
        %2613 = vmatpush1.msra.mxu0 0.0
        %2614 = vmatprep.mubr.f32.mxu0 0.0
        %v2615 = vand.u32 %v353, 4294901760
        %2616 = vmatmul.mubr.f32.gmra.mrb[0].mxu0 %v2615
        %v2617 = vpop.f32.mrb[0].mxu0
        %v2618 = vadd.f32 %v2544, %v2617
        %v2619 = vpop.f32.mrb[0].mxu0
        %2620 = vdwg.mxu0
        %2621 = vmatprep.subr.mxu0 0.0
        %v2622 = vand.u32 %v2246, 4294901760
        %2623 = vmatpush1.msra.mxu0 %v2622
        %2624 = vmatprep.subr.mxu0 0.0
        %2625 = vmatpush1.msra.mxu0 0.0
        %2626 = vmatprep.subr.mxu0 0.0
        %2627 = vmatpush1.msra.mxu0 0.0
        %2628 = vmatprep.subr.mxu0 0.0
        %2629 = vmatpush1.msra.mxu0 0.0
        %2630 = vmatprep.subr.mxu0 0.0
        %2631 = vmatpush1.msra.mxu0 0.0
        %2632 = vmatprep.subr.mxu0 0.0
        %2633 = vmatpush1.msra.mxu0 0.0
        %2634 = vmatprep.subr.mxu0 0.0
        %2635 = vmatpush1.msra.mxu0 0.0
        %2636 = vmatprep.subr.mxu0 0.0
        %2637 = vmatpush1.msra.mxu0 0.0
        %2638 = vmatprep.subr.mxu0 0.0
        %2639 = vmatpush1.msra.mxu0 0.0
        %2640 = vmatprep.subr.mxu0 0.0
        %2641 = vmatpush1.msra.mxu0 0.0
        %2642 = vmatprep.subr.mxu0 0.0
        %2643 = vmatpush1.msra.mxu0 0.0
        %2644 = vmatprep.subr.mxu0 0.0
        %2645 = vmatpush1.msra.mxu0 0.0
        %2646 = vmatprep.subr.mxu0 0.0
        %2647 = vmatpush1.msra.mxu0 0.0
        %2648 = vmatprep.subr.mxu0 0.0
        %2649 = vmatpush1.msra.mxu0 0.0
        %2650 = vmatprep.subr.mxu0 0.0
        %2651 = vmatpush1.msra.mxu0 0.0
        %2652 = vmatprep.subr.mxu0 0.0
        %2653 = vmatpush1.msra.mxu0 0.0
        %2654 = vmatprep.subr.mxu0 0.0
        %2655 = vmatpush1.msra.mxu0 0.0
        %2656 = vmatprep.subr.mxu0 0.0
        %2657 = vmatpush1.msra.mxu0 0.0
        %2658 = vmatprep.subr.mxu0 0.0
        %2659 = vmatpush1.msra.mxu0 0.0
        %2660 = vmatprep.subr.mxu0 0.0
        %2661 = vmatpush1.msra.mxu0 0.0
        %2662 = vmatprep.subr.mxu0 0.0
        %2663 = vmatpush1.msra.mxu0 0.0
        %2664 = vmatprep.subr.mxu0 0.0
        %2665 = vmatpush1.msra.mxu0 0.0
        %2666 = vmatprep.subr.mxu0 0.0
        %2667 = vmatpush1.msra.mxu0 0.0
        %2668 = vmatprep.subr.mxu0 0.0
        %2669 = vmatpush1.msra.mxu0 0.0
        %2670 = vmatprep.subr.mxu0 0.0
        %2671 = vmatpush1.msra.mxu0 0.0
        %2672 = vmatprep.subr.mxu0 0.0
        %2673 = vmatpush1.msra.mxu0 0.0
        %2674 = vmatprep.subr.mxu0 0.0
        %2675 = vmatpush1.msra.mxu0 0.0
        %2676 = vmatprep.subr.mxu0 0.0
        %2677 = vmatpush1.msra.mxu0 0.0
        %2678 = vmatprep.subr.mxu0 0.0
        %2679 = vmatpush1.msra.mxu0 0.0
        %2680 = vmatprep.subr.mxu0 0.0
        %2681 = vmatpush1.msra.mxu0 0.0
        %2682 = vmatprep.subr.mxu0 0.0
        %2683 = vmatpush1.msra.mxu0 0.0
        %2684 = vmatprep.subr.mxu0 0.0
        %2685 = vmatpush1.msra.mxu0 0.0
        %2686 = vmatprep.mubr.f32.mxu0 0.0
        %v2687 = vand.u32 %v353, 4294901760
        %2688 = vmatmul.mubr.f32.gmra.mrb[0].mxu0 %v2687
        %v2689 = vpop.f32.mrb[0].mxu0
        %v2690 = vadd.f32 %v2618, %v2689
        %v2691 = vpop.f32.mrb[0].mxu0
        %2692 = vdwg.mxu0
        %v2693 = vadd.f32 %v2233, %v2243
        %v2694 = vlog2.pop %v2690
        %v2695 = vmul.f32 %v2694, 0.6931472
        %v2696 = vadd.f32 %v2693, %v2695
        %v2697 = vsel %vm2237, 1, 0
        %v2698 = vlaneseq
        %v2699 = vshrl.u32 %v2698, 7
        %v2700 = vsub.s32 0, %v2699
        %v2701 = vrot.slane %v2697, %v2700
        %vm2702 = vcmp.eq.s32.totalorder %v2701, 1
        %v2703 = vsel %vm2702, %v2696, %v1762
        %v2704 = vlaneseq
        %v2705 = vshrl.u32 %v2704, 7
        %v2706 = vsub.s32 0, %v2705
        %v2707 = vrot.slane %v2235, %v2706
        %vm2708 = vcmp.eq.s32.totalorder %v326, %v2707
        %v2709 = vsel %vm2708, 1, 0
        %v2710 = vcvt.s32.f32 %v2709
        %2711 = vmatprep.subr.mxu0 0.0
        %v2712 = vand.u32 %v1769, 4294901760
        %2713 = vmatpush1.msra.mxu0 %v2712
        %2714 = vmatprep.subr.mxu0 0.0
        %2715 = vmatpush1.msra.mxu0 0.0
        %2716 = vmatprep.subr.mxu0 0.0
        %2717 = vmatpush1.msra.mxu0 0.0
        %2718 = vmatprep.subr.mxu0 0.0
        %2719 = vmatpush1.msra.mxu0 0.0
        %2720 = vmatprep.subr.mxu0 0.0
        %2721 = vmatpush1.msra.mxu0 0.0
        %2722 = vmatprep.subr.mxu0 0.0
        %2723 = vmatpush1.msra.mxu0 0.0
        %2724 = vmatprep.subr.mxu0 0.0
        %2725 = vmatpush1.msra.mxu0 0.0
        %2726 = vmatprep.subr.mxu0 0.0
        %2727 = vmatpush1.msra.mxu0 0.0
        %2728 = vmatprep.subr.mxu0 0.0
        %2729 = vmatpush1.msra.mxu0 0.0
        %2730 = vmatprep.subr.mxu0 0.0
        %2731 = vmatpush1.msra.mxu0 0.0
        %2732 = vmatprep.subr.mxu0 0.0
        %2733 = vmatpush1.msra.mxu0 0.0
        %2734 = vmatprep.subr.mxu0 0.0
        %2735 = vmatpush1.msra.mxu0 0.0
        %2736 = vmatprep.subr.mxu0 0.0
        %2737 = vmatpush1.msra.mxu0 0.0
        %2738 = vmatprep.subr.mxu0 0.0
        %2739 = vmatpush1.msra.mxu0 0.0
        %2740 = vmatprep.subr.mxu0 0.0
        %2741 = vmatpush1.msra.mxu0 0.0
        %2742 = vmatprep.subr.mxu0 0.0
        %2743 = vmatpush1.msra.mxu0 0.0
        %2744 = vmatprep.subr.mxu0 0.0
        %2745 = vmatpush1.msra.mxu0 0.0
        %2746 = vmatprep.subr.mxu0 0.0
        %2747 = vmatpush1.msra.mxu0 0.0
        %2748 = vmatprep.subr.mxu0 0.0
        %2749 = vmatpush1.msra.mxu0 0.0
        %2750 = vmatprep.subr.mxu0 0.0
        %2751 = vmatpush1.msra.mxu0 0.0
        %2752 = vmatprep.subr.mxu0 0.0
        %2753 = vmatpush1.msra.mxu0 0.0
        %2754 = vmatprep.subr.mxu0 0.0
        %2755 = vmatpush1.msra.mxu0 0.0
        %2756 = vmatprep.subr.mxu0 0.0
        %2757 = vmatpush1.msra.mxu0 0.0
        %2758 = vmatprep.subr.mxu0 0.0
        %2759 = vmatpush1.msra.mxu0 0.0
        %2760 = vmatprep.subr.mxu0 0.0
        %2761 = vmatpush1.msra.mxu0 0.0
        %2762 = vmatprep.subr.mxu0 0.0
        %2763 = vmatpush1.msra.mxu0 0.0
        %2764 = vmatprep.subr.mxu0 0.0
        %2765 = vmatpush1.msra.mxu0 0.0
        %2766 = vmatprep.subr.mxu0 0.0
        %2767 = vmatpush1.msra.mxu0 0.0
        %2768 = vmatprep.subr.mxu0 0.0
        %2769 = vmatpush1.msra.mxu0 0.0
        %2770 = vmatprep.subr.mxu0 0.0
        %2771 = vmatpush1.msra.mxu0 0.0
        %2772 = vmatprep.subr.mxu0 0.0
        %2773 = vmatpush1.msra.mxu0 0.0
        %2774 = vmatprep.subr.mxu0 0.0
        %2775 = vmatpush1.msra.mxu0 0.0
        %2776 = vmatprep.mubr.f32.mxu0 0.0
        %v2777 = vand.u32 %v827, 4294901760
        %v2778 = vsub.f32 %v827, %v2777
        %v2779 = vand.u32 %v2778, 4294901760
        %v2780 = vsub.f32 %v2778, %v2779
        %v2781 = vand.u32 %v2780, 4294901760
        %2782 = vmatmul.mubr.f32.gmra.mrb[0].mxu0 %v2781
        %v2783 = vpop.f32.mrb[0].mxu0
        %v2784 = vadd.f32 0.0, %v2783
        %v2785 = vpop.f32.mrb[0].mxu0
        %2786 = vdwg.mxu0
        %2787 = vmatprep.subr.mxu0 0.0
        %v2788 = vand.u32 %v1769, 4294901760
        %v2789 = vsub.f32 %v1769, %v2788
        %v2790 = vand.u32 %v2789, 4294901760
        %v2791 = vsub.f32 %v2789, %v2790
        %v2792 = vand.u32 %v2791, 4294901760
        %2793 = vmatpush1.msra.mxu0 %v2792
        %2794 = vmatprep.subr.mxu0 0.0
        %2795 = vmatpush1.msra.mxu0 0.0
        %2796 = vmatprep.subr.mxu0 0.0
        %2797 = vmatpush1.msra.mxu0 0.0
        %2798 = vmatprep.subr.mxu0 0.0
        %2799 = vmatpush1.msra.mxu0 0.0
        %2800 = vmatprep.subr.mxu0 0.0
        %2801 = vmatpush1.msra.mxu0 0.0
        %2802 = vmatprep.subr.mxu0 0.0
        %2803 = vmatpush1.msra.mxu0 0.0
        %2804 = vmatprep.subr.mxu0 0.0
        %2805 = vmatpush1.msra.mxu0 0.0
        %2806 = vmatprep.subr.mxu0 0.0
        %2807 = vmatpush1.msra.mxu0 0.0
        %2808 = vmatprep.subr.mxu0 0.0
        %2809 = vmatpush1.msra.mxu0 0.0
        %2810 = vmatprep.subr.mxu0 0.0
        %2811 = vmatpush1.msra.mxu0 0.0
        %2812 = vmatprep.subr.mxu0 0.0
        %2813 = vmatpush1.msra.mxu0 0.0
        %2814 = vmatprep.subr.mxu0 0.0
        %2815 = vmatpush1.msra.mxu0 0.0
        %2816 = vmatprep.subr.mxu0 0.0
        %2817 = vmatpush1.msra.mxu0 0.0
        %2818 = vmatprep.subr.mxu0 0.0
        %2819 = vmatpush1.msra.mxu0 0.0
        %2820 = vmatprep.subr.mxu0 0.0
        %2821 = vmatpush1.msra.mxu0 0.0
        %2822 = vmatprep.subr.mxu0 0.0
        %2823 = vmatpush1.msra.mxu0 0.0
        %2824 = vmatprep.subr.mxu0 0.0
        %2825 = vmatpush1.msra.mxu0 0.0
        %2826 = vmatprep.subr.mxu0 0.0
        %2827 = vmatpush1.msra.mxu0 0.0
        %2828 = vmatprep.subr.mxu0 0.0
        %2829 = vmatpush1.msra.mxu0 0.0
        %2830 = vmatprep.subr.mxu0 0.0
        %2831 = vmatpush1.msra.mxu0 0.0
        %2832 = vmatprep.subr.mxu0 0.0
        %2833 = vmatpush1.msra.mxu0 0.0
        %2834 = vmatprep.subr.mxu0 0.0
        %2835 = vmatpush1.msra.mxu0 0.0
        %2836 = vmatprep.subr.mxu0 0.0
        %2837 = vmatpush1.msra.mxu0 0.0
        %2838 = vmatprep.subr.mxu0 0.0
        %2839 = vmatpush1.msra.mxu0 0.0
        %2840 = vmatprep.subr.mxu0 0.0
        %2841 = vmatpush1.msra.mxu0 0.0
        %2842 = vmatprep.subr.mxu0 0.0
        %2843 = vmatpush1.msra.mxu0 0.0
        %2844 = vmatprep.subr.mxu0 0.0
        %2845 = vmatpush1.msra.mxu0 0.0
        %2846 = vmatprep.subr.mxu0 0.0
        %2847 = vmatpush1.msra.mxu0 0.0
        %2848 = vmatprep.subr.mxu0 0.0
        %2849 = vmatpush1.msra.mxu0 0.0
        %2850 = vmatprep.subr.mxu0 0.0
        %2851 = vmatpush1.msra.mxu0 0.0
        %2852 = vmatprep.subr.mxu0 0.0
        %2853 = vmatpush1.msra.mxu0 0.0
        %2854 = vmatprep.subr.mxu0 0.0
        %2855 = vmatpush1.msra.mxu0 0.0
        %2856 = vmatprep.mubr.f32.mxu0 0.0
        %v2857 = vand.u32 %v827, 4294901760
        %2858 = vmatmul.mubr.f32.gmra.mrb[0].mxu0 %v2857
        %v2859 = vpop.f32.mrb[0].mxu0
        %v2860 = vadd.f32 %v2784, %v2859
        %v2861 = vpop.f32.mrb[0].mxu0
        %2862 = vdwg.mxu0
        %2863 = vmatprep.subr.mxu0 0.0
        %v2864 = vand.u32 %v1769, 4294901760
        %v2865 = vsub.f32 %v1769, %v2864
        %2866 = vmatpush1.msra.mxu0 %v2865
        %2867 = vmatprep.subr.mxu0 0.0
        %2868 = vmatpush1.msra.mxu0 0.0
        %2869 = vmatprep.subr.mxu0 0.0
        %2870 = vmatpush1.msra.mxu0 0.0
        %2871 = vmatprep.subr.mxu0 0.0
        %2872 = vmatpush1.msra.mxu0 0.0
        %2873 = vmatprep.subr.mxu0 0.0
        %2874 = vmatpush1.msra.mxu0 0.0
        %2875 = vmatprep.subr.mxu0 0.0
        %2876 = vmatpush1.msra.mxu0 0.0
        %2877 = vmatprep.subr.mxu0 0.0
        %2878 = vmatpush1.msra.mxu0 0.0
        %2879 = vmatprep.subr.mxu0 0.0
        %2880 = vmatpush1.msra.mxu0 0.0
        %2881 = vmatprep.subr.mxu0 0.0
        %2882 = vmatpush1.msra.mxu0 0.0
        %2883 = vmatprep.subr.mxu0 0.0
        %2884 = vmatpush1.msra.mxu0 0.0
        %2885 = vmatprep.subr.mxu0 0.0
        %2886 = vmatpush1.msra.mxu0 0.0
        %2887 = vmatprep.subr.mxu0 0.0
        %2888 = vmatpush1.msra.mxu0 0.0
        %2889 = vmatprep.subr.mxu0 0.0
        %2890 = vmatpush1.msra.mxu0 0.0
        %2891 = vmatprep.subr.mxu0 0.0
        %2892 = vmatpush1.msra.mxu0 0.0
        %2893 = vmatprep.subr.mxu0 0.0
        %2894 = vmatpush1.msra.mxu0 0.0
        %2895 = vmatprep.subr.mxu0 0.0
        %2896 = vmatpush1.msra.mxu0 0.0
        %2897 = vmatprep.subr.mxu0 0.0
        %2898 = vmatpush1.msra.mxu0 0.0
        %2899 = vmatprep.subr.mxu0 0.0
        %2900 = vmatpush1.msra.mxu0 0.0
        %2901 = vmatprep.subr.mxu0 0.0
        %2902 = vmatpush1.msra.mxu0 0.0
        %2903 = vmatprep.subr.mxu0 0.0
        %2904 = vmatpush1.msra.mxu0 0.0
        %2905 = vmatprep.subr.mxu0 0.0
        %2906 = vmatpush1.msra.mxu0 0.0
        %2907 = vmatprep.subr.mxu0 0.0
        %2908 = vmatpush1.msra.mxu0 0.0
        %2909 = vmatprep.subr.mxu0 0.0
        %2910 = vmatpush1.msra.mxu0 0.0
        %2911 = vmatprep.subr.mxu0 0.0
        %2912 = vmatpush1.msra.mxu0 0.0
        %2913 = vmatprep.subr.mxu0 0.0
        %2914 = vmatpush1.msra.mxu0 0.0
        %2915 = vmatprep.subr.mxu0 0.0
        %2916 = vmatpush1.msra.mxu0 0.0
        %2917 = vmatprep.subr.mxu0 0.0
        %2918 = vmatpush1.msra.mxu0 0.0
        %2919 = vmatprep.subr.mxu0 0.0
        %2920 = vmatpush1.msra.mxu0 0.0
        %2921 = vmatprep.subr.mxu0 0.0
        %2922 = vmatpush1.msra.mxu0 0.0
        %2923 = vmatprep.subr.mxu0 0.0
        %2924 = vmatpush1.msra.mxu0 0.0
        %2925 = vmatprep.subr.mxu0 0.0
        %2926 = vmatpush1.msra.mxu0 0.0
        %2927 = vmatprep.subr.mxu0 0.0
        %2928 = vmatpush1.msra.mxu0 0.0
        %2929 = vmatprep.mubr.f32.mxu0 0.0
        %v2930 = vand.u32 %v827, 4294901760
        %v2931 = vsub.f32 %v827, %v2930
        %2932 = vmatmul.mubr.f32.gmra.mrb[0].mxu0 %v2931
        %v2933 = vpop.f32.mrb[0].mxu0
        %v2934 = vadd.f32 %v2860, %v2933
        %v2935 = vpop.f32.mrb[0].mxu0
        %2936 = vdwg.mxu0
        %2937 = vmatprep.subr.mxu0 0.0
        %v2938 = vand.u32 %v1769, 4294901760
        %2939 = vmatpush1.msra.mxu0 %v2938
        %2940 = vmatprep.subr.mxu0 0.0
        %2941 = vmatpush1.msra.mxu0 0.0
        %2942 = vmatprep.subr.mxu0 0.0
        %2943 = vmatpush1.msra.mxu0 0.0
        %2944 = vmatprep.subr.mxu0 0.0
        %2945 = vmatpush1.msra.mxu0 0.0
        %2946 = vmatprep.subr.mxu0 0.0
        %2947 = vmatpush1.msra.mxu0 0.0
        %2948 = vmatprep.subr.mxu0 0.0
        %2949 = vmatpush1.msra.mxu0 0.0
        %2950 = vmatprep.subr.mxu0 0.0
        %2951 = vmatpush1.msra.mxu0 0.0
        %2952 = vmatprep.subr.mxu0 0.0
        %2953 = vmatpush1.msra.mxu0 0.0
        %2954 = vmatprep.subr.mxu0 0.0
        %2955 = vmatpush1.msra.mxu0 0.0
        %2956 = vmatprep.subr.mxu0 0.0
        %2957 = vmatpush1.msra.mxu0 0.0
        %2958 = vmatprep.subr.mxu0 0.0
        %2959 = vmatpush1.msra.mxu0 0.0
        %2960 = vmatprep.subr.mxu0 0.0
        %2961 = vmatpush1.msra.mxu0 0.0
        %2962 = vmatprep.subr.mxu0 0.0
        %2963 = vmatpush1.msra.mxu0 0.0
        %2964 = vmatprep.subr.mxu0 0.0
        %2965 = vmatpush1.msra.mxu0 0.0
        %2966 = vmatprep.subr.mxu0 0.0
        %2967 = vmatpush1.msra.mxu0 0.0
        %2968 = vmatprep.subr.mxu0 0.0
        %2969 = vmatpush1.msra.mxu0 0.0
        %2970 = vmatprep.subr.mxu0 0.0
        %2971 = vmatpush1.msra.mxu0 0.0
        %2972 = vmatprep.subr.mxu0 0.0
        %2973 = vmatpush1.msra.mxu0 0.0
        %2974 = vmatprep.subr.mxu0 0.0
        %2975 = vmatpush1.msra.mxu0 0.0
        %2976 = vmatprep.subr.mxu0 0.0
        %2977 = vmatpush1.msra.mxu0 0.0
        %2978 = vmatprep.subr.mxu0 0.0
        %2979 = vmatpush1.msra.mxu0 0.0
        %2980 = vmatprep.subr.mxu0 0.0
        %2981 = vmatpush1.msra.mxu0 0.0
        %2982 = vmatprep.subr.mxu0 0.0
        %2983 = vmatpush1.msra.mxu0 0.0
        %2984 = vmatprep.subr.mxu0 0.0
        %2985 = vmatpush1.msra.mxu0 0.0
        %2986 = vmatprep.subr.mxu0 0.0
        %2987 = vmatpush1.msra.mxu0 0.0
        %2988 = vmatprep.subr.mxu0 0.0
        %2989 = vmatpush1.msra.mxu0 0.0
        %2990 = vmatprep.subr.mxu0 0.0
        %2991 = vmatpush1.msra.mxu0 0.0
        %2992 = vmatprep.subr.mxu0 0.0
        %2993 = vmatpush1.msra.mxu0 0.0
        %2994 = vmatprep.subr.mxu0 0.0
        %2995 = vmatpush1.msra.mxu0 0.0
        %2996 = vmatprep.subr.mxu0 0.0
        %2997 = vmatpush1.msra.mxu0 0.0
        %2998 = vmatprep.subr.mxu0 0.0
        %2999 = vmatpush1.msra.mxu0 0.0
        %3000 = vmatprep.subr.mxu0 0.0
        %3001 = vmatpush1.msra.mxu0 0.0
        %3002 = vmatprep.mubr.f32.mxu0 0.0
        %v3003 = vand.u32 %v827, 4294901760
        %v3004 = vsub.f32 %v827, %v3003
        %v3005 = vand.u32 %v3004, 4294901760
        %3006 = vmatmul.mubr.f32.gmra.mrb[0].mxu0 %v3005
        %v3007 = vpop.f32.mrb[0].mxu0
        %v3008 = vadd.f32 %v2934, %v3007
        %v3009 = vpop.f32.mrb[0].mxu0
        %3010 = vdwg.mxu0
        %3011 = vmatprep.subr.mxu0 0.0
        %v3012 = vand.u32 %v1769, 4294901760
        %v3013 = vsub.f32 %v1769, %v3012
        %v3014 = vand.u32 %v3013, 4294901760
        %3015 = vmatpush1.msra.mxu0 %v3014
        %3016 = vmatprep.subr.mxu0 0.0
        %3017 = vmatpush1.msra.mxu0 0.0
        %3018 = vmatprep.subr.mxu0 0.0
        %3019 = vmatpush1.msra.mxu0 0.0
        %3020 = vmatprep.subr.mxu0 0.0
        %3021 = vmatpush1.msra.mxu0 0.0
        %3022 = vmatprep.subr.mxu0 0.0
        %3023 = vmatpush1.msra.mxu0 0.0
        %3024 = vmatprep.subr.mxu0 0.0
        %3025 = vmatpush1.msra.mxu0 0.0
        %3026 = vmatprep.subr.mxu0 0.0
        %3027 = vmatpush1.msra.mxu0 0.0
        %3028 = vmatprep.subr.mxu0 0.0
        %3029 = vmatpush1.msra.mxu0 0.0
        %3030 = vmatprep.subr.mxu0 0.0
        %3031 = vmatpush1.msra.mxu0 0.0
        %3032 = vmatprep.subr.mxu0 0.0
        %3033 = vmatpush1.msra.mxu0 0.0
        %3034 = vmatprep.subr.mxu0 0.0
        %3035 = vmatpush1.msra.mxu0 0.0
        %3036 = vmatprep.subr.mxu0 0.0
        %3037 = vmatpush1.msra.mxu0 0.0
        %3038 = vmatprep.subr.mxu0 0.0
        %3039 = vmatpush1.msra.mxu0 0.0
        %3040 = vmatprep.subr.mxu0 0.0
        %3041 = vmatpush1.msra.mxu0 0.0
        %3042 = vmatprep.subr.mxu0 0.0
        %3043 = vmatpush1.msra.mxu0 0.0
        %3044 = vmatprep.subr.mxu0 0.0
        %3045 = vmatpush1.msra.mxu0 0.0
        %3046 = vmatprep.subr.mxu0 0.0
        %3047 = vmatpush1.msra.mxu0 0.0
        %3048 = vmatprep.subr.mxu0 0.0
        %3049 = vmatpush1.msra.mxu0 0.0
        %3050 = vmatprep.subr.mxu0 0.0
        %3051 = vmatpush1.msra.mxu0 0.0
        %3052 = vmatprep.subr.mxu0 0.0
        %3053 = vmatpush1.msra.mxu0 0.0
        %3054 = vmatprep.subr.mxu0 0.0
        %3055 = vmatpush1.msra.mxu0 0.0
        %3056 = vmatprep.subr.mxu0 0.0
        %3057 = vmatpush1.msra.mxu0 0.0
        %3058 = vmatprep.subr.mxu0 0.0
        %3059 = vmatpush1.msra.mxu0 0.0
        %3060 = vmatprep.subr.mxu0 0.0
        %3061 = vmatpush1.msra.mxu0 0.0
        %3062 = vmatprep.subr.mxu0 0.0
        %3063 = vmatpush1.msra.mxu0 0.0
        %3064 = vmatprep.subr.mxu0 0.0
        %3065 = vmatpush1.msra.mxu0 0.0
        %3066 = vmatprep.subr.mxu0 0.0
        %3067 = vmatpush1.msra.mxu0 0.0
        %3068 = vmatprep.subr.mxu0 0.0
        %3069 = vmatpush1.msra.mxu0 0.0
        %3070 = vmatprep.subr.mxu0 0.0
        %3071 = vmatpush1.msra.mxu0 0.0
        %3072 = vmatprep.subr.mxu0 0.0
        %3073 = vmatpush1.msra.mxu0 0.0
        %3074 = vmatprep.subr.mxu0 0.0
        %3075 = vmatpush1.msra.mxu0 0.0
        %3076 = vmatprep.subr.mxu0 0.0
        %3077 = vmatpush1.msra.mxu0 0.0
        %3078 = vmatprep.mubr.f32.mxu0 0.0
        %v3079 = vand.u32 %v827, 4294901760
        %3080 = vmatmul.mubr.f32.gmra.mrb[0].mxu0 %v3079
        %v3081 = vpop.f32.mrb[0].mxu0
        %v3082 = vadd.f32 %v3008, %v3081
        %v3083 = vpop.f32.mrb[0].mxu0
        %3084 = vdwg.mxu0
        %3085 = vmatprep.subr.mxu0 0.0
        %v3086 = vand.u32 %v1769, 4294901760
        %3087 = vmatpush1.msra.mxu0 %v3086
        %3088 = vmatprep.subr.mxu0 0.0
        %3089 = vmatpush1.msra.mxu0 0.0
        %3090 = vmatprep.subr.mxu0 0.0
        %3091 = vmatpush1.msra.mxu0 0.0
        %3092 = vmatprep.subr.mxu0 0.0
        %3093 = vmatpush1.msra.mxu0 0.0
        %3094 = vmatprep.subr.mxu0 0.0
        %3095 = vmatpush1.msra.mxu0 0.0
        %3096 = vmatprep.subr.mxu0 0.0
        %3097 = vmatpush1.msra.mxu0 0.0
        %3098 = vmatprep.subr.mxu0 0.0
        %3099 = vmatpush1.msra.mxu0 0.0
        %3100 = vmatprep.subr.mxu0 0.0
        %3101 = vmatpush1.msra.mxu0 0.0
        %3102 = vmatprep.subr.mxu0 0.0
        %3103 = vmatpush1.msra.mxu0 0.0
        %3104 = vmatprep.subr.mxu0 0.0
        %3105 = vmatpush1.msra.mxu0 0.0
        %3106 = vmatprep.subr.mxu0 0.0
        %3107 = vmatpush1.msra.mxu0 0.0
        %3108 = vmatprep.subr.mxu0 0.0
        %3109 = vmatpush1.msra.mxu0 0.0
        %3110 = vmatprep.subr.mxu0 0.0
        %3111 = vmatpush1.msra.mxu0 0.0
        %3112 = vmatprep.subr.mxu0 0.0
        %3113 = vmatpush1.msra.mxu0 0.0
        %3114 = vmatprep.subr.mxu0 0.0
        %3115 = vmatpush1.msra.mxu0 0.0
        %3116 = vmatprep.subr.mxu0 0.0
        %3117 = vmatpush1.msra.mxu0 0.0
        %3118 = vmatprep.subr.mxu0 0.0
        %3119 = vmatpush1.msra.mxu0 0.0
        %3120 = vmatprep.subr.mxu0 0.0
        %3121 = vmatpush1.msra.mxu0 0.0
        %3122 = vmatprep.subr.mxu0 0.0
        %3123 = vmatpush1.msra.mxu0 0.0
        %3124 = vmatprep.subr.mxu0 0.0
        %3125 = vmatpush1.msra.mxu0 0.0
        %3126 = vmatprep.subr.mxu0 0.0
        %3127 = vmatpush1.msra.mxu0 0.0
        %3128 = vmatprep.subr.mxu0 0.0
        %3129 = vmatpush1.msra.mxu0 0.0
        %3130 = vmatprep.subr.mxu0 0.0
        %3131 = vmatpush1.msra.mxu0 0.0
        %3132 = vmatprep.subr.mxu0 0.0
        %3133 = vmatpush1.msra.mxu0 0.0
        %3134 = vmatprep.subr.mxu0 0.0
        %3135 = vmatpush1.msra.mxu0 0.0
        %3136 = vmatprep.subr.mxu0 0.0
        %3137 = vmatpush1.msra.mxu0 0.0
        %3138 = vmatprep.subr.mxu0 0.0
        %3139 = vmatpush1.msra.mxu0 0.0
        %3140 = vmatprep.subr.mxu0 0.0
        %3141 = vmatpush1.msra.mxu0 0.0
        %3142 = vmatprep.subr.mxu0 0.0
        %3143 = vmatpush1.msra.mxu0 0.0
        %3144 = vmatprep.subr.mxu0 0.0
        %3145 = vmatpush1.msra.mxu0 0.0
        %3146 = vmatprep.subr.mxu0 0.0
        %3147 = vmatpush1.msra.mxu0 0.0
        %3148 = vmatprep.subr.mxu0 0.0
        %3149 = vmatpush1.msra.mxu0 0.0
        %3150 = vmatprep.mubr.f32.mxu0 0.0
        %v3151 = vand.u32 %v827, 4294901760
        %3152 = vmatmul.mubr.f32.gmra.mrb[0].mxu0 %v3151
        %v3153 = vpop.f32.mrb[0].mxu0
        %v3154 = vadd.f32 %v3082, %v3153
        %v3155 = vpop.f32.mrb[0].mxu0
        %3156 = vdwg.mxu0
        %v3157 = vadd.f32 %v2233, %v3154
        %v3158 = vmul.f32 %v2710, %v3157
        %v3159 = vrot.slane %v3158, 4
        %v3160 = vadd.f32 %v3158, %v3159
        %v3161 = vrot.slane %v3160, 2
        %v3162 = vadd.f32 %v3160, %v3161
        %v3163 = vrot.slane %v3162, 1
        %v3164 = vadd.f32 %v3162, %v3163
        %p3165 = scmp.gt.s32.totalorder %s2231, 0
        %s3166 = scalar_select %p3165, 1, 0
        %v3167 = vstv %s3166
        %vm3168 = vcmp.eq.s32.totalorder %v3167, 1
        %vm3169 = vmand %vm3168, %vm2237
        %v3170 = vsel %vm3169, %v3164, 0.0
        %v3171 = vadd.f32 %v2230, %v3170
        %s3172 = sadd.s32 %s334, 3
        %s3173 = scalar_lea.vmem %s274, 24 [#allocation5]
        %v3174 = vld [vmem:[%s3173] sm:$0xff]
        %s3175 = scalar_lea.vmem %s283, 3 [#allocation8]
        %v3176 = vld [vmem:[%s3175] sm:$0x1]
        %v3177 = vstv %s3172
        %vm3178 = vcmp.lt.s32.totalorder %v3177, %v324
        %v3179 = vrot.slane %v2703, 4
        %v3180 = vmax.f32 %v2703, %v3179
        %v3181 = vrot.slane %v3180, 2
        %v3182 = vmax.f32 %v3180, %v3181
        %v3183 = vrot.slane %v3182, 1
        %v3184 = vmax.f32 %v3182, %v3183
        %v3185 = vsub.f32 %v2703, %v3184
        %v3186 = vmul.f32 %v3185, 1.442695
        %v3187 = vpow.pop %v3186
        %3188 = vmatprep.subr.mxu0 0.0
        %v3189 = vand.u32 %v3187, 4294901760
        %3190 = vmatpush1.msra.mxu0 %v3189
        %3191 = vmatprep.subr.mxu0 0.0
        %3192 = vmatpush1.msra.mxu0 0.0
        %3193 = vmatprep.subr.mxu0 0.0
        %3194 = vmatpush1.msra.mxu0 0.0
        %3195 = vmatprep.subr.mxu0 0.0
        %3196 = vmatpush1.msra.mxu0 0.0
        %3197 = vmatprep.subr.mxu0 0.0
        %3198 = vmatpush1.msra.mxu0 0.0
        %3199 = vmatprep.subr.mxu0 0.0
        %3200 = vmatpush1.msra.mxu0 0.0
        %3201 = vmatprep.subr.mxu0 0.0
        %3202 = vmatpush1.msra.mxu0 0.0
        %3203 = vmatprep.subr.mxu0 0.0
        %3204 = vmatpush1.msra.mxu0 0.0
        %3205 = vmatprep.subr.mxu0 0.0
        %3206 = vmatpush1.msra.mxu0 0.0
        %3207 = vmatprep.subr.mxu0 0.0
        %3208 = vmatpush1.msra.mxu0 0.0
        %3209 = vmatprep.subr.mxu0 0.0
        %3210 = vmatpush1.msra.mxu0 0.0
        %3211 = vmatprep.subr.mxu0 0.0
        %3212 = vmatpush1.msra.mxu0 0.0
        %3213 = vmatprep.subr.mxu0 0.0
        %3214 = vmatpush1.msra.mxu0 0.0
        %3215 = vmatprep.subr.mxu0 0.0
        %3216 = vmatpush1.msra.mxu0 0.0
        %3217 = vmatprep.subr.mxu0 0.0
        %3218 = vmatpush1.msra.mxu0 0.0
        %3219 = vmatprep.subr.mxu0 0.0
        %3220 = vmatpush1.msra.mxu0 0.0
        %3221 = vmatprep.subr.mxu0 0.0
        %3222 = vmatpush1.msra.mxu0 0.0
        %3223 = vmatprep.subr.mxu0 0.0
        %3224 = vmatpush1.msra.mxu0 0.0
        %3225 = vmatprep.subr.mxu0 0.0
        %3226 = vmatpush1.msra.mxu0 0.0
        %3227 = vmatprep.subr.mxu0 0.0
        %3228 = vmatpush1.msra.mxu0 0.0
        %3229 = vmatprep.subr.mxu0 0.0
        %3230 = vmatpush1.msra.mxu0 0.0
        %3231 = vmatprep.subr.mxu0 0.0
        %3232 = vmatpush1.msra.mxu0 0.0
        %3233 = vmatprep.subr.mxu0 0.0
        %3234 = vmatpush1.msra.mxu0 0.0
        %3235 = vmatprep.subr.mxu0 0.0
        %3236 = vmatpush1.msra.mxu0 0.0
        %3237 = vmatprep.subr.mxu0 0.0
        %3238 = vmatpush1.msra.mxu0 0.0
        %3239 = vmatprep.subr.mxu0 0.0
        %3240 = vmatpush1.msra.mxu0 0.0
        %3241 = vmatprep.subr.mxu0 0.0
        %3242 = vmatpush1.msra.mxu0 0.0
        %3243 = vmatprep.subr.mxu0 0.0
        %3244 = vmatpush1.msra.mxu0 0.0
        %3245 = vmatprep.subr.mxu0 0.0
        %3246 = vmatpush1.msra.mxu0 0.0
        %3247 = vmatprep.subr.mxu0 0.0
        %3248 = vmatpush1.msra.mxu0 0.0
        %3249 = vmatprep.subr.mxu0 0.0
        %3250 = vmatpush1.msra.mxu0 0.0
        %3251 = vmatprep.subr.mxu0 0.0
        %3252 = vmatpush1.msra.mxu0 0.0
        %3253 = vmatprep.mubr.f32.mxu0 0.0
        %v3254 = vand.u32 %v353, 4294901760
        %v3255 = vsub.f32 %v353, %v3254
        %v3256 = vand.u32 %v3255, 4294901760
        %v3257 = vsub.f32 %v3255, %v3256
        %v3258 = vand.u32 %v3257, 4294901760
        %3259 = vmatmul.mubr.f32.gmra.mrb[0].mxu0 %v3258
        %v3260 = vpop.f32.mrb[0].mxu0
        %v3261 = vadd.f32 0.0, %v3260
        %v3262 = vpop.f32.mrb[0].mxu0
        %3263 = vdwg.mxu0
        %3264 = vmatprep.subr.mxu0 0.0
        %v3265 = vand.u32 %v3187, 4294901760
        %v3266 = vsub.f32 %v3187, %v3265
        %v3267 = vand.u32 %v3266, 4294901760
        %v3268 = vsub.f32 %v3266, %v3267
        %v3269 = vand.u32 %v3268, 4294901760
        %3270 = vmatpush1.msra.mxu0 %v3269
        %3271 = vmatprep.subr.mxu0 0.0
        %3272 = vmatpush1.msra.mxu0 0.0
        %3273 = vmatprep.subr.mxu0 0.0
        %3274 = vmatpush1.msra.mxu0 0.0
        %3275 = vmatprep.subr.mxu0 0.0
        %3276 = vmatpush1.msra.mxu0 0.0
        %3277 = vmatprep.subr.mxu0 0.0
        %3278 = vmatpush1.msra.mxu0 0.0
        %3279 = vmatprep.subr.mxu0 0.0
        %3280 = vmatpush1.msra.mxu0 0.0
        %3281 = vmatprep.subr.mxu0 0.0
        %3282 = vmatpush1.msra.mxu0 0.0
        %3283 = vmatprep.subr.mxu0 0.0
        %3284 = vmatpush1.msra.mxu0 0.0
        %3285 = vmatprep.subr.mxu0 0.0
        %3286 = vmatpush1.msra.mxu0 0.0
        %3287 = vmatprep.subr.mxu0 0.0
        %3288 = vmatpush1.msra.mxu0 0.0
        %3289 = vmatprep.subr.mxu0 0.0
        %3290 = vmatpush1.msra.mxu0 0.0
        %3291 = vmatprep.subr.mxu0 0.0
        %3292 = vmatpush1.msra.mxu0 0.0
        %3293 = vmatprep.subr.mxu0 0.0
        %3294 = vmatpush1.msra.mxu0 0.0
        %3295 = vmatprep.subr.mxu0 0.0
        %3296 = vmatpush1.msra.mxu0 0.0
        %3297 = vmatprep.subr.mxu0 0.0
        %3298 = vmatpush1.msra.mxu0 0.0
        %3299 = vmatprep.subr.mxu0 0.0
        %3300 = vmatpush1.msra.mxu0 0.0
        %3301 = vmatprep.subr.mxu0 0.0
        %3302 = vmatpush1.msra.mxu0 0.0
        %3303 = vmatprep.subr.mxu0 0.0
        %3304 = vmatpush1.msra.mxu0 0.0
        %3305 = vmatprep.subr.mxu0 0.0
        %3306 = vmatpush1.msra.mxu0 0.0
        %3307 = vmatprep.subr.mxu0 0.0
        %3308 = vmatpush1.msra.mxu0 0.0
        %3309 = vmatprep.subr.mxu0 0.0
        %3310 = vmatpush1.msra.mxu0 0.0
        %3311 = vmatprep.subr.mxu0 0.0
        %3312 = vmatpush1.msra.mxu0 0.0
        %3313 = vmatprep.subr.mxu0 0.0
        %3314 = vmatpush1.msra.mxu0 0.0
        %3315 = vmatprep.subr.mxu0 0.0
        %3316 = vmatpush1.msra.mxu0 0.0
        %3317 = vmatprep.subr.mxu0 0.0
        %3318 = vmatpush1.msra.mxu0 0.0
        %3319 = vmatprep.subr.mxu0 0.0
        %3320 = vmatpush1.msra.mxu0 0.0
        %3321 = vmatprep.subr.mxu0 0.0
        %3322 = vmatpush1.msra.mxu0 0.0
        %3323 = vmatprep.subr.mxu0 0.0
        %3324 = vmatpush1.msra.mxu0 0.0
        %3325 = vmatprep.subr.mxu0 0.0
        %3326 = vmatpush1.msra.mxu0 0.0
        %3327 = vmatprep.subr.mxu0 0.0
        %3328 = vmatpush1.msra.mxu0 0.0
        %3329 = vmatprep.subr.mxu0 0.0
        %3330 = vmatpush1.msra.mxu0 0.0
        %3331 = vmatprep.subr.mxu0 0.0
        %3332 = vmatpush1.msra.mxu0 0.0
        %3333 = vmatprep.mubr.f32.mxu0 0.0
        %v3334 = vand.u32 %v353, 4294901760
        %3335 = vmatmul.mubr.f32.gmra.mrb[0].mxu0 %v3334
        %v3336 = vpop.f32.mrb[0].mxu0
        %v3337 = vadd.f32 %v3261, %v3336
        %v3338 = vpop.f32.mrb[0].mxu0
        %3339 = vdwg.mxu0
        %3340 = vmatprep.subr.mxu0 0.0
        %v3341 = vand.u32 %v3187, 4294901760
        %v3342 = vsub.f32 %v3187, %v3341
        %3343 = vmatpush1.msra.mxu0 %v3342
        %3344 = vmatprep.subr.mxu0 0.0
        %3345 = vmatpush1.msra.mxu0 0.0
        %3346 = vmatprep.subr.mxu0 0.0
        %3347 = vmatpush1.msra.mxu0 0.0
        %3348 = vmatprep.subr.mxu0 0.0
        %3349 = vmatpush1.msra.mxu0 0.0
        %3350 = vmatprep.subr.mxu0 0.0
        %3351 = vmatpush1.msra.mxu0 0.0
        %3352 = vmatprep.subr.mxu0 0.0
        %3353 = vmatpush1.msra.mxu0 0.0
        %3354 = vmatprep.subr.mxu0 0.0
        %3355 = vmatpush1.msra.mxu0 0.0
        %3356 = vmatprep.subr.mxu0 0.0
        %3357 = vmatpush1.msra.mxu0 0.0
        %3358 = vmatprep.subr.mxu0 0.0
        %3359 = vmatpush1.msra.mxu0 0.0
        %3360 = vmatprep.subr.mxu0 0.0
        %3361 = vmatpush1.msra.mxu0 0.0
        %3362 = vmatprep.subr.mxu0 0.0
        %3363 = vmatpush1.msra.mxu0 0.0
        %3364 = vmatprep.subr.mxu0 0.0
        %3365 = vmatpush1.msra.mxu0 0.0
        %3366 = vmatprep.subr.mxu0 0.0
        %3367 = vmatpush1.msra.mxu0 0.0
        %3368 = vmatprep.subr.mxu0 0.0
        %3369 = vmatpush1.msra.mxu0 0.0
        %3370 = vmatprep.subr.mxu0 0.0
        %3371 = vmatpush1.msra.mxu0 0.0
        %3372 = vmatprep.subr.mxu0 0.0
        %3373 = vmatpush1.msra.mxu0 0.0
        %3374 = vmatprep.subr.mxu0 0.0
        %3375 = vmatpush1.msra.mxu0 0.0
        %3376 = vmatprep.subr.mxu0 0.0
        %3377 = vmatpush1.msra.mxu0 0.0
        %3378 = vmatprep.subr.mxu0 0.0
        %3379 = vmatpush1.msra.mxu0 0.0
        %3380 = vmatprep.subr.mxu0 0.0
        %3381 = vmatpush1.msra.mxu0 0.0
        %3382 = vmatprep.subr.mxu0 0.0
        %3383 = vmatpush1.msra.mxu0 0.0
        %3384 = vmatprep.subr.mxu0 0.0
        %3385 = vmatpush1.msra.mxu0 0.0
        %3386 = vmatprep.subr.mxu0 0.0
        %3387 = vmatpush1.msra.mxu0 0.0
        %3388 = vmatprep.subr.mxu0 0.0
        %3389 = vmatpush1.msra.mxu0 0.0
        %3390 = vmatprep.subr.mxu0 0.0
        %3391 = vmatpush1.msra.mxu0 0.0
        %3392 = vmatprep.subr.mxu0 0.0
        %3393 = vmatpush1.msra.mxu0 0.0
        %3394 = vmatprep.subr.mxu0 0.0
        %3395 = vmatpush1.msra.mxu0 0.0
        %3396 = vmatprep.subr.mxu0 0.0
        %3397 = vmatpush1.msra.mxu0 0.0
        %3398 = vmatprep.subr.mxu0 0.0
        %3399 = vmatpush1.msra.mxu0 0.0
        %3400 = vmatprep.subr.mxu0 0.0
        %3401 = vmatpush1.msra.mxu0 0.0
        %3402 = vmatprep.subr.mxu0 0.0
        %3403 = vmatpush1.msra.mxu0 0.0
        %3404 = vmatprep.subr.mxu0 0.0
        %3405 = vmatpush1.msra.mxu0 0.0
        %3406 = vmatprep.mubr.f32.mxu0 0.0
        %v3407 = vand.u32 %v353, 4294901760
        %v3408 = vsub.f32 %v353, %v3407
        %3409 = vmatmul.mubr.f32.gmra.mrb[0].mxu0 %v3408
        %v3410 = vpop.f32.mrb[0].mxu0
        %v3411 = vadd.f32 %v3337, %v3410
        %v3412 = vpop.f32.mrb[0].mxu0
        %3413 = vdwg.mxu0
        %3414 = vmatprep.subr.mxu0 0.0
        %v3415 = vand.u32 %v3187, 4294901760
        %3416 = vmatpush1.msra.mxu0 %v3415
        %3417 = vmatprep.subr.mxu0 0.0
        %3418 = vmatpush1.msra.mxu0 0.0
        %3419 = vmatprep.subr.mxu0 0.0
        %3420 = vmatpush1.msra.mxu0 0.0
        %3421 = vmatprep.subr.mxu0 0.0
        %3422 = vmatpush1.msra.mxu0 0.0
        %3423 = vmatprep.subr.mxu0 0.0
        %3424 = vmatpush1.msra.mxu0 0.0
        %3425 = vmatprep.subr.mxu0 0.0
        %3426 = vmatpush1.msra.mxu0 0.0
        %3427 = vmatprep.subr.mxu0 0.0
        %3428 = vmatpush1.msra.mxu0 0.0
        %3429 = vmatprep.subr.mxu0 0.0
        %3430 = vmatpush1.msra.mxu0 0.0
        %3431 = vmatprep.subr.mxu0 0.0
        %3432 = vmatpush1.msra.mxu0 0.0
        %3433 = vmatprep.subr.mxu0 0.0
        %3434 = vmatpush1.msra.mxu0 0.0
        %3435 = vmatprep.subr.mxu0 0.0
        %3436 = vmatpush1.msra.mxu0 0.0
        %3437 = vmatprep.subr.mxu0 0.0
        %3438 = vmatpush1.msra.mxu0 0.0
        %3439 = vmatprep.subr.mxu0 0.0
        %3440 = vmatpush1.msra.mxu0 0.0
        %3441 = vmatprep.subr.mxu0 0.0
        %3442 = vmatpush1.msra.mxu0 0.0
        %3443 = vmatprep.subr.mxu0 0.0
        %3444 = vmatpush1.msra.mxu0 0.0
        %3445 = vmatprep.subr.mxu0 0.0
        %3446 = vmatpush1.msra.mxu0 0.0
        %3447 = vmatprep.subr.mxu0 0.0
        %3448 = vmatpush1.msra.mxu0 0.0
        %3449 = vmatprep.subr.mxu0 0.0
        %3450 = vmatpush1.msra.mxu0 0.0
        %3451 = vmatprep.subr.mxu0 0.0
        %3452 = vmatpush1.msra.mxu0 0.0
        %3453 = vmatprep.subr.mxu0 0.0
        %3454 = vmatpush1.msra.mxu0 0.0
        %3455 = vmatprep.subr.mxu0 0.0
        %3456 = vmatpush1.msra.mxu0 0.0
        %3457 = vmatprep.subr.mxu0 0.0
        %3458 = vmatpush1.msra.mxu0 0.0
        %3459 = vmatprep.subr.mxu0 0.0
        %3460 = vmatpush1.msra.mxu0 0.0
        %3461 = vmatprep.subr.mxu0 0.0
        %3462 = vmatpush1.msra.mxu0 0.0
        %3463 = vmatprep.subr.mxu0 0.0
        %3464 = vmatpush1.msra.mxu0 0.0
        %3465 = vmatprep.subr.mxu0 0.0
        %3466 = vmatpush1.msra.mxu0 0.0
        %3467 = vmatprep.subr.mxu0 0.0
        %3468 = vmatpush1.msra.mxu0 0.0
        %3469 = vmatprep.subr.mxu0 0.0
        %3470 = vmatpush1.msra.mxu0 0.0
        %3471 = vmatprep.subr.mxu0 0.0
        %3472 = vmatpush1.msra.mxu0 0.0
        %3473 = vmatprep.subr.mxu0 0.0
        %3474 = vmatpush1.msra.mxu0 0.0
        %3475 = vmatprep.subr.mxu0 0.0
        %3476 = vmatpush1.msra.mxu0 0.0
        %3477 = vmatprep.subr.mxu0 0.0
        %3478 = vmatpush1.msra.mxu0 0.0
        %3479 = vmatprep.mubr.f32.mxu0 0.0
        %v3480 = vand.u32 %v353, 4294901760
        %v3481 = vsub.f32 %v353, %v3480
        %v3482 = vand.u32 %v3481, 4294901760
        %3483 = vmatmul.mubr.f32.gmra.mrb[0].mxu0 %v3482
        %v3484 = vpop.f32.mrb[0].mxu0
        %v3485 = vadd.f32 %v3411, %v3484
        %v3486 = vpop.f32.mrb[0].mxu0
        %3487 = vdwg.mxu0
        %3488 = vmatprep.subr.mxu0 0.0
        %v3489 = vand.u32 %v3187, 4294901760
        %v3490 = vsub.f32 %v3187, %v3489
        %v3491 = vand.u32 %v3490, 4294901760
        %3492 = vmatpush1.msra.mxu0 %v3491
        %3493 = vmatprep.subr.mxu0 0.0
        %3494 = vmatpush1.msra.mxu0 0.0
        %3495 = vmatprep.subr.mxu0 0.0
        %3496 = vmatpush1.msra.mxu0 0.0
        %3497 = vmatprep.subr.mxu0 0.0
        %3498 = vmatpush1.msra.mxu0 0.0
        %3499 = vmatprep.subr.mxu0 0.0
        %3500 = vmatpush1.msra.mxu0 0.0
        %3501 = vmatprep.subr.mxu0 0.0
        %3502 = vmatpush1.msra.mxu0 0.0
        %3503 = vmatprep.subr.mxu0 0.0
        %3504 = vmatpush1.msra.mxu0 0.0
        %3505 = vmatprep.subr.mxu0 0.0
        %3506 = vmatpush1.msra.mxu0 0.0
        %3507 = vmatprep.subr.mxu0 0.0
        %3508 = vmatpush1.msra.mxu0 0.0
        %3509 = vmatprep.subr.mxu0 0.0
        %3510 = vmatpush1.msra.mxu0 0.0
        %3511 = vmatprep.subr.mxu0 0.0
        %3512 = vmatpush1.msra.mxu0 0.0
        %3513 = vmatprep.subr.mxu0 0.0
        %3514 = vmatpush1.msra.mxu0 0.0
        %3515 = vmatprep.subr.mxu0 0.0
        %3516 = vmatpush1.msra.mxu0 0.0
        %3517 = vmatprep.subr.mxu0 0.0
        %3518 = vmatpush1.msra.mxu0 0.0
        %3519 = vmatprep.subr.mxu0 0.0
        %3520 = vmatpush1.msra.mxu0 0.0
        %3521 = vmatprep.subr.mxu0 0.0
        %3522 = vmatpush1.msra.mxu0 0.0
        %3523 = vmatprep.subr.mxu0 0.0
        %3524 = vmatpush1.msra.mxu0 0.0
        %3525 = vmatprep.subr.mxu0 0.0
        %3526 = vmatpush1.msra.mxu0 0.0
        %3527 = vmatprep.subr.mxu0 0.0
        %3528 = vmatpush1.msra.mxu0 0.0
        %3529 = vmatprep.subr.mxu0 0.0
        %3530 = vmatpush1.msra.mxu0 0.0
        %3531 = vmatprep.subr.mxu0 0.0
        %3532 = vmatpush1.msra.mxu0 0.0
        %3533 = vmatprep.subr.mxu0 0.0
        %3534 = vmatpush1.msra.mxu0 0.0
        %3535 = vmatprep.subr.mxu0 0.0
        %3536 = vmatpush1.msra.mxu0 0.0
        %3537 = vmatprep.subr.mxu0 0.0
        %3538 = vmatpush1.msra.mxu0 0.0
        %3539 = vmatprep.subr.mxu0 0.0
        %3540 = vmatpush1.msra.mxu0 0.0
        %3541 = vmatprep.subr.mxu0 0.0
        %3542 = vmatpush1.msra.mxu0 0.0
        %3543 = vmatprep.subr.mxu0 0.0
        %3544 = vmatpush1.msra.mxu0 0.0
        %3545 = vmatprep.subr.mxu0 0.0
        %3546 = vmatpush1.msra.mxu0 0.0
        %3547 = vmatprep.subr.mxu0 0.0
        %3548 = vmatpush1.msra.mxu0 0.0
        %3549 = vmatprep.subr.mxu0 0.0
        %3550 = vmatpush1.msra.mxu0 0.0
        %3551 = vmatprep.subr.mxu0 0.0
        %3552 = vmatpush1.msra.mxu0 0.0
        %3553 = vmatprep.subr.mxu0 0.0
        %3554 = vmatpush1.msra.mxu0 0.0
        %3555 = vmatprep.mubr.f32.mxu0 0.0
        %v3556 = vand.u32 %v353, 4294901760
        %3557 = vmatmul.mubr.f32.gmra.mrb[0].mxu0 %v3556
        %v3558 = vpop.f32.mrb[0].mxu0
        %v3559 = vadd.f32 %v3485, %v3558
        %v3560 = vpop.f32.mrb[0].mxu0
        %3561 = vdwg.mxu0
        %3562 = vmatprep.subr.mxu0 0.0
        %v3563 = vand.u32 %v3187, 4294901760
        %3564 = vmatpush1.msra.mxu0 %v3563
        %3565 = vmatprep.subr.mxu0 0.0
        %3566 = vmatpush1.msra.mxu0 0.0
        %3567 = vmatprep.subr.mxu0 0.0
        %3568 = vmatpush1.msra.mxu0 0.0
        %3569 = vmatprep.subr.mxu0 0.0
        %3570 = vmatpush1.msra.mxu0 0.0
        %3571 = vmatprep.subr.mxu0 0.0
        %3572 = vmatpush1.msra.mxu0 0.0
        %3573 = vmatprep.subr.mxu0 0.0
        %3574 = vmatpush1.msra.mxu0 0.0
        %3575 = vmatprep.subr.mxu0 0.0
        %3576 = vmatpush1.msra.mxu0 0.0
        %3577 = vmatprep.subr.mxu0 0.0
        %3578 = vmatpush1.msra.mxu0 0.0
        %3579 = vmatprep.subr.mxu0 0.0
        %3580 = vmatpush1.msra.mxu0 0.0
        %3581 = vmatprep.subr.mxu0 0.0
        %3582 = vmatpush1.msra.mxu0 0.0
        %3583 = vmatprep.subr.mxu0 0.0
        %3584 = vmatpush1.msra.mxu0 0.0
        %3585 = vmatprep.subr.mxu0 0.0
        %3586 = vmatpush1.msra.mxu0 0.0
        %3587 = vmatprep.subr.mxu0 0.0
        %3588 = vmatpush1.msra.mxu0 0.0
        %3589 = vmatprep.subr.mxu0 0.0
        %3590 = vmatpush1.msra.mxu0 0.0
        %3591 = vmatprep.subr.mxu0 0.0
        %3592 = vmatpush1.msra.mxu0 0.0
        %3593 = vmatprep.subr.mxu0 0.0
        %3594 = vmatpush1.msra.mxu0 0.0
        %3595 = vmatprep.subr.mxu0 0.0
        %3596 = vmatpush1.msra.mxu0 0.0
        %3597 = vmatprep.subr.mxu0 0.0
        %3598 = vmatpush1.msra.mxu0 0.0
        %3599 = vmatprep.subr.mxu0 0.0
        %3600 = vmatpush1.msra.mxu0 0.0
        %3601 = vmatprep.subr.mxu0 0.0
        %3602 = vmatpush1.msra.mxu0 0.0
        %3603 = vmatprep.subr.mxu0 0.0
        %3604 = vmatpush1.msra.mxu0 0.0
        %3605 = vmatprep.subr.mxu0 0.0
        %3606 = vmatpush1.msra.mxu0 0.0
        %3607 = vmatprep.subr.mxu0 0.0
        %3608 = vmatpush1.msra.mxu0 0.0
        %3609 = vmatprep.subr.mxu0 0.0
        %3610 = vmatpush1.msra.mxu0 0.0
        %3611 = vmatprep.subr.mxu0 0.0
        %3612 = vmatpush1.msra.mxu0 0.0
        %3613 = vmatprep.subr.mxu0 0.0
        %3614 = vmatpush1.msra.mxu0 0.0
        %3615 = vmatprep.subr.mxu0 0.0
        %3616 = vmatpush1.msra.mxu0 0.0
        %3617 = vmatprep.subr.mxu0 0.0
        %3618 = vmatpush1.msra.mxu0 0.0
        %3619 = vmatprep.subr.mxu0 0.0
        %3620 = vmatpush1.msra.mxu0 0.0
        %3621 = vmatprep.subr.mxu0 0.0
        %3622 = vmatpush1.msra.mxu0 0.0
        %3623 = vmatprep.subr.mxu0 0.0
        %3624 = vmatpush1.msra.mxu0 0.0
        %3625 = vmatprep.subr.mxu0 0.0
        %3626 = vmatpush1.msra.mxu0 0.0
        %3627 = vmatprep.mubr.f32.mxu0 0.0
        %v3628 = vand.u32 %v353, 4294901760
        %3629 = vmatmul.mubr.f32.gmra.mrb[0].mxu0 %v3628
        %v3630 = vpop.f32.mrb[0].mxu0
        %v3631 = vadd.f32 %v3559, %v3630
        %v3632 = vpop.f32.mrb[0].mxu0
        %3633 = vdwg.mxu0
        %v3634 = vadd.f32 %v3174, %v3184
        %v3635 = vlog2.pop %v3631
        %v3636 = vmul.f32 %v3635, 0.6931472
        %v3637 = vadd.f32 %v3634, %v3636
        %v3638 = vsel %vm3178, 1, 0
        %v3639 = vlaneseq
        %v3640 = vshrl.u32 %v3639, 7
        %v3641 = vsub.s32 0, %v3640
        %v3642 = vrot.slane %v3638, %v3641
        %vm3643 = vcmp.eq.s32.totalorder %v3642, 1
        %v3644 = vsel %vm3643, %v3637, %v2703
        %v3645 = vlaneseq
        %v3646 = vshrl.u32 %v3645, 7
        %v3647 = vsub.s32 0, %v3646
        %v3648 = vrot.slane %v3176, %v3647
        %vm3649 = vcmp.eq.s32.totalorder %v326, %v3648
        %v3650 = vsel %vm3649, 1, 0
        %v3651 = vcvt.s32.f32 %v3650
        %3652 = vmatprep.subr.mxu0 0.0
        %v3653 = vand.u32 %v2710, 4294901760
        %3654 = vmatpush1.msra.mxu0 %v3653
        %3655 = vmatprep.subr.mxu0 0.0
        %3656 = vmatpush1.msra.mxu0 0.0
        %3657 = vmatprep.subr.mxu0 0.0
        %3658 = vmatpush1.msra.mxu0 0.0
        %3659 = vmatprep.subr.mxu0 0.0
        %3660 = vmatpush1.msra.mxu0 0.0
        %3661 = vmatprep.subr.mxu0 0.0
        %3662 = vmatpush1.msra.mxu0 0.0
        %3663 = vmatprep.subr.mxu0 0.0
        %3664 = vmatpush1.msra.mxu0 0.0
        %3665 = vmatprep.subr.mxu0 0.0
        %3666 = vmatpush1.msra.mxu0 0.0
        %3667 = vmatprep.subr.mxu0 0.0
        %3668 = vmatpush1.msra.mxu0 0.0
        %3669 = vmatprep.subr.mxu0 0.0
        %3670 = vmatpush1.msra.mxu0 0.0
        %3671 = vmatprep.subr.mxu0 0.0
        %3672 = vmatpush1.msra.mxu0 0.0
        %3673 = vmatprep.subr.mxu0 0.0
        %3674 = vmatpush1.msra.mxu0 0.0
        %3675 = vmatprep.subr.mxu0 0.0
        %3676 = vmatpush1.msra.mxu0 0.0
        %3677 = vmatprep.subr.mxu0 0.0
        %3678 = vmatpush1.msra.mxu0 0.0
        %3679 = vmatprep.subr.mxu0 0.0
        %3680 = vmatpush1.msra.mxu0 0.0
        %3681 = vmatprep.subr.mxu0 0.0
        %3682 = vmatpush1.msra.mxu0 0.0
        %3683 = vmatprep.subr.mxu0 0.0
        %3684 = vmatpush1.msra.mxu0 0.0
        %3685 = vmatprep.subr.mxu0 0.0
        %3686 = vmatpush1.msra.mxu0 0.0
        %3687 = vmatprep.subr.mxu0 0.0
        %3688 = vmatpush1.msra.mxu0 0.0
        %3689 = vmatprep.subr.mxu0 0.0
        %3690 = vmatpush1.msra.mxu0 0.0
        %3691 = vmatprep.subr.mxu0 0.0
        %3692 = vmatpush1.msra.mxu0 0.0
        %3693 = vmatprep.subr.mxu0 0.0
        %3694 = vmatpush1.msra.mxu0 0.0
        %3695 = vmatprep.subr.mxu0 0.0
        %3696 = vmatpush1.msra.mxu0 0.0
        %3697 = vmatprep.subr.mxu0 0.0
        %3698 = vmatpush1.msra.mxu0 0.0
        %3699 = vmatprep.subr.mxu0 0.0
        %3700 = vmatpush1.msra.mxu0 0.0
        %3701 = vmatprep.subr.mxu0 0.0
        %3702 = vmatpush1.msra.mxu0 0.0
        %3703 = vmatprep.subr.mxu0 0.0
        %3704 = vmatpush1.msra.mxu0 0.0
        %3705 = vmatprep.subr.mxu0 0.0
        %3706 = vmatpush1.msra.mxu0 0.0
        %3707 = vmatprep.subr.mxu0 0.0
        %3708 = vmatpush1.msra.mxu0 0.0
        %3709 = vmatprep.subr.mxu0 0.0
        %3710 = vmatpush1.msra.mxu0 0.0
        %3711 = vmatprep.subr.mxu0 0.0
        %3712 = vmatpush1.msra.mxu0 0.0
        %3713 = vmatprep.subr.mxu0 0.0
        %3714 = vmatpush1.msra.mxu0 0.0
        %3715 = vmatprep.subr.mxu0 0.0
        %3716 = vmatpush1.msra.mxu0 0.0
        %3717 = vmatprep.mubr.f32.mxu0 0.0
        %v3718 = vand.u32 %v827, 4294901760
        %v3719 = vsub.f32 %v827, %v3718
        %v3720 = vand.u32 %v3719, 4294901760
        %v3721 = vsub.f32 %v3719, %v3720
        %v3722 = vand.u32 %v3721, 4294901760
        %3723 = vmatmul.mubr.f32.gmra.mrb[0].mxu0 %v3722
        %v3724 = vpop.f32.mrb[0].mxu0
        %v3725 = vadd.f32 0.0, %v3724
        %v3726 = vpop.f32.mrb[0].mxu0
        %3727 = vdwg.mxu0
        %3728 = vmatprep.subr.mxu0 0.0
        %v3729 = vand.u32 %v2710, 4294901760
        %v3730 = vsub.f32 %v2710, %v3729
        %v3731 = vand.u32 %v3730, 4294901760
        %v3732 = vsub.f32 %v3730, %v3731
        %v3733 = vand.u32 %v3732, 4294901760
        %3734 = vmatpush1.msra.mxu0 %v3733
        %3735 = vmatprep.subr.mxu0 0.0
        %3736 = vmatpush1.msra.mxu0 0.0
        %3737 = vmatprep.subr.mxu0 0.0
        %3738 = vmatpush1.msra.mxu0 0.0
        %3739 = vmatprep.subr.mxu0 0.0
        %3740 = vmatpush1.msra.mxu0 0.0
        %3741 = vmatprep.subr.mxu0 0.0
        %3742 = vmatpush1.msra.mxu0 0.0
        %3743 = vmatprep.subr.mxu0 0.0
        %3744 = vmatpush1.msra.mxu0 0.0
        %3745 = vmatprep.subr.mxu0 0.0
        %3746 = vmatpush1.msra.mxu0 0.0
        %3747 = vmatprep.subr.mxu0 0.0
        %3748 = vmatpush1.msra.mxu0 0.0
        %3749 = vmatprep.subr.mxu0 0.0
        %3750 = vmatpush1.msra.mxu0 0.0
        %3751 = vmatprep.subr.mxu0 0.0
        %3752 = vmatpush1.msra.mxu0 0.0
        %3753 = vmatprep.subr.mxu0 0.0
        %3754 = vmatpush1.msra.mxu0 0.0
        %3755 = vmatprep.subr.mxu0 0.0
        %3756 = vmatpush1.msra.mxu0 0.0
        %3757 = vmatprep.subr.mxu0 0.0
        %3758 = vmatpush1.msra.mxu0 0.0
        %3759 = vmatprep.subr.mxu0 0.0
        %3760 = vmatpush1.msra.mxu0 0.0
        %3761 = vmatprep.subr.mxu0 0.0
        %3762 = vmatpush1.msra.mxu0 0.0
        %3763 = vmatprep.subr.mxu0 0.0
        %3764 = vmatpush1.msra.mxu0 0.0
        %3765 = vmatprep.subr.mxu0 0.0
        %3766 = vmatpush1.msra.mxu0 0.0
        %3767 = vmatprep.subr.mxu0 0.0
        %3768 = vmatpush1.msra.mxu0 0.0
        %3769 = vmatprep.subr.mxu0 0.0
        %3770 = vmatpush1.msra.mxu0 0.0
        %3771 = vmatprep.subr.mxu0 0.0
        %3772 = vmatpush1.msra.mxu0 0.0
        %3773 = vmatprep.subr.mxu0 0.0
        %3774 = vmatpush1.msra.mxu0 0.0
        %3775 = vmatprep.subr.mxu0 0.0
        %3776 = vmatpush1.msra.mxu0 0.0
        %3777 = vmatprep.subr.mxu0 0.0
        %3778 = vmatpush1.msra.mxu0 0.0
        %3779 = vmatprep.subr.mxu0 0.0
        %3780 = vmatpush1.msra.mxu0 0.0
        %3781 = vmatprep.subr.mxu0 0.0
        %3782 = vmatpush1.msra.mxu0 0.0
        %3783 = vmatprep.subr.mxu0 0.0
        %3784 = vmatpush1.msra.mxu0 0.0
        %3785 = vmatprep.subr.mxu0 0.0
        %3786 = vmatpush1.msra.mxu0 0.0
        %3787 = vmatprep.subr.mxu0 0.0
        %3788 = vmatpush1.msra.mxu0 0.0
        %3789 = vmatprep.subr.mxu0 0.0
        %3790 = vmatpush1.msra.mxu0 0.0
        %3791 = vmatprep.subr.mxu0 0.0
        %3792 = vmatpush1.msra.mxu0 0.0
        %3793 = vmatprep.subr.mxu0 0.0
        %3794 = vmatpush1.msra.mxu0 0.0
        %3795 = vmatprep.subr.mxu0 0.0
        %3796 = vmatpush1.msra.mxu0 0.0
        %3797 = vmatprep.mubr.f32.mxu0 0.0
        %v3798 = vand.u32 %v827, 4294901760
        %3799 = vmatmul.mubr.f32.gmra.mrb[0].mxu0 %v3798
        %v3800 = vpop.f32.mrb[0].mxu0
        %v3801 = vadd.f32 %v3725, %v3800
        %v3802 = vpop.f32.mrb[0].mxu0
        %3803 = vdwg.mxu0
        %3804 = vmatprep.subr.mxu0 0.0
        %v3805 = vand.u32 %v2710, 4294901760
        %v3806 = vsub.f32 %v2710, %v3805
        %3807 = vmatpush1.msra.mxu0 %v3806
        %3808 = vmatprep.subr.mxu0 0.0
        %3809 = vmatpush1.msra.mxu0 0.0
        %3810 = vmatprep.subr.mxu0 0.0
        %3811 = vmatpush1.msra.mxu0 0.0
        %3812 = vmatprep.subr.mxu0 0.0
        %3813 = vmatpush1.msra.mxu0 0.0
        %3814 = vmatprep.subr.mxu0 0.0
        %3815 = vmatpush1.msra.mxu0 0.0
        %3816 = vmatprep.subr.mxu0 0.0
        %3817 = vmatpush1.msra.mxu0 0.0
        %3818 = vmatprep.subr.mxu0 0.0
        %3819 = vmatpush1.msra.mxu0 0.0
        %3820 = vmatprep.subr.mxu0 0.0
        %3821 = vmatpush1.msra.mxu0 0.0
        %3822 = vmatprep.subr.mxu0 0.0
        %3823 = vmatpush1.msra.mxu0 0.0
        %3824 = vmatprep.subr.mxu0 0.0
        %3825 = vmatpush1.msra.mxu0 0.0
        %3826 = vmatprep.subr.mxu0 0.0
        %3827 = vmatpush1.msra.mxu0 0.0
        %3828 = vmatprep.subr.mxu0 0.0
        %3829 = vmatpush1.msra.mxu0 0.0
        %3830 = vmatprep.subr.mxu0 0.0
        %3831 = vmatpush1.msra.mxu0 0.0
        %3832 = vmatprep.subr.mxu0 0.0
        %3833 = vmatpush1.msra.mxu0 0.0
        %3834 = vmatprep.subr.mxu0 0.0
        %3835 = vmatpush1.msra.mxu0 0.0
        %3836 = vmatprep.subr.mxu0 0.0
        %3837 = vmatpush1.msra.mxu0 0.0
        %3838 = vmatprep.subr.mxu0 0.0
        %3839 = vmatpush1.msra.mxu0 0.0
        %3840 = vmatprep.subr.mxu0 0.0
        %3841 = vmatpush1.msra.mxu0 0.0
        %3842 = vmatprep.subr.mxu0 0.0
        %3843 = vmatpush1.msra.mxu0 0.0
        %3844 = vmatprep.subr.mxu0 0.0
        %3845 = vmatpush1.msra.mxu0 0.0
        %3846 = vmatprep.subr.mxu0 0.0
        %3847 = vmatpush1.msra.mxu0 0.0
        %3848 = vmatprep.subr.mxu0 0.0
        %3849 = vmatpush1.msra.mxu0 0.0
        %3850 = vmatprep.subr.mxu0 0.0
        %3851 = vmatpush1.msra.mxu0 0.0
        %3852 = vmatprep.subr.mxu0 0.0
        %3853 = vmatpush1.msra.mxu0 0.0
        %3854 = vmatprep.subr.mxu0 0.0
        %3855 = vmatpush1.msra.mxu0 0.0
        %3856 = vmatprep.subr.mxu0 0.0
        %3857 = vmatpush1.msra.mxu0 0.0
        %3858 = vmatprep.subr.mxu0 0.0
        %3859 = vmatpush1.msra.mxu0 0.0
        %3860 = vmatprep.subr.mxu0 0.0
        %3861 = vmatpush1.msra.mxu0 0.0
        %3862 = vmatprep.subr.mxu0 0.0
        %3863 = vmatpush1.msra.mxu0 0.0
        %3864 = vmatprep.subr.mxu0 0.0
        %3865 = vmatpush1.msra.mxu0 0.0
        %3866 = vmatprep.subr.mxu0 0.0
        %3867 = vmatpush1.msra.mxu0 0.0
        %3868 = vmatprep.subr.mxu0 0.0
        %3869 = vmatpush1.msra.mxu0 0.0
        %3870 = vmatprep.mubr.f32.mxu0 0.0
        %v3871 = vand.u32 %v827, 4294901760
        %v3872 = vsub.f32 %v827, %v3871
        %3873 = vmatmul.mubr.f32.gmra.mrb[0].mxu0 %v3872
        %v3874 = vpop.f32.mrb[0].mxu0
        %v3875 = vadd.f32 %v3801, %v3874
        %v3876 = vpop.f32.mrb[0].mxu0
        %3877 = vdwg.mxu0
        %3878 = vmatprep.subr.mxu0 0.0
        %v3879 = vand.u32 %v2710, 4294901760
        %3880 = vmatpush1.msra.mxu0 %v3879
        %3881 = vmatprep.subr.mxu0 0.0
        %3882 = vmatpush1.msra.mxu0 0.0
        %3883 = vmatprep.subr.mxu0 0.0
        %3884 = vmatpush1.msra.mxu0 0.0
        %3885 = vmatprep.subr.mxu0 0.0
        %3886 = vmatpush1.msra.mxu0 0.0
        %3887 = vmatprep.subr.mxu0 0.0
        %3888 = vmatpush1.msra.mxu0 0.0
        %3889 = vmatprep.subr.mxu0 0.0
        %3890 = vmatpush1.msra.mxu0 0.0
        %3891 = vmatprep.subr.mxu0 0.0
        %3892 = vmatpush1.msra.mxu0 0.0
        %3893 = vmatprep.subr.mxu0 0.0
        %3894 = vmatpush1.msra.mxu0 0.0
        %3895 = vmatprep.subr.mxu0 0.0
        %3896 = vmatpush1.msra.mxu0 0.0
        %3897 = vmatprep.subr.mxu0 0.0
        %3898 = vmatpush1.msra.mxu0 0.0
        %3899 = vmatprep.subr.mxu0 0.0
        %3900 = vmatpush1.msra.mxu0 0.0
        %3901 = vmatprep.subr.mxu0 0.0
        %3902 = vmatpush1.msra.mxu0 0.0
        %3903 = vmatprep.subr.mxu0 0.0
        %3904 = vmatpush1.msra.mxu0 0.0
        %3905 = vmatprep.subr.mxu0 0.0
        %3906 = vmatpush1.msra.mxu0 0.0
        %3907 = vmatprep.subr.mxu0 0.0
        %3908 = vmatpush1.msra.mxu0 0.0
        %3909 = vmatprep.subr.mxu0 0.0
        %3910 = vmatpush1.msra.mxu0 0.0
        %3911 = vmatprep.subr.mxu0 0.0
        %3912 = vmatpush1.msra.mxu0 0.0
        %3913 = vmatprep.subr.mxu0 0.0
        %3914 = vmatpush1.msra.mxu0 0.0
        %3915 = vmatprep.subr.mxu0 0.0
        %3916 = vmatpush1.msra.mxu0 0.0
        %3917 = vmatprep.subr.mxu0 0.0
        %3918 = vmatpush1.msra.mxu0 0.0
        %3919 = vmatprep.subr.mxu0 0.0
        %3920 = vmatpush1.msra.mxu0 0.0
        %3921 = vmatprep.subr.mxu0 0.0
        %3922 = vmatpush1.msra.mxu0 0.0
        %3923 = vmatprep.subr.mxu0 0.0
        %3924 = vmatpush1.msra.mxu0 0.0
        %3925 = vmatprep.subr.mxu0 0.0
        %3926 = vmatpush1.msra.mxu0 0.0
        %3927 = vmatprep.subr.mxu0 0.0
        %3928 = vmatpush1.msra.mxu0 0.0
        %3929 = vmatprep.subr.mxu0 0.0
        %3930 = vmatpush1.msra.mxu0 0.0
        %3931 = vmatprep.subr.mxu0 0.0
        %3932 = vmatpush1.msra.mxu0 0.0
        %3933 = vmatprep.subr.mxu0 0.0
        %3934 = vmatpush1.msra.mxu0 0.0
        %3935 = vmatprep.subr.mxu0 0.0
        %3936 = vmatpush1.msra.mxu0 0.0
        %3937 = vmatprep.subr.mxu0 0.0
        %3938 = vmatpush1.msra.mxu0 0.0
        %3939 = vmatprep.subr.mxu0 0.0
        %3940 = vmatpush1.msra.mxu0 0.0
        %3941 = vmatprep.subr.mxu0 0.0
        %3942 = vmatpush1.msra.mxu0 0.0
        %3943 = vmatprep.mubr.f32.mxu0 0.0
        %v3944 = vand.u32 %v827, 4294901760
        %v3945 = vsub.f32 %v827, %v3944
        %v3946 = vand.u32 %v3945, 4294901760
        %3947 = vmatmul.mubr.f32.gmra.mrb[0].mxu0 %v3946
        %v3948 = vpop.f32.mrb[0].mxu0
        %v3949 = vadd.f32 %v3875, %v3948
        %v3950 = vpop.f32.mrb[0].mxu0
        %3951 = vdwg.mxu0
        %3952 = vmatprep.subr.mxu0 0.0
        %v3953 = vand.u32 %v2710, 4294901760
        %v3954 = vsub.f32 %v2710, %v3953
        %v3955 = vand.u32 %v3954, 4294901760
        %3956 = vmatpush1.msra.mxu0 %v3955
        %3957 = vmatprep.subr.mxu0 0.0
        %3958 = vmatpush1.msra.mxu0 0.0
        %3959 = vmatprep.subr.mxu0 0.0
        %3960 = vmatpush1.msra.mxu0 0.0
        %3961 = vmatprep.subr.mxu0 0.0
        %3962 = vmatpush1.msra.mxu0 0.0
        %3963 = vmatprep.subr.mxu0 0.0
        %3964 = vmatpush1.msra.mxu0 0.0
        %3965 = vmatprep.subr.mxu0 0.0
        %3966 = vmatpush1.msra.mxu0 0.0
        %3967 = vmatprep.subr.mxu0 0.0
        %3968 = vmatpush1.msra.mxu0 0.0
        %3969 = vmatprep.subr.mxu0 0.0
        %3970 = vmatpush1.msra.mxu0 0.0
        %3971 = vmatprep.subr.mxu0 0.0
        %3972 = vmatpush1.msra.mxu0 0.0
        %3973 = vmatprep.subr.mxu0 0.0
        %3974 = vmatpush1.msra.mxu0 0.0
        %3975 = vmatprep.subr.mxu0 0.0
        %3976 = vmatpush1.msra.mxu0 0.0
        %3977 = vmatprep.subr.mxu0 0.0
        %3978 = vmatpush1.msra.mxu0 0.0
        %3979 = vmatprep.subr.mxu0 0.0
        %3980 = vmatpush1.msra.mxu0 0.0
        %3981 = vmatprep.subr.mxu0 0.0
        %3982 = vmatpush1.msra.mxu0 0.0
        %3983 = vmatprep.subr.mxu0 0.0
        %3984 = vmatpush1.msra.mxu0 0.0
        %3985 = vmatprep.subr.mxu0 0.0
        %3986 = vmatpush1.msra.mxu0 0.0
        %3987 = vmatprep.subr.mxu0 0.0
        %3988 = vmatpush1.msra.mxu0 0.0
        %3989 = vmatprep.subr.mxu0 0.0
        %3990 = vmatpush1.msra.mxu0 0.0
        %3991 = vmatprep.subr.mxu0 0.0
        %3992 = vmatpush1.msra.mxu0 0.0
        %3993 = vmatprep.subr.mxu0 0.0
        %3994 = vmatpush1.msra.mxu0 0.0
        %3995 = vmatprep.subr.mxu0 0.0
        %3996 = vmatpush1.msra.mxu0 0.0
        %3997 = vmatprep.subr.mxu0 0.0
        %3998 = vmatpush1.msra.mxu0 0.0
        %3999 = vmatprep.subr.mxu0 0.0
        %4000 = vmatpush1.msra.mxu0 0.0
        %4001 = vmatprep.subr.mxu0 0.0
        %4002 = vmatpush1.msra.mxu0 0.0
        %4003 = vmatprep.subr.mxu0 0.0
        %4004 = vmatpush1.msra.mxu0 0.0
        %4005 = vmatprep.subr.mxu0 0.0
        %4006 = vmatpush1.msra.mxu0 0.0
        %4007 = vmatprep.subr.mxu0 0.0
        %4008 = vmatpush1.msra.mxu0 0.0
        %4009 = vmatprep.subr.mxu0 0.0
        %4010 = vmatpush1.msra.mxu0 0.0
        %4011 = vmatprep.subr.mxu0 0.0
        %4012 = vmatpush1.msra.mxu0 0.0
        %4013 = vmatprep.subr.mxu0 0.0
        %4014 = vmatpush1.msra.mxu0 0.0
        %4015 = vmatprep.subr.mxu0 0.0
        %4016 = vmatpush1.msra.mxu0 0.0
        %4017 = vmatprep.subr.mxu0 0.0
        %4018 = vmatpush1.msra.mxu0 0.0
        %4019 = vmatprep.mubr.f32.mxu0 0.0
        %v4020 = vand.u32 %v827, 4294901760
        %4021 = vmatmul.mubr.f32.gmra.mrb[0].mxu0 %v4020
        %v4022 = vpop.f32.mrb[0].mxu0
        %v4023 = vadd.f32 %v3949, %v4022
        %v4024 = vpop.f32.mrb[0].mxu0
        %4025 = vdwg.mxu0
        %4026 = vmatprep.subr.mxu0 0.0
        %v4027 = vand.u32 %v2710, 4294901760
        %4028 = vmatpush1.msra.mxu0 %v4027
        %4029 = vmatprep.subr.mxu0 0.0
        %4030 = vmatpush1.msra.mxu0 0.0
        %4031 = vmatprep.subr.mxu0 0.0
        %4032 = vmatpush1.msra.mxu0 0.0
        %4033 = vmatprep.subr.mxu0 0.0
        %4034 = vmatpush1.msra.mxu0 0.0
        %4035 = vmatprep.subr.mxu0 0.0
        %4036 = vmatpush1.msra.mxu0 0.0
        %4037 = vmatprep.subr.mxu0 0.0
        %4038 = vmatpush1.msra.mxu0 0.0
        %4039 = vmatprep.subr.mxu0 0.0
        %4040 = vmatpush1.msra.mxu0 0.0
        %4041 = vmatprep.subr.mxu0 0.0
        %4042 = vmatpush1.msra.mxu0 0.0
        %4043 = vmatprep.subr.mxu0 0.0
        %4044 = vmatpush1.msra.mxu0 0.0
        %4045 = vmatprep.subr.mxu0 0.0
        %4046 = vmatpush1.msra.mxu0 0.0
        %4047 = vmatprep.subr.mxu0 0.0
        %4048 = vmatpush1.msra.mxu0 0.0
        %4049 = vmatprep.subr.mxu0 0.0
        %4050 = vmatpush1.msra.mxu0 0.0
        %4051 = vmatprep.subr.mxu0 0.0
        %4052 = vmatpush1.msra.mxu0 0.0
        %4053 = vmatprep.subr.mxu0 0.0
        %4054 = vmatpush1.msra.mxu0 0.0
        %4055 = vmatprep.subr.mxu0 0.0
        %4056 = vmatpush1.msra.mxu0 0.0
        %4057 = vmatprep.subr.mxu0 0.0
        %4058 = vmatpush1.msra.mxu0 0.0
        %4059 = vmatprep.subr.mxu0 0.0
        %4060 = vmatpush1.msra.mxu0 0.0
        %4061 = vmatprep.subr.mxu0 0.0
        %4062 = vmatpush1.msra.mxu0 0.0
        %4063 = vmatprep.subr.mxu0 0.0
        %4064 = vmatpush1.msra.mxu0 0.0
        %4065 = vmatprep.subr.mxu0 0.0
        %4066 = vmatpush1.msra.mxu0 0.0
        %4067 = vmatprep.subr.mxu0 0.0
        %4068 = vmatpush1.msra.mxu0 0.0
        %4069 = vmatprep.subr.mxu0 0.0
        %4070 = vmatpush1.msra.mxu0 0.0
        %4071 = vmatprep.subr.mxu0 0.0
        %4072 = vmatpush1.msra.mxu0 0.0
        %4073 = vmatprep.subr.mxu0 0.0
        %4074 = vmatpush1.msra.mxu0 0.0
        %4075 = vmatprep.subr.mxu0 0.0
        %4076 = vmatpush1.msra.mxu0 0.0
        %4077 = vmatprep.subr.mxu0 0.0
        %4078 = vmatpush1.msra.mxu0 0.0
        %4079 = vmatprep.subr.mxu0 0.0
        %4080 = vmatpush1.msra.mxu0 0.0
        %4081 = vmatprep.subr.mxu0 0.0
        %4082 = vmatpush1.msra.mxu0 0.0
        %4083 = vmatprep.subr.mxu0 0.0
        %4084 = vmatpush1.msra.mxu0 0.0
        %4085 = vmatprep.subr.mxu0 0.0
        %4086 = vmatpush1.msra.mxu0 0.0
        %4087 = vmatprep.subr.mxu0 0.0
        %4088 = vmatpush1.msra.mxu0 0.0
        %4089 = vmatprep.subr.mxu0 0.0
        %4090 = vmatpush1.msra.mxu0 0.0
        %4091 = vmatprep.mubr.f32.mxu0 0.0
        %v4092 = vand.u32 %v827, 4294901760
        %4093 = vmatmul.mubr.f32.gmra.mrb[0].mxu0 %v4092
        %v4094 = vpop.f32.mrb[0].mxu0
        %v4095 = vadd.f32 %v4023, %v4094
        %v4096 = vpop.f32.mrb[0].mxu0
        %4097 = vdwg.mxu0
        %v4098 = vadd.f32 %v3174, %v4095
        %v4099 = vmul.f32 %v3651, %v4098
        %v4100 = vrot.slane %v4099, 4
        %v4101 = vadd.f32 %v4099, %v4100
        %v4102 = vrot.slane %v4101, 2
        %v4103 = vadd.f32 %v4101, %v4102
        %v4104 = vrot.slane %v4103, 1
        %v4105 = vadd.f32 %v4103, %v4104
        %p4106 = scmp.gt.s32.totalorder %s3172, 0
        %s4107 = scalar_select %p4106, 1, 0
        %v4108 = vstv %s4107
        %vm4109 = vcmp.eq.s32.totalorder %v4108, 1
        %vm4110 = vmand %vm4109, %vm3178
        %v4111 = vsel %vm4110, %v4105, 0.0
        %v4112 = vadd.f32 %v3171, %v4111
        %4113 = vst [vmem:[#allocation2] sm:$0xff] %v3644
        %4114 = vst [vmem:[#allocation3] sm:$0x1] %v4112
        %4115 = vst [vmem:[#allocation4] sm:$0x1] %v3176
        %p4116 = scmp.eq.s32.totalorder %s28, 2
        // Predicated region
        $region57: #{tpu_custom_call.1} parent=39 // pred_check
          %p4117 = pneg %p4116
        $region58: #{tpu_custom_call.1} parent=39 // pred_check_branch
          %4119 = sbr.rel (%p4117) target = $region60
        $region59: #{tpu_custom_call.1} parent=39 // pred_region
          %v4120 = vrot.slane %v3644, 4
          %v4121 = vmax.f32 %v3644, %v4120
          %v4122 = vrot.slane %v4121, 2
          %v4123 = vmax.f32 %v4121, %v4122
          %v4124 = vrot.slane %v4123, 1
          %v4125 = vmax.f32 %v4123, %v4124
          %v4126 = vsub.f32 %v3644, %v4125
          %v4127 = vmul.f32 %v4126, 1.442695
          %v4128 = vpow.pop %v4127
          %v4129 = vrot.slane %v4128, 4
          %v4130 = vadd.f32 %v4128, %v4129
          %v4131 = vrot.slane %v4130, 2
          %v4132 = vadd.f32 %v4130, %v4131
          %v4133 = vrot.slane %v4132, 1
          %v4134 = vadd.f32 %v4132, %v4133
          %v4135 = vlog2.pop %v4134
          %v4136 = vmul.f32 %v4135, 0.6931472
          %v4137 = vadd.f32 %v4125, %v4136
          %v4138 = vsub.f32 %v4137, %v4112
          %4139 = vst [vmem:[#allocation11] sm:$0x1] %v4138
        $region60: #{tpu_custom_call.1} parent=39 // pred_fallthru
          _
        // Predicated region
        $region61: #{tpu_custom_call.1} parent=39 // pred_check
          %p4140 = pneg %p177
        $region62: #{tpu_custom_call.1} parent=39 // pred_check_branch
          %4142 = sbr.rel (%p4140) target = $region64
        $region63: #{tpu_custom_call.1} parent=39 // pred_region
          %s4144 = ssub.s32 16, 16
          %4145 = vsyncadd [#allocation7], %s4144
          %s4146 = smul.addr %s27, 16
          %s4147 = scalar_lea.hbm %s5, %s4146
          %s4149 = sshll.u32 [#allocation11], 4
          %s4150 = int_to_ptr.vmem [resolvable:$true] %s4149
          %4152 = dma.vmem_to_hbm [thread:$0]  %s4150, 16, %s4147, [#allocation7]
        $region64: #{tpu_custom_call.1} parent=39 // pred_fallthru
          _
        // Predicated region
        $region65: #{tpu_custom_call.1} parent=39 // pred_check
          %p4153 = pneg %p177
        $region66: #{tpu_custom_call.1} parent=39 // pred_check_branch
          %4155 = sbr.rel (%p4153) target = $region68
        $region67: #{tpu_custom_call.1} parent=39 // pred_region
          %4156 = dma.done [#allocation7], 16
        $region68: #{tpu_custom_call.1} parent=39 // pred_fallthru
          _
      $region40: #{tpu_custom_call.1} parent=5 // pred_fallthru
        _
      %p4157 = scmp.le.s32.totalorder 2, %s18
      // Predicated region
      $region69: #{tpu_custom_call.1} parent=5 // pred_check
        %p4158 = pneg %p4157
      $region70: #{tpu_custom_call.1} parent=5 // pred_check_branch
        %4160 = sbr.rel (%p4158) target = $region72
      $region71: #{tpu_custom_call.1} parent=5 // pred_region
        %s4161 = ssub.s32 %s18, 2
      $region72: #{tpu_custom_call.1} parent=5 // pred_fallthru
        _
    $region6: #{tpu_custom_call.1} parent=1 // loop_footer
      %s22 = sadd.s32 1, %s18
    $region7: #{tpu_custom_call.1} parent=1 // loop_footer_branch
      %17 = sbr.rel target = $region3
    $region8: #{tpu_custom_call.1} parent=1 // loop_exit
      _
    %4162 = vsyncpa [#allocation6], 1
    %s4163 = scalar_lea.sflag [#allocation6], 1
    %4164 = vsyncpa %s4163, 1
    %4165 = vsyncpa [#allocation9], 1
    %s4166 = scalar_lea.sflag [#allocation9], 1
    %4167 = vsyncpa %s4166, 1
    %4168 = vsyncpa [#allocation7], 1
    %s4169 = scalar_lea.sflag [#allocation7], 1
    %4170 = vsyncpa %s4169, 1

</llo_original>
